<compile_context>
chip_gen: v6e
topology: v6e:2x2x1
jax: 0.10.0
libtpu: 0.0.40
codegen_flags: <defaults>
</compile_context>

<pallas_src>
import functools
import math

import numpy as np
import jax
import jax.numpy as jnp
from jax import lax
from jax.experimental import pallas as pl
from jax.experimental.pallas import tpu as pltpu


# f32-exact constants for the first logits row: log(one_hot(bos) + 1e-9).
_LOG_EPS = float(np.log(np.float32(1e-9)))                       # ~ -20.723
_LOG_ONE = float(np.log(np.float32(1.0) + np.float32(1e-9)))     # == 0.0


def seq2seq_kernel(tok_ref, w_ref, b_ref, o_ref, *,
                   hid, t_in, t_dec, batch, v_pad, bos_ix, log_one, log_eps):
    h3 = 3 * hid
    k_oh = w_ref.shape[0]                       # one-hot width == weight-slab rows

    n_in = t_in * batch
    n_dec = t_dec * batch

    # ---- packed int32 slab: encoder tokens, decoder tokens, lengths --------
    inp_tok = tok_ref[0:n_in, :]                # [T_in*B, 1]
    out_tok = tok_ref[n_in:n_in + n_dec, :]     # [T_dec*B, 1]
    lengths = tok_ref[n_in + n_dec:, :]         # [B, 1]

    # ---- packed bf16 weight slab: static lane-aligned ref views -------------
    gi_tab_enc = w_ref.at[:, 0:h3]              # emb_inp @ W_enc_ih^T + b_enc_ih
    gi_tab_dec = w_ref.at[:, h3:2 * h3]         # emb_out @ W_dec_ih^T + b_dec_ih
    w_enc_hh = w_ref.at[:, 2 * h3:3 * h3]
    w_dec_hh = w_ref.at[:, 3 * h3:4 * h3]
    w_ds = w_ref.at[:, 4 * h3:4 * h3 + hid]
    w_log = w_ref.at[:, 4 * h3 + hid:4 * h3 + hid + v_pad]

    # ---- packed f32 bias slab -----------------------------------------------
    b_enc_hh = b_ref[:, 0:h3]
    b_dec_hh = b_ref[:, h3:2 * h3]
    b_ds = b_ref[:, 2 * h3:2 * h3 + hid]
    b_log = b_ref[:, 2 * h3 + hid:2 * h3 + hid + v_pad]

    def gru_step(gi, h, w_hh, b_hh):
        # Only the hidden-side projection stays on the serial chain; operands
        # are bf16 for the MXU, accumulation + gate math in f32.
        gh = jnp.dot(h.astype(jnp.bfloat16), w_hh,
                     preferred_element_type=jnp.float32) + b_hh
        r = jax.nn.sigmoid(gi[:, 0:hid] + gh[:, 0:hid])
        z = jax.nn.sigmoid(gi[:, hid:2 * hid] + gh[:, hid:2 * hid])
        n = jnp.tanh(gi[:, 2 * hid:h3] + r * gh[:, 2 * hid:h3])
        return (1.0 - z) * n + z * h

    # ---- fused embedding + input projection (one big MXU matmul) -----------
    col_in = lax.broadcasted_iota(jnp.int32, (n_in, k_oh), 1)
    oh_in = (col_in == inp_tok).astype(jnp.bfloat16)             # [T_in*B, k_oh]
    gi_enc = jnp.dot(oh_in, gi_tab_enc[...],
                     preferred_element_type=jnp.float32)         # [T_in*B, 3H]

    # ---- encoder recurrence (fully unrolled; static trip count) -------------
    w_hh = w_enc_hh[...]
    b_hh = b_enc_hh
    h = jnp.zeros((batch, hid), jnp.float32)
    last = h
    for t in range(t_in):
        h = gru_step(gi_enc[t * batch:(t + 1) * batch, :], h, w_hh, b_hh)
        last = jnp.where(lengths == t, h, last)   # capture h at t == len[b]

    # ---- dec_start Linear ----------------------------------------------------
    dec_h = (jnp.dot(last.astype(jnp.bfloat16), w_ds[...],
                     preferred_element_type=jnp.float32) + b_ds)

    # ---- first logits row: select between two compile-time constants --------
    col = lax.broadcasted_iota(jnp.int32, (batch, v_pad), 1)
    o_ref[0:batch, :] = jnp.where(col == bos_ix, log_one,
                                  log_eps).astype(jnp.float32)

    # ---- fused decoder embedding + input projection --------------------------
    col_dec = lax.broadcasted_iota(jnp.int32, (n_dec, k_oh), 1)
    oh_dec = (col_dec == out_tok).astype(jnp.bfloat16)
    gi_dec = jnp.dot(oh_dec, gi_tab_dec[...],
                     preferred_element_type=jnp.float32)         # [T_dec*B, 3H]

    # ---- decoder recurrence; hidden states stay in registers ----------------
    w_hh = w_dec_hh[...]
    b_hh = b_dec_hh
    h = dec_h
    hs = []
    for i in range(t_dec):
        h = gru_step(gi_dec[i * batch:(i + 1) * batch, :], h, w_hh, b_hh)
        hs.append(h)
    h_all = jnp.concatenate(hs, axis=0).astype(jnp.bfloat16)     # [T_dec*B, H]

    # ---- one dense logits matmul + one contiguous lane-dense store ----------
    logits = (jnp.dot(h_all, w_log[...],
                      preferred_element_type=jnp.float32) + b_log)
    o_ref[batch:, :] = logits


def make_params(key, n_inp_voc, n_out_voc, emb, hid):
    ks = jax.random.split(key, 14)

    def u(k, shape, scale):
        return jax.random.uniform(k, shape, jnp.float32, -scale, scale)

    s = 1.0 / math.sqrt(hid)
    return {
        "emb_inp":  u(ks[0], (n_inp_voc, emb), 1.0),
        "emb_out":  u(ks[1], (n_out_voc, emb), 1.0),
        "enc_w_ih": u(ks[2], (3 * hid, emb), s),
        "enc_w_hh": u(ks[3], (3 * hid, hid), s),
        "enc_b_ih": u(ks[4], (3 * hid,), s),
        "enc_b_hh": u(ks[5], (3 * hid,), s),
        "ds_w":     u(ks[6], (hid, hid), s),
        "ds_b":     u(ks[7], (hid,), s),
        "dec_w_ih": u(ks[8], (3 * hid, emb), s),
        "dec_w_hh": u(ks[9], (3 * hid, hid), s),
        "dec_b_ih": u(ks[10], (3 * hid,), s),
        "dec_b_hh": u(ks[11], (3 * hid,), s),
        "logits_w": u(ks[12], (n_out_voc, hid), s),
        "logits_b": u(ks[13], (n_out_voc,), s),
    }


def basic_model_forward(params, inp, out, *, eos_ix, bos_ix, hid):
    """inp: [B, T_in] int32, out: [B, T_out] int32 -> logits [B, T_out, V_out]."""
    B, T_in = inp.shape
    _, T_out = out.shape
    T_dec = T_out - 1
    V_in = params["emb_inp"].shape[0]
    V_out = params["logits_w"].shape[0]

    B_pad = max(8, ((B + 7) // 8) * 8)                 # sublane-dense batch
    V_pad = max(128, ((V_out + 127) // 128) * 128)     # lane-dense vocab
    k_oh = hid                                          # one-hot width / slab rows
    assert V_in <= k_oh and V_out <= k_oh, "vocab must fit the one-hot width"

    # Fused embedding + input-projection tables: one_hot(tok) @ tab
    #   == emb[tok] @ W_ih^T + b_ih.  Padded to k_oh rows, cast to bf16.
    gi_tab_enc = params["emb_inp"] @ params["enc_w_ih"].T + params["enc_b_ih"]
    gi_tab_dec = params["emb_out"] @ params["dec_w_ih"].T + params["dec_b_ih"]
    gi_tab_enc = jnp.pad(gi_tab_enc, ((0, k_oh - V_in), (0, 0)))
    gi_tab_dec = jnp.pad(gi_tab_dec, ((0, k_oh - V_out), (0, 0)))

    w_log_t = jnp.pad(params["logits_w"].T, ((0, 0), (0, V_pad - V_out)))
    w_slab = jnp.concatenate(
        [gi_tab_enc, gi_tab_dec,
         params["enc_w_hh"].T, params["dec_w_hh"].T,
         params["ds_w"].T, w_log_t], axis=1).astype(jnp.bfloat16)  # [k_oh, 1792]

    b_log_p = jnp.pad(params["logits_b"], (0, V_pad - V_out))
    b_slab = jnp.concatenate(
        [params["enc_b_hh"], params["dec_b_hh"],
         params["ds_b"], b_log_p])[None, :].astype(jnp.float32)    # [1, 1024]

    # Packed int32 slab: time-major flattened tokens + lengths.
    pad_b = B_pad - B
    inp_tm = jnp.pad(inp.T, ((0, 0), (0, pad_b))).reshape(T_in * B_pad, 1)
    out_tm = jnp.pad(out[:, :T_dec].T, ((0, 0), (0, pad_b))).reshape(T_dec * B_pad, 1)
    lengths = jnp.minimum((inp != eos_ix).astype(jnp.int32).sum(axis=1),
                          T_in - 1).astype(jnp.int32)
    lengths_p = jnp.pad(lengths, (0, pad_b)).reshape(B_pad, 1)
    tok_slab = jnp.concatenate([inp_tm, out_tm, lengths_p],
                               axis=0).astype(jnp.int32)           # [112, 1]

    kernel = functools.partial(
        seq2seq_kernel, hid=hid, t_in=T_in, t_dec=T_dec, batch=B_pad,
        v_pad=V_pad, bos_ix=bos_ix, log_one=_LOG_ONE, log_eps=_LOG_EPS)
    vmem = pl.BlockSpec(memory_space=pltpu.MemorySpace.VMEM)
    flat = pl.pallas_call(
        kernel,
        out_shape=jax.ShapeDtypeStruct((T_out * B_pad, V_pad), jnp.float32),
        in_specs=[vmem, vmem, vmem],
        out_specs=vmem,
    )(tok_slab, w_slab, b_slab)

    logits_tm = flat.reshape(T_out, B_pad, V_pad)
    # Slice off batch / vocab padding and go back to batch-first.
    return jnp.transpose(logits_tm[:, :B, :V_out], (1, 0, 2))


# ---------------- pure-JAX reference (mirrors the PyTorch forward) -----------
def _gru_step_ref(x, h, w_ih, w_hh, b_ih, b_hh, hid):
    gi = jnp.dot(x, w_ih.T, precision=lax.Precision.HIGHEST) + b_ih
    gh = jnp.dot(h, w_hh.T, precision=lax.Precision.HIGHEST) + b_hh
    r = jax.nn.sigmoid(gi[:, :hid] + gh[:, :hid])
    z = jax.nn.sigmoid(gi[:, hid:2 * hid] + gh[:, hid:2 * hid])
    n = jnp.tanh(gi[:, 2 * hid:] + r * gh[:, 2 * hid:])
    return (1.0 - z) * n + z * h


def reference_forward(params, inp, out, eos_ix, bos_ix, hid):
    B, T_in = inp.shape
    _, T_out = out.shape
    V = params["logits_w"].shape[0]

    inp_emb = params["emb_inp"][inp]
    h = jnp.zeros((B, hid), jnp.float32)
    enc_seq = []
    for t in range(T_in):
        h = _gru_step_ref(inp_emb[:, t], h, params["enc_w_ih"], params["enc_w_hh"],
                          params["enc_b_ih"], params["enc_b_hh"], hid)
        enc_seq.append(h)
    enc_seq = jnp.stack(enc_seq, axis=1)
    lengths = jnp.minimum((inp != eos_ix).sum(axis=1), T_in - 1)
    last = enc_seq[jnp.arange(B), lengths]
    state = jnp.dot(last, params["ds_w"].T,
                    precision=lax.Precision.HIGHEST) + params["ds_b"]

    onehot = jax.nn.one_hot(jnp.full((B,), bos_ix), V, dtype=jnp.float32)
    logits_seq = [jnp.log(onehot + 1e-9)]
    out_emb = params["emb_out"][out]
    for i in range(T_out - 1):
        state = _gru_step_ref(out_emb[:, i], state, params["dec_w_ih"],
                              params["dec_w_hh"], params["dec_b_ih"],
                              params["dec_b_hh"], hid)
        logits_seq.append(jnp.dot(state, params["logits_w"].T,
                                  precision=lax.Precision.HIGHEST)
                          + params["logits_b"])
    return jnp.stack(logits_seq, axis=1)


if __name__ == "__main__":
    INP_VOC, OUT_VOC = 17, 19
    EOS_IX, BOS_IX = 2, 1
    EMB, HID = 64, 128
    B, T_IN, T_OUT = 2, 8, 6

    key = jax.random.PRNGKey(0)
    pkey, ikey, okey = jax.random.split(key, 3)
    params = make_params(pkey, INP_VOC, OUT_VOC, EMB, HID)
    inp = jax.random.randint(ikey, (B, T_IN), 0, INP_VOC, dtype=jnp.int32)
    out = jax.random.randint(okey, (B, T_OUT), 0, OUT_VOC, dtype=jnp.int32)

    logits = basic_model_forward(params, inp, out,
                                 eos_ix=EOS_IX, bos_ix=BOS_IX, hid=HID)
    logits = jax.block_until_ready(logits)

    ref = reference_forward(params, inp, out, EOS_IX, BOS_IX, HID)
    assert logits.shape == (B, T_OUT, OUT_VOC), logits.shape
    # First row is analytic -> should match almost exactly.
    assert jnp.allclose(logits[:, 0], ref[:, 0], atol=1e-5), \
        float(jnp.abs(logits[:, 0] - ref[:, 0]).max())
    # Kernel uses single-pass bf16 MXU matmuls (per the perf review), so the
    # comparison against the full-f32 reference uses a correspondingly looser
    # tolerance (structural bugs would be orders of magnitude larger).
    assert jnp.allclose(logits, ref, atol=5e-2, rtol=5e-2), \
        float(jnp.abs(logits - ref).max())
    print("KERNEL_OK")
</pallas_src>

<mosaic_0001>
module attributes {stable_mosaic.version = 11 : i64} {
  func.func @seq2seq_kernel(%arg0: memref<112x1xi32, #tpu.memory_space<vmem>>, %arg1: memref<128x1792xbf16, #tpu.memory_space<vmem>>, %arg2: memref<1x1024xf32, #tpu.memory_space<vmem>>, %arg3: memref<48x128xf32, #tpu.memory_space<vmem>>) attributes {dimension_semantics = [], scalar_prefetch = 0 : i64, scratch_operands = 0 : i64, tpu.core_type = #tpu.core_type<tc>} {
    %c0 = arith.constant 0 : index
    %c0_0 = arith.constant 0 : index
    %0 = vector.load %arg0[%c0, %c0_0] : memref<112x1xi32, #tpu.memory_space<vmem>>, vector<64x1xi32>
    %c64 = arith.constant 64 : index
    %c0_1 = arith.constant 0 : index
    %1 = vector.load %arg0[%c64, %c0_1] : memref<112x1xi32, #tpu.memory_space<vmem>>, vector<40x1xi32>
    %c104 = arith.constant 104 : index
    %c0_2 = arith.constant 0 : index
    %2 = vector.load %arg0[%c104, %c0_2] : memref<112x1xi32, #tpu.memory_space<vmem>>, vector<8x1xi32>
    %c0_3 = arith.constant 0 : index
    %c0_4 = arith.constant 0 : index
    %3 = vector.load %arg2[%c0_3, %c0_4] : memref<1x1024xf32, #tpu.memory_space<vmem>>, vector<1x384xf32>
    %c0_5 = arith.constant 0 : index
    %c384 = arith.constant 384 : index
    %4 = vector.load %arg2[%c0_5, %c384] : memref<1x1024xf32, #tpu.memory_space<vmem>>, vector<1x384xf32>
    %c0_6 = arith.constant 0 : index
    %c768 = arith.constant 768 : index
    %5 = vector.load %arg2[%c0_6, %c768] : memref<1x1024xf32, #tpu.memory_space<vmem>>, vector<1x128xf32>
    %c0_7 = arith.constant 0 : index
    %c896 = arith.constant 896 : index
    %6 = vector.load %arg2[%c0_7, %c896] : memref<1x1024xf32, #tpu.memory_space<vmem>>, vector<1x128xf32>
    %7 = tpu.iota {dimensions = array<i32: 1>} : vector<64x128xi32>
    %8 = vector.broadcast %0 : vector<64x1xi32> to vector<64x128xi32>
    %9 = arith.cmpi eq, %7, %8 : vector<64x128xi32>
    %10 = arith.extui %9 : vector<64x128xi1> to vector<64x128xi32>
    %11 = arith.sitofp %10 : vector<64x128xi32> to vector<64x128xf32>
    %12 = arith.truncf %11 : vector<64x128xf32> to vector<64x128xbf16>
    %c0_8 = arith.constant 0 : index
    %c0_9 = arith.constant 0 : index
    %13 = vector.load %arg1[%c0_8, %c0_9] : memref<128x1792xbf16, #tpu.memory_space<vmem>>, vector<128x384xbf16>
    %cst = arith.constant dense<0.000000e+00> : vector<64x384xf32>
    %14 = tpu.matmul %12, %13, %cst {dimension_numbers = #tpu.dot_dimension_numbers<[1], [0], [0], [1], [0, 0, 1, 1], [], []>} : vector<64x128xbf16>, vector<128x384xbf16>, vector<64x384xf32> -> vector<64x384xf32>
    %c0_10 = arith.constant 0 : index
    %c768_11 = arith.constant 768 : index
    %15 = vector.load %arg1[%c0_10, %c768_11] : memref<128x1792xbf16, #tpu.memory_space<vmem>>, vector<128x384xbf16>
    %cst_12 = arith.constant 0.000000e+00 : f32
    %16 = vector.broadcast %cst_12 : f32 to vector<8x128xf32>
    %17 = vector.extract_strided_slice %14 {offsets = [0, 0], sizes = [8, 384], strides = [1, 1]} : vector<64x384xf32> to vector<8x384xf32>
    %18 = arith.truncf %16 : vector<8x128xf32> to vector<8x128xbf16>
    %cst_13 = arith.constant dense<0.000000e+00> : vector<8x384xf32>
    %19 = tpu.matmul %18, %15, %cst_13 {dimension_numbers = #tpu.dot_dimension_numbers<[1], [0], [0], [1], [0, 0, 1, 1], [], []>} : vector<8x128xbf16>, vector<128x384xbf16>, vector<8x384xf32> -> vector<8x384xf32>
    %20 = vector.broadcast %3 : vector<1x384xf32> to vector<8x384xf32>
    %21 = arith.addf %19, %20 : vector<8x384xf32>
    %22 = vector.extract_strided_slice %17 {offsets = [0, 0], sizes = [8, 128], strides = [1, 1]} : vector<8x384xf32> to vector<8x128xf32>
    %23 = vector.extract_strided_slice %21 {offsets = [0, 0], sizes = [8, 128], strides = [1, 1]} : vector<8x384xf32> to vector<8x128xf32>
    %24 = arith.addf %22, %23 : vector<8x128xf32>
    %25 = arith.negf %24 : vector<8x128xf32>
    %26 = math.exp %25 : vector<8x128xf32>
    %cst_14 = arith.constant 1.000000e+00 : f32
    %27 = vector.broadcast %cst_14 : f32 to vector<8x128xf32>
    %28 = arith.addf %27, %26 : vector<8x128xf32>
    %29 = arith.divf %27, %28 : vector<8x128xf32>
    %30 = vector.extract_strided_slice %17 {offsets = [0, 128], sizes = [8, 128], strides = [1, 1]} : vector<8x384xf32> to vector<8x128xf32>
    %31 = vector.extract_strided_slice %21 {offsets = [0, 128], sizes = [8, 128], strides = [1, 1]} : vector<8x384xf32> to vector<8x128xf32>
    %32 = arith.addf %30, %31 : vector<8x128xf32>
    %33 = arith.negf %32 : vector<8x128xf32>
    %34 = math.exp %33 : vector<8x128xf32>
    %cst_15 = arith.constant 1.000000e+00 : f32
    %35 = vector.broadcast %cst_15 : f32 to vector<8x128xf32>
    %36 = arith.addf %35, %34 : vector<8x128xf32>
    %37 = arith.divf %35, %36 : vector<8x128xf32>
    %38 = vector.extract_strided_slice %17 {offsets = [0, 256], sizes = [8, 128], strides = [1, 1]} : vector<8x384xf32> to vector<8x128xf32>
    %39 = vector.extract_strided_slice %21 {offsets = [0, 256], sizes = [8, 128], strides = [1, 1]} : vector<8x384xf32> to vector<8x128xf32>
    %40 = arith.mulf %29, %39 : vector<8x128xf32>
    %41 = arith.addf %38, %40 : vector<8x128xf32>
    %42 = math.tanh %41 : vector<8x128xf32>
    %cst_16 = arith.constant 1.000000e+00 : f32
    %43 = vector.broadcast %cst_16 : f32 to vector<8x128xf32>
    %44 = arith.subf %43, %37 : vector<8x128xf32>
    %45 = arith.mulf %44, %42 : vector<8x128xf32>
    %46 = arith.mulf %37, %16 : vector<8x128xf32>
    %47 = arith.addf %45, %46 : vector<8x128xf32>
    %c0_i32 = arith.constant 0 : i32
    %48 = vector.broadcast %c0_i32 : i32 to vector<8x1xi32>
    %49 = arith.cmpi eq, %2, %48 : vector<8x1xi32>
    %50 = vector.shape_cast %49 : vector<8x1xi1> to vector<8x1xi1>
    %51 = vector.broadcast %50 : vector<8x1xi1> to vector<8x128xi1>
    %52 = arith.select %51, %47, %16 : vector<8x128xi1>, vector<8x128xf32>
    %53 = vector.extract_strided_slice %14 {offsets = [8, 0], sizes = [8, 384], strides = [1, 1]} : vector<64x384xf32> to vector<8x384xf32>
    %54 = arith.truncf %47 : vector<8x128xf32> to vector<8x128xbf16>
    %cst_17 = arith.constant dense<0.000000e+00> : vector<8x384xf32>
    %55 = tpu.matmul %54, %15, %cst_17 {dimension_numbers = #tpu.dot_dimension_numbers<[1], [0], [0], [1], [0, 0, 1, 1], [], []>} : vector<8x128xbf16>, vector<128x384xbf16>, vector<8x384xf32> -> vector<8x384xf32>
    %56 = vector.broadcast %3 : vector<1x384xf32> to vector<8x384xf32>
    %57 = arith.addf %55, %56 : vector<8x384xf32>
    %58 = vector.extract_strided_slice %53 {offsets = [0, 0], sizes = [8, 128], strides = [1, 1]} : vector<8x384xf32> to vector<8x128xf32>
    %59 = vector.extract_strided_slice %57 {offsets = [0, 0], sizes = [8, 128], strides = [1, 1]} : vector<8x384xf32> to vector<8x128xf32>
    %60 = arith.addf %58, %59 : vector<8x128xf32>
    %61 = arith.negf %60 : vector<8x128xf32>
    %62 = math.exp %61 : vector<8x128xf32>
    %cst_18 = arith.constant 1.000000e+00 : f32
    %63 = vector.broadcast %cst_18 : f32 to vector<8x128xf32>
    %64 = arith.addf %63, %62 : vector<8x128xf32>
    %65 = arith.divf %63, %64 : vector<8x128xf32>
    %66 = vector.extract_strided_slice %53 {offsets = [0, 128], sizes = [8, 128], strides = [1, 1]} : vector<8x384xf32> to vector<8x128xf32>
    %67 = vector.extract_strided_slice %57 {offsets = [0, 128], sizes = [8, 128], strides = [1, 1]} : vector<8x384xf32> to vector<8x128xf32>
    %68 = arith.addf %66, %67 : vector<8x128xf32>
    %69 = arith.negf %68 : vector<8x128xf32>
    %70 = math.exp %69 : vector<8x128xf32>
    %cst_19 = arith.constant 1.000000e+00 : f32
    %71 = vector.broadcast %cst_19 : f32 to vector<8x128xf32>
    %72 = arith.addf %71, %70 : vector<8x128xf32>
    %73 = arith.divf %71, %72 : vector<8x128xf32>
    %74 = vector.extract_strided_slice %53 {offsets = [0, 256], sizes = [8, 128], strides = [1, 1]} : vector<8x384xf32> to vector<8x128xf32>
    %75 = vector.extract_strided_slice %57 {offsets = [0, 256], sizes = [8, 128], strides = [1, 1]} : vector<8x384xf32> to vector<8x128xf32>
    %76 = arith.mulf %65, %75 : vector<8x128xf32>
    %77 = arith.addf %74, %76 : vector<8x128xf32>
    %78 = math.tanh %77 : vector<8x128xf32>
    %cst_20 = arith.constant 1.000000e+00 : f32
    %79 = vector.broadcast %cst_20 : f32 to vector<8x128xf32>
    %80 = arith.subf %79, %73 : vector<8x128xf32>
    %81 = arith.mulf %80, %78 : vector<8x128xf32>
    %82 = arith.mulf %73, %47 : vector<8x128xf32>
    %83 = arith.addf %81, %82 : vector<8x128xf32>
    %c1_i32 = arith.constant 1 : i32
    %84 = vector.broadcast %c1_i32 : i32 to vector<8x1xi32>
    %85 = arith.cmpi eq, %2, %84 : vector<8x1xi32>
    %86 = vector.shape_cast %85 : vector<8x1xi1> to vector<8x1xi1>
    %87 = vector.broadcast %86 : vector<8x1xi1> to vector<8x128xi1>
    %88 = arith.select %87, %83, %52 : vector<8x128xi1>, vector<8x128xf32>
    %89 = vector.extract_strided_slice %14 {offsets = [16, 0], sizes = [8, 384], strides = [1, 1]} : vector<64x384xf32> to vector<8x384xf32>
    %90 = arith.truncf %83 : vector<8x128xf32> to vector<8x128xbf16>
    %cst_21 = arith.constant dense<0.000000e+00> : vector<8x384xf32>
    %91 = tpu.matmul %90, %15, %cst_21 {dimension_numbers = #tpu.dot_dimension_numbers<[1], [0], [0], [1], [0, 0, 1, 1], [], []>} : vector<8x128xbf16>, vector<128x384xbf16>, vector<8x384xf32> -> vector<8x384xf32>
    %92 = vector.broadcast %3 : vector<1x384xf32> to vector<8x384xf32>
    %93 = arith.addf %91, %92 : vector<8x384xf32>
    %94 = vector.extract_strided_slice %89 {offsets = [0, 0], sizes = [8, 128], strides = [1, 1]} : vector<8x384xf32> to vector<8x128xf32>
    %95 = vector.extract_strided_slice %93 {offsets = [0, 0], sizes = [8, 128], strides = [1, 1]} : vector<8x384xf32> to vector<8x128xf32>
    %96 = arith.addf %94, %95 : vector<8x128xf32>
    %97 = arith.negf %96 : vector<8x128xf32>
    %98 = math.exp %97 : vector<8x128xf32>
    %cst_22 = arith.constant 1.000000e+00 : f32
    %99 = vector.broadcast %cst_22 : f32 to vector<8x128xf32>
    %100 = arith.addf %99, %98 : vector<8x128xf32>
    %101 = arith.divf %99, %100 : vector<8x128xf32>
    %102 = vector.extract_strided_slice %89 {offsets = [0, 128], sizes = [8, 128], strides = [1, 1]} : vector<8x384xf32> to vector<8x128xf32>
    %103 = vector.extract_strided_slice %93 {offsets = [0, 128], sizes = [8, 128], strides = [1, 1]} : vector<8x384xf32> to vector<8x128xf32>
    %104 = arith.addf %102, %103 : vector<8x128xf32>
    %105 = arith.negf %104 : vector<8x128xf32>
    %106 = math.exp %105 : vector<8x128xf32>
    %cst_23 = arith.constant 1.000000e+00 : f32
    %107 = vector.broadcast %cst_23 : f32 to vector<8x128xf32>
    %108 = arith.addf %107, %106 : vector<8x128xf32>
    %109 = arith.divf %107, %108 : vector<8x128xf32>
    %110 = vector.extract_strided_slice %89 {offsets = [0, 256], sizes = [8, 128], strides = [1, 1]} : vector<8x384xf32> to vector<8x128xf32>
    %111 = vector.extract_strided_slice %93 {offsets = [0, 256], sizes = [8, 128], strides = [1, 1]} : vector<8x384xf32> to vector<8x128xf32>
    %112 = arith.mulf %101, %111 : vector<8x128xf32>
    %113 = arith.addf %110, %112 : vector<8x128xf32>
    %114 = math.tanh %113 : vector<8x128xf32>
    %cst_24 = arith.constant 1.000000e+00 : f32
    %115 = vector.broadcast %cst_24 : f32 to vector<8x128xf32>
    %116 = arith.subf %115, %109 : vector<8x128xf32>
    %117 = arith.mulf %116, %114 : vector<8x128xf32>
    %118 = arith.mulf %109, %83 : vector<8x128xf32>
    %119 = arith.addf %117, %118 : vector<8x128xf32>
    %c2_i32 = arith.constant 2 : i32
    %120 = vector.broadcast %c2_i32 : i32 to vector<8x1xi32>
    %121 = arith.cmpi eq, %2, %120 : vector<8x1xi32>
    %122 = vector.shape_cast %121 : vector<8x1xi1> to vector<8x1xi1>
    %123 = vector.broadcast %122 : vector<8x1xi1> to vector<8x128xi1>
    %124 = arith.select %123, %119, %88 : vector<8x128xi1>, vector<8x128xf32>
    %125 = vector.extract_strided_slice %14 {offsets = [24, 0], sizes = [8, 384], strides = [1, 1]} : vector<64x384xf32> to vector<8x384xf32>
    %126 = arith.truncf %119 : vector<8x128xf32> to vector<8x128xbf16>
    %cst_25 = arith.constant dense<0.000000e+00> : vector<8x384xf32>
    %127 = tpu.matmul %126, %15, %cst_25 {dimension_numbers = #tpu.dot_dimension_numbers<[1], [0], [0], [1], [0, 0, 1, 1], [], []>} : vector<8x128xbf16>, vector<128x384xbf16>, vector<8x384xf32> -> vector<8x384xf32>
    %128 = vector.broadcast %3 : vector<1x384xf32> to vector<8x384xf32>
    %129 = arith.addf %127, %128 : vector<8x384xf32>
    %130 = vector.extract_strided_slice %125 {offsets = [0, 0], sizes = [8, 128], strides = [1, 1]} : vector<8x384xf32> to vector<8x128xf32>
    %131 = vector.extract_strided_slice %129 {offsets = [0, 0], sizes = [8, 128], strides = [1, 1]} : vector<8x384xf32> to vector<8x128xf32>
    %132 = arith.addf %130, %131 : vector<8x128xf32>
    %133 = arith.negf %132 : vector<8x128xf32>
    %134 = math.exp %133 : vector<8x128xf32>
    %cst_26 = arith.constant 1.000000e+00 : f32
    %135 = vector.broadcast %cst_26 : f32 to vector<8x128xf32>
    %136 = arith.addf %135, %134 : vector<8x128xf32>
    %137 = arith.divf %135, %136 : vector<8x128xf32>
    %138 = vector.extract_strided_slice %125 {offsets = [0, 128], sizes = [8, 128], strides = [1, 1]} : vector<8x384xf32> to vector<8x128xf32>
    %139 = vector.extract_strided_slice %129 {offsets = [0, 128], sizes = [8, 128], strides = [1, 1]} : vector<8x384xf32> to vector<8x128xf32>
    %140 = arith.addf %138, %139 : vector<8x128xf32>
    %141 = arith.negf %140 : vector<8x128xf32>
    %142 = math.exp %141 : vector<8x128xf32>
    %cst_27 = arith.constant 1.000000e+00 : f32
    %143 = vector.broadcast %cst_27 : f32 to vector<8x128xf32>
    %144 = arith.addf %143, %142 : vector<8x128xf32>
    %145 = arith.divf %143, %144 : vector<8x128xf32>
    %146 = vector.extract_strided_slice %125 {offsets = [0, 256], sizes = [8, 128], strides = [1, 1]} : vector<8x384xf32> to vector<8x128xf32>
    %147 = vector.extract_strided_slice %129 {offsets = [0, 256], sizes = [8, 128], strides = [1, 1]} : vector<8x384xf32> to vector<8x128xf32>
    %148 = arith.mulf %137, %147 : vector<8x128xf32>
    %149 = arith.addf %146, %148 : vector<8x128xf32>
    %150 = math.tanh %149 : vector<8x128xf32>
    %cst_28 = arith.constant 1.000000e+00 : f32
    %151 = vector.broadcast %cst_28 : f32 to vector<8x128xf32>
    %152 = arith.subf %151, %145 : vector<8x128xf32>
    %153 = arith.mulf %152, %150 : vector<8x128xf32>
    %154 = arith.mulf %145, %119 : vector<8x128xf32>
    %155 = arith.addf %153, %154 : vector<8x128xf32>
    %c3_i32 = arith.constant 3 : i32
    %156 = vector.broadcast %c3_i32 : i32 to vector<8x1xi32>
    %157 = arith.cmpi eq, %2, %156 : vector<8x1xi32>
    %158 = vector.shape_cast %157 : vector<8x1xi1> to vector<8x1xi1>
    %159 = vector.broadcast %158 : vector<8x1xi1> to vector<8x128xi1>
    %160 = arith.select %159, %155, %124 : vector<8x128xi1>, vector<8x128xf32>
    %161 = vector.extract_strided_slice %14 {offsets = [32, 0], sizes = [8, 384], strides = [1, 1]} : vector<64x384xf32> to vector<8x384xf32>
    %162 = arith.truncf %155 : vector<8x128xf32> to vector<8x128xbf16>
    %cst_29 = arith.constant dense<0.000000e+00> : vector<8x384xf32>
    %163 = tpu.matmul %162, %15, %cst_29 {dimension_numbers = #tpu.dot_dimension_numbers<[1], [0], [0], [1], [0, 0, 1, 1], [], []>} : vector<8x128xbf16>, vector<128x384xbf16>, vector<8x384xf32> -> vector<8x384xf32>
    %164 = vector.broadcast %3 : vector<1x384xf32> to vector<8x384xf32>
    %165 = arith.addf %163, %164 : vector<8x384xf32>
    %166 = vector.extract_strided_slice %161 {offsets = [0, 0], sizes = [8, 128], strides = [1, 1]} : vector<8x384xf32> to vector<8x128xf32>
    %167 = vector.extract_strided_slice %165 {offsets = [0, 0], sizes = [8, 128], strides = [1, 1]} : vector<8x384xf32> to vector<8x128xf32>
    %168 = arith.addf %166, %167 : vector<8x128xf32>
    %169 = arith.negf %168 : vector<8x128xf32>
    %170 = math.exp %169 : vector<8x128xf32>
    %cst_30 = arith.constant 1.000000e+00 : f32
    %171 = vector.broadcast %cst_30 : f32 to vector<8x128xf32>
    %172 = arith.addf %171, %170 : vector<8x128xf32>
    %173 = arith.divf %171, %172 : vector<8x128xf32>
    %174 = vector.extract_strided_slice %161 {offsets = [0, 128], sizes = [8, 128], strides = [1, 1]} : vector<8x384xf32> to vector<8x128xf32>
    %175 = vector.extract_strided_slice %165 {offsets = [0, 128], sizes = [8, 128], strides = [1, 1]} : vector<8x384xf32> to vector<8x128xf32>
    %176 = arith.addf %174, %175 : vector<8x128xf32>
    %177 = arith.negf %176 : vector<8x128xf32>
    %178 = math.exp %177 : vector<8x128xf32>
    %cst_31 = arith.constant 1.000000e+00 : f32
    %179 = vector.broadcast %cst_31 : f32 to vector<8x128xf32>
    %180 = arith.addf %179, %178 : vector<8x128xf32>
    %181 = arith.divf %179, %180 : vector<8x128xf32>
    %182 = vector.extract_strided_slice %161 {offsets = [0, 256], sizes = [8, 128], strides = [1, 1]} : vector<8x384xf32> to vector<8x128xf32>
    %183 = vector.extract_strided_slice %165 {offsets = [0, 256], sizes = [8, 128], strides = [1, 1]} : vector<8x384xf32> to vector<8x128xf32>
    %184 = arith.mulf %173, %183 : vector<8x128xf32>
    %185 = arith.addf %182, %184 : vector<8x128xf32>
    %186 = math.tanh %185 : vector<8x128xf32>
    %cst_32 = arith.constant 1.000000e+00 : f32
    %187 = vector.broadcast %cst_32 : f32 to vector<8x128xf32>
    %188 = arith.subf %187, %181 : vector<8x128xf32>
    %189 = arith.mulf %188, %186 : vector<8x128xf32>
    %190 = arith.mulf %181, %155 : vector<8x128xf32>
    %191 = arith.addf %189, %190 : vector<8x128xf32>
    %c4_i32 = arith.constant 4 : i32
    %192 = vector.broadcast %c4_i32 : i32 to vector<8x1xi32>
    %193 = arith.cmpi eq, %2, %192 : vector<8x1xi32>
    %194 = vector.shape_cast %193 : vector<8x1xi1> to vector<8x1xi1>
    %195 = vector.broadcast %194 : vector<8x1xi1> to vector<8x128xi1>
    %196 = arith.select %195, %191, %160 : vector<8x128xi1>, vector<8x128xf32>
    %197 = vector.extract_strided_slice %14 {offsets = [40, 0], sizes = [8, 384], strides = [1, 1]} : vector<64x384xf32> to vector<8x384xf32>
    %198 = arith.truncf %191 : vector<8x128xf32> to vector<8x128xbf16>
    %cst_33 = arith.constant dense<0.000000e+00> : vector<8x384xf32>
    %199 = tpu.matmul %198, %15, %cst_33 {dimension_numbers = #tpu.dot_dimension_numbers<[1], [0], [0], [1], [0, 0, 1, 1], [], []>} : vector<8x128xbf16>, vector<128x384xbf16>, vector<8x384xf32> -> vector<8x384xf32>
    %200 = vector.broadcast %3 : vector<1x384xf32> to vector<8x384xf32>
    %201 = arith.addf %199, %200 : vector<8x384xf32>
    %202 = vector.extract_strided_slice %197 {offsets = [0, 0], sizes = [8, 128], strides = [1, 1]} : vector<8x384xf32> to vector<8x128xf32>
    %203 = vector.extract_strided_slice %201 {offsets = [0, 0], sizes = [8, 128], strides = [1, 1]} : vector<8x384xf32> to vector<8x128xf32>
    %204 = arith.addf %202, %203 : vector<8x128xf32>
    %205 = arith.negf %204 : vector<8x128xf32>
    %206 = math.exp %205 : vector<8x128xf32>
    %cst_34 = arith.constant 1.000000e+00 : f32
    %207 = vector.broadcast %cst_34 : f32 to vector<8x128xf32>
    %208 = arith.addf %207, %206 : vector<8x128xf32>
    %209 = arith.divf %207, %208 : vector<8x128xf32>
    %210 = vector.extract_strided_slice %197 {offsets = [0, 128], sizes = [8, 128], strides = [1, 1]} : vector<8x384xf32> to vector<8x128xf32>
    %211 = vector.extract_strided_slice %201 {offsets = [0, 128], sizes = [8, 128], strides = [1, 1]} : vector<8x384xf32> to vector<8x128xf32>
    %212 = arith.addf %210, %211 : vector<8x128xf32>
    %213 = arith.negf %212 : vector<8x128xf32>
    %214 = math.exp %213 : vector<8x128xf32>
    %cst_35 = arith.constant 1.000000e+00 : f32
    %215 = vector.broadcast %cst_35 : f32 to vector<8x128xf32>
    %216 = arith.addf %215, %214 : vector<8x128xf32>
    %217 = arith.divf %215, %216 : vector<8x128xf32>
    %218 = vector.extract_strided_slice %197 {offsets = [0, 256], sizes = [8, 128], strides = [1, 1]} : vector<8x384xf32> to vector<8x128xf32>
    %219 = vector.extract_strided_slice %201 {offsets = [0, 256], sizes = [8, 128], strides = [1, 1]} : vector<8x384xf32> to vector<8x128xf32>
    %220 = arith.mulf %209, %219 : vector<8x128xf32>
    %221 = arith.addf %218, %220 : vector<8x128xf32>
    %222 = math.tanh %221 : vector<8x128xf32>
    %cst_36 = arith.constant 1.000000e+00 : f32
    %223 = vector.broadcast %cst_36 : f32 to vector<8x128xf32>
    %224 = arith.subf %223, %217 : vector<8x128xf32>
    %225 = arith.mulf %224, %222 : vector<8x128xf32>
    %226 = arith.mulf %217, %191 : vector<8x128xf32>
    %227 = arith.addf %225, %226 : vector<8x128xf32>
    %c5_i32 = arith.constant 5 : i32
    %228 = vector.broadcast %c5_i32 : i32 to vector<8x1xi32>
    %229 = arith.cmpi eq, %2, %228 : vector<8x1xi32>
    %230 = vector.shape_cast %229 : vector<8x1xi1> to vector<8x1xi1>
    %231 = vector.broadcast %230 : vector<8x1xi1> to vector<8x128xi1>
    %232 = arith.select %231, %227, %196 : vector<8x128xi1>, vector<8x128xf32>
    %233 = vector.extract_strided_slice %14 {offsets = [48, 0], sizes = [8, 384], strides = [1, 1]} : vector<64x384xf32> to vector<8x384xf32>
    %234 = arith.truncf %227 : vector<8x128xf32> to vector<8x128xbf16>
    %cst_37 = arith.constant dense<0.000000e+00> : vector<8x384xf32>
    %235 = tpu.matmul %234, %15, %cst_37 {dimension_numbers = #tpu.dot_dimension_numbers<[1], [0], [0], [1], [0, 0, 1, 1], [], []>} : vector<8x128xbf16>, vector<128x384xbf16>, vector<8x384xf32> -> vector<8x384xf32>
    %236 = vector.broadcast %3 : vector<1x384xf32> to vector<8x384xf32>
    %237 = arith.addf %235, %236 : vector<8x384xf32>
    %238 = vector.extract_strided_slice %233 {offsets = [0, 0], sizes = [8, 128], strides = [1, 1]} : vector<8x384xf32> to vector<8x128xf32>
    %239 = vector.extract_strided_slice %237 {offsets = [0, 0], sizes = [8, 128], strides = [1, 1]} : vector<8x384xf32> to vector<8x128xf32>
    %240 = arith.addf %238, %239 : vector<8x128xf32>
    %241 = arith.negf %240 : vector<8x128xf32>
    %242 = math.exp %241 : vector<8x128xf32>
    %cst_38 = arith.constant 1.000000e+00 : f32
    %243 = vector.broadcast %cst_38 : f32 to vector<8x128xf32>
    %244 = arith.addf %243, %242 : vector<8x128xf32>
    %245 = arith.divf %243, %244 : vector<8x128xf32>
    %246 = vector.extract_strided_slice %233 {offsets = [0, 128], sizes = [8, 128], strides = [1, 1]} : vector<8x384xf32> to vector<8x128xf32>
    %247 = vector.extract_strided_slice %237 {offsets = [0, 128], sizes = [8, 128], strides = [1, 1]} : vector<8x384xf32> to vector<8x128xf32>
    %248 = arith.addf %246, %247 : vector<8x128xf32>
    %249 = arith.negf %248 : vector<8x128xf32>
    %250 = math.exp %249 : vector<8x128xf32>
    %cst_39 = arith.constant 1.000000e+00 : f32
    %251 = vector.broadcast %cst_39 : f32 to vector<8x128xf32>
    %252 = arith.addf %251, %250 : vector<8x128xf32>
    %253 = arith.divf %251, %252 : vector<8x128xf32>
    %254 = vector.extract_strided_slice %233 {offsets = [0, 256], sizes = [8, 128], strides = [1, 1]} : vector<8x384xf32> to vector<8x128xf32>
    %255 = vector.extract_strided_slice %237 {offsets = [0, 256], sizes = [8, 128], strides = [1, 1]} : vector<8x384xf32> to vector<8x128xf32>
    %256 = arith.mulf %245, %255 : vector<8x128xf32>
    %257 = arith.addf %254, %256 : vector<8x128xf32>
    %258 = math.tanh %257 : vector<8x128xf32>
    %cst_40 = arith.constant 1.000000e+00 : f32
    %259 = vector.broadcast %cst_40 : f32 to vector<8x128xf32>
    %260 = arith.subf %259, %253 : vector<8x128xf32>
    %261 = arith.mulf %260, %258 : vector<8x128xf32>
    %262 = arith.mulf %253, %227 : vector<8x128xf32>
    %263 = arith.addf %261, %262 : vector<8x128xf32>
    %c6_i32 = arith.constant 6 : i32
    %264 = vector.broadcast %c6_i32 : i32 to vector<8x1xi32>
    %265 = arith.cmpi eq, %2, %264 : vector<8x1xi32>
    %266 = vector.shape_cast %265 : vector<8x1xi1> to vector<8x1xi1>
    %267 = vector.broadcast %266 : vector<8x1xi1> to vector<8x128xi1>
    %268 = arith.select %267, %263, %232 : vector<8x128xi1>, vector<8x128xf32>
    %269 = vector.extract_strided_slice %14 {offsets = [56, 0], sizes = [8, 384], strides = [1, 1]} : vector<64x384xf32> to vector<8x384xf32>
    %270 = arith.truncf %263 : vector<8x128xf32> to vector<8x128xbf16>
    %cst_41 = arith.constant dense<0.000000e+00> : vector<8x384xf32>
    %271 = tpu.matmul %270, %15, %cst_41 {dimension_numbers = #tpu.dot_dimension_numbers<[1], [0], [0], [1], [0, 0, 1, 1], [], []>} : vector<8x128xbf16>, vector<128x384xbf16>, vector<8x384xf32> -> vector<8x384xf32>
    %272 = vector.broadcast %3 : vector<1x384xf32> to vector<8x384xf32>
    %273 = arith.addf %271, %272 : vector<8x384xf32>
    %274 = vector.extract_strided_slice %269 {offsets = [0, 0], sizes = [8, 128], strides = [1, 1]} : vector<8x384xf32> to vector<8x128xf32>
    %275 = vector.extract_strided_slice %273 {offsets = [0, 0], sizes = [8, 128], strides = [1, 1]} : vector<8x384xf32> to vector<8x128xf32>
    %276 = arith.addf %274, %275 : vector<8x128xf32>
    %277 = arith.negf %276 : vector<8x128xf32>
    %278 = math.exp %277 : vector<8x128xf32>
    %cst_42 = arith.constant 1.000000e+00 : f32
    %279 = vector.broadcast %cst_42 : f32 to vector<8x128xf32>
    %280 = arith.addf %279, %278 : vector<8x128xf32>
    %281 = arith.divf %279, %280 : vector<8x128xf32>
    %282 = vector.extract_strided_slice %269 {offsets = [0, 128], sizes = [8, 128], strides = [1, 1]} : vector<8x384xf32> to vector<8x128xf32>
    %283 = vector.extract_strided_slice %273 {offsets = [0, 128], sizes = [8, 128], strides = [1, 1]} : vector<8x384xf32> to vector<8x128xf32>
    %284 = arith.addf %282, %283 : vector<8x128xf32>
    %285 = arith.negf %284 : vector<8x128xf32>
    %286 = math.exp %285 : vector<8x128xf32>
    %cst_43 = arith.constant 1.000000e+00 : f32
    %287 = vector.broadcast %cst_43 : f32 to vector<8x128xf32>
    %288 = arith.addf %287, %286 : vector<8x128xf32>
    %289 = arith.divf %287, %288 : vector<8x128xf32>
    %290 = vector.extract_strided_slice %269 {offsets = [0, 256], sizes = [8, 128], strides = [1, 1]} : vector<8x384xf32> to vector<8x128xf32>
    %291 = vector.extract_strided_slice %273 {offsets = [0, 256], sizes = [8, 128], strides = [1, 1]} : vector<8x384xf32> to vector<8x128xf32>
    %292 = arith.mulf %281, %291 : vector<8x128xf32>
    %293 = arith.addf %290, %292 : vector<8x128xf32>
    %294 = math.tanh %293 : vector<8x128xf32>
    %cst_44 = arith.constant 1.000000e+00 : f32
    %295 = vector.broadcast %cst_44 : f32 to vector<8x128xf32>
    %296 = arith.subf %295, %289 : vector<8x128xf32>
    %297 = arith.mulf %296, %294 : vector<8x128xf32>
    %298 = arith.mulf %289, %263 : vector<8x128xf32>
    %299 = arith.addf %297, %298 : vector<8x128xf32>
    %c7_i32 = arith.constant 7 : i32
    %300 = vector.broadcast %c7_i32 : i32 to vector<8x1xi32>
    %301 = arith.cmpi eq, %2, %300 : vector<8x1xi32>
    %302 = vector.shape_cast %301 : vector<8x1xi1> to vector<8x1xi1>
    %303 = vector.broadcast %302 : vector<8x1xi1> to vector<8x128xi1>
    %304 = arith.select %303, %299, %268 : vector<8x128xi1>, vector<8x128xf32>
    %305 = arith.truncf %304 : vector<8x128xf32> to vector<8x128xbf16>
    %c0_45 = arith.constant 0 : index
    %c1536 = arith.constant 1536 : index
    %306 = vector.load %arg1[%c0_45, %c1536] : memref<128x1792xbf16, #tpu.memory_space<vmem>>, vector<128x128xbf16>
    %cst_46 = arith.constant dense<0.000000e+00> : vector<8x128xf32>
    %307 = tpu.matmul %305, %306, %cst_46 {dimension_numbers = #tpu.dot_dimension_numbers<[1], [0], [0], [1], [0, 0, 1, 1], [], []>} : vector<8x128xbf16>, vector<128x128xbf16>, vector<8x128xf32> -> vector<8x128xf32>
    %308 = vector.broadcast %5 : vector<1x128xf32> to vector<8x128xf32>
    %309 = arith.addf %307, %308 : vector<8x128xf32>
    %310 = tpu.iota {dimensions = array<i32: 1>} : vector<8x128xi32>
    %c1_i32_47 = arith.constant 1 : i32
    %311 = vector.broadcast %c1_i32_47 : i32 to vector<8x128xi32>
    %312 = arith.cmpi eq, %310, %311 : vector<8x128xi32>
    %cst_48 = arith.constant 0.000000e+00 : f32
    %cst_49 = arith.constant -20.7232666 : f32
    %313 = vector.broadcast %cst_48 : f32 to vector<8x128xf32>
    %314 = vector.broadcast %cst_49 : f32 to vector<8x128xf32>
    %315 = arith.select %312, %313, %314 : vector<8x128xi1>, vector<8x128xf32>
    %c0_50 = arith.constant 0 : index
    %c0_51 = arith.constant 0 : index
    %316 = vector.load %arg3[%c0_50, %c0_51] : memref<48x128xf32, #tpu.memory_space<vmem>>, vector<8x128xf32>
    tpu.vector_store %arg3[%c0_50, %c0_51], %315 {strides = array<i32>} : memref<48x128xf32, #tpu.memory_space<vmem>>, vector<8x128xf32>,
    %317 = tpu.iota {dimensions = array<i32: 1>} : vector<40x128xi32>
    %318 = vector.broadcast %1 : vector<40x1xi32> to vector<40x128xi32>
    %319 = arith.cmpi eq, %317, %318 : vector<40x128xi32>
    %320 = arith.extui %319 : vector<40x128xi1> to vector<40x128xi32>
    %321 = arith.sitofp %320 : vector<40x128xi32> to vector<40x128xf32>
    %322 = arith.truncf %321 : vector<40x128xf32> to vector<40x128xbf16>
    %c0_52 = arith.constant 0 : index
    %c384_53 = arith.constant 384 : index
    %323 = vector.load %arg1[%c0_52, %c384_53] : memref<128x1792xbf16, #tpu.memory_space<vmem>>, vector<128x384xbf16>
    %cst_54 = arith.constant dense<0.000000e+00> : vector<40x384xf32>
    %324 = tpu.matmul %322, %323, %cst_54 {dimension_numbers = #tpu.dot_dimension_numbers<[1], [0], [0], [1], [0, 0, 1, 1], [], []>} : vector<40x128xbf16>, vector<128x384xbf16>, vector<40x384xf32> -> vector<40x384xf32>
    %c0_55 = arith.constant 0 : index
    %c1152 = arith.constant 1152 : index
    %325 = vector.load %arg1[%c0_55, %c1152] : memref<128x1792xbf16, #tpu.memory_space<vmem>>, vector<128x384xbf16>
    %326 = vector.extract_strided_slice %324 {offsets = [0, 0], sizes = [8, 384], strides = [1, 1]} : vector<40x384xf32> to vector<8x384xf32>
    %327 = arith.truncf %309 : vector<8x128xf32> to vector<8x128xbf16>
    %cst_56 = arith.constant dense<0.000000e+00> : vector<8x384xf32>
    %328 = tpu.matmul %327, %325, %cst_56 {dimension_numbers = #tpu.dot_dimension_numbers<[1], [0], [0], [1], [0, 0, 1, 1], [], []>} : vector<8x128xbf16>, vector<128x384xbf16>, vector<8x384xf32> -> vector<8x384xf32>
    %329 = vector.broadcast %4 : vector<1x384xf32> to vector<8x384xf32>
    %330 = arith.addf %328, %329 : vector<8x384xf32>
    %331 = vector.extract_strided_slice %326 {offsets = [0, 0], sizes = [8, 128], strides = [1, 1]} : vector<8x384xf32> to vector<8x128xf32>
    %332 = vector.extract_strided_slice %330 {offsets = [0, 0], sizes = [8, 128], strides = [1, 1]} : vector<8x384xf32> to vector<8x128xf32>
    %333 = arith.addf %331, %332 : vector<8x128xf32>
    %334 = arith.negf %333 : vector<8x128xf32>
    %335 = math.exp %334 : vector<8x128xf32>
    %cst_57 = arith.constant 1.000000e+00 : f32
    %336 = vector.broadcast %cst_57 : f32 to vector<8x128xf32>
    %337 = arith.addf %336, %335 : vector<8x128xf32>
    %338 = arith.divf %336, %337 : vector<8x128xf32>
    %339 = vector.extract_strided_slice %326 {offsets = [0, 128], sizes = [8, 128], strides = [1, 1]} : vector<8x384xf32> to vector<8x128xf32>
    %340 = vector.extract_strided_slice %330 {offsets = [0, 128], sizes = [8, 128], strides = [1, 1]} : vector<8x384xf32> to vector<8x128xf32>
    %341 = arith.addf %339, %340 : vector<8x128xf32>
    %342 = arith.negf %341 : vector<8x128xf32>
    %343 = math.exp %342 : vector<8x128xf32>
    %cst_58 = arith.constant 1.000000e+00 : f32
    %344 = vector.broadcast %cst_58 : f32 to vector<8x128xf32>
    %345 = arith.addf %344, %343 : vector<8x128xf32>
    %346 = arith.divf %344, %345 : vector<8x128xf32>
    %347 = vector.extract_strided_slice %326 {offsets = [0, 256], sizes = [8, 128], strides = [1, 1]} : vector<8x384xf32> to vector<8x128xf32>
    %348 = vector.extract_strided_slice %330 {offsets = [0, 256], sizes = [8, 128], strides = [1, 1]} : vector<8x384xf32> to vector<8x128xf32>
    %349 = arith.mulf %338, %348 : vector<8x128xf32>
    %350 = arith.addf %347, %349 : vector<8x128xf32>
    %351 = math.tanh %350 : vector<8x128xf32>
    %cst_59 = arith.constant 1.000000e+00 : f32
    %352 = vector.broadcast %cst_59 : f32 to vector<8x128xf32>
    %353 = arith.subf %352, %346 : vector<8x128xf32>
    %354 = arith.mulf %353, %351 : vector<8x128xf32>
    %355 = arith.mulf %346, %309 : vector<8x128xf32>
    %356 = arith.addf %354, %355 : vector<8x128xf32>
    %357 = vector.extract_strided_slice %324 {offsets = [8, 0], sizes = [8, 384], strides = [1, 1]} : vector<40x384xf32> to vector<8x384xf32>
    %358 = arith.truncf %356 : vector<8x128xf32> to vector<8x128xbf16>
    %cst_60 = arith.constant dense<0.000000e+00> : vector<8x384xf32>
    %359 = tpu.matmul %358, %325, %cst_60 {dimension_numbers = #tpu.dot_dimension_numbers<[1], [0], [0], [1], [0, 0, 1, 1], [], []>} : vector<8x128xbf16>, vector<128x384xbf16>, vector<8x384xf32> -> vector<8x384xf32>
    %360 = vector.broadcast %4 : vector<1x384xf32> to vector<8x384xf32>
    %361 = arith.addf %359, %360 : vector<8x384xf32>
    %362 = vector.extract_strided_slice %357 {offsets = [0, 0], sizes = [8, 128], strides = [1, 1]} : vector<8x384xf32> to vector<8x128xf32>
    %363 = vector.extract_strided_slice %361 {offsets = [0, 0], sizes = [8, 128], strides = [1, 1]} : vector<8x384xf32> to vector<8x128xf32>
    %364 = arith.addf %362, %363 : vector<8x128xf32>
    %365 = arith.negf %364 : vector<8x128xf32>
    %366 = math.exp %365 : vector<8x128xf32>
    %cst_61 = arith.constant 1.000000e+00 : f32
    %367 = vector.broadcast %cst_61 : f32 to vector<8x128xf32>
    %368 = arith.addf %367, %366 : vector<8x128xf32>
    %369 = arith.divf %367, %368 : vector<8x128xf32>
    %370 = vector.extract_strided_slice %357 {offsets = [0, 128], sizes = [8, 128], strides = [1, 1]} : vector<8x384xf32> to vector<8x128xf32>
    %371 = vector.extract_strided_slice %361 {offsets = [0, 128], sizes = [8, 128], strides = [1, 1]} : vector<8x384xf32> to vector<8x128xf32>
    %372 = arith.addf %370, %371 : vector<8x128xf32>
    %373 = arith.negf %372 : vector<8x128xf32>
    %374 = math.exp %373 : vector<8x128xf32>
    %cst_62 = arith.constant 1.000000e+00 : f32
    %375 = vector.broadcast %cst_62 : f32 to vector<8x128xf32>
    %376 = arith.addf %375, %374 : vector<8x128xf32>
    %377 = arith.divf %375, %376 : vector<8x128xf32>
    %378 = vector.extract_strided_slice %357 {offsets = [0, 256], sizes = [8, 128], strides = [1, 1]} : vector<8x384xf32> to vector<8x128xf32>
    %379 = vector.extract_strided_slice %361 {offsets = [0, 256], sizes = [8, 128], strides = [1, 1]} : vector<8x384xf32> to vector<8x128xf32>
    %380 = arith.mulf %369, %379 : vector<8x128xf32>
    %381 = arith.addf %378, %380 : vector<8x128xf32>
    %382 = math.tanh %381 : vector<8x128xf32>
    %cst_63 = arith.constant 1.000000e+00 : f32
    %383 = vector.broadcast %cst_63 : f32 to vector<8x128xf32>
    %384 = arith.subf %383, %377 : vector<8x128xf32>
    %385 = arith.mulf %384, %382 : vector<8x128xf32>
    %386 = arith.mulf %377, %356 : vector<8x128xf32>
    %387 = arith.addf %385, %386 : vector<8x128xf32>
    %388 = vector.extract_strided_slice %324 {offsets = [16, 0], sizes = [8, 384], strides = [1, 1]} : vector<40x384xf32> to vector<8x384xf32>
    %389 = arith.truncf %387 : vector<8x128xf32> to vector<8x128xbf16>
    %cst_64 = arith.constant dense<0.000000e+00> : vector<8x384xf32>
    %390 = tpu.matmul %389, %325, %cst_64 {dimension_numbers = #tpu.dot_dimension_numbers<[1], [0], [0], [1], [0, 0, 1, 1], [], []>} : vector<8x128xbf16>, vector<128x384xbf16>, vector<8x384xf32> -> vector<8x384xf32>
    %391 = vector.broadcast %4 : vector<1x384xf32> to vector<8x384xf32>
    %392 = arith.addf %390, %391 : vector<8x384xf32>
    %393 = vector.extract_strided_slice %388 {offsets = [0, 0], sizes = [8, 128], strides = [1, 1]} : vector<8x384xf32> to vector<8x128xf32>
    %394 = vector.extract_strided_slice %392 {offsets = [0, 0], sizes = [8, 128], strides = [1, 1]} : vector<8x384xf32> to vector<8x128xf32>
    %395 = arith.addf %393, %394 : vector<8x128xf32>
    %396 = arith.negf %395 : vector<8x128xf32>
    %397 = math.exp %396 : vector<8x128xf32>
    %cst_65 = arith.constant 1.000000e+00 : f32
    %398 = vector.broadcast %cst_65 : f32 to vector<8x128xf32>
    %399 = arith.addf %398, %397 : vector<8x128xf32>
    %400 = arith.divf %398, %399 : vector<8x128xf32>
    %401 = vector.extract_strided_slice %388 {offsets = [0, 128], sizes = [8, 128], strides = [1, 1]} : vector<8x384xf32> to vector<8x128xf32>
    %402 = vector.extract_strided_slice %392 {offsets = [0, 128], sizes = [8, 128], strides = [1, 1]} : vector<8x384xf32> to vector<8x128xf32>
    %403 = arith.addf %401, %402 : vector<8x128xf32>
    %404 = arith.negf %403 : vector<8x128xf32>
    %405 = math.exp %404 : vector<8x128xf32>
    %cst_66 = arith.constant 1.000000e+00 : f32
    %406 = vector.broadcast %cst_66 : f32 to vector<8x128xf32>
    %407 = arith.addf %406, %405 : vector<8x128xf32>
    %408 = arith.divf %406, %407 : vector<8x128xf32>
    %409 = vector.extract_strided_slice %388 {offsets = [0, 256], sizes = [8, 128], strides = [1, 1]} : vector<8x384xf32> to vector<8x128xf32>
    %410 = vector.extract_strided_slice %392 {offsets = [0, 256], sizes = [8, 128], strides = [1, 1]} : vector<8x384xf32> to vector<8x128xf32>
    %411 = arith.mulf %400, %410 : vector<8x128xf32>
    %412 = arith.addf %409, %411 : vector<8x128xf32>
    %413 = math.tanh %412 : vector<8x128xf32>
    %cst_67 = arith.constant 1.000000e+00 : f32
    %414 = vector.broadcast %cst_67 : f32 to vector<8x128xf32>
    %415 = arith.subf %414, %408 : vector<8x128xf32>
    %416 = arith.mulf %415, %413 : vector<8x128xf32>
    %417 = arith.mulf %408, %387 : vector<8x128xf32>
    %418 = arith.addf %416, %417 : vector<8x128xf32>
    %419 = vector.extract_strided_slice %324 {offsets = [24, 0], sizes = [8, 384], strides = [1, 1]} : vector<40x384xf32> to vector<8x384xf32>
    %420 = arith.truncf %418 : vector<8x128xf32> to vector<8x128xbf16>
    %cst_68 = arith.constant dense<0.000000e+00> : vector<8x384xf32>
    %421 = tpu.matmul %420, %325, %cst_68 {dimension_numbers = #tpu.dot_dimension_numbers<[1], [0], [0], [1], [0, 0, 1, 1], [], []>} : vector<8x128xbf16>, vector<128x384xbf16>, vector<8x384xf32> -> vector<8x384xf32>
    %422 = vector.broadcast %4 : vector<1x384xf32> to vector<8x384xf32>
    %423 = arith.addf %421, %422 : vector<8x384xf32>
    %424 = vector.extract_strided_slice %419 {offsets = [0, 0], sizes = [8, 128], strides = [1, 1]} : vector<8x384xf32> to vector<8x128xf32>
    %425 = vector.extract_strided_slice %423 {offsets = [0, 0], sizes = [8, 128], strides = [1, 1]} : vector<8x384xf32> to vector<8x128xf32>
    %426 = arith.addf %424, %425 : vector<8x128xf32>
    %427 = arith.negf %426 : vector<8x128xf32>
    %428 = math.exp %427 : vector<8x128xf32>
    %cst_69 = arith.constant 1.000000e+00 : f32
    %429 = vector.broadcast %cst_69 : f32 to vector<8x128xf32>
    %430 = arith.addf %429, %428 : vector<8x128xf32>
    %431 = arith.divf %429, %430 : vector<8x128xf32>
    %432 = vector.extract_strided_slice %419 {offsets = [0, 128], sizes = [8, 128], strides = [1, 1]} : vector<8x384xf32> to vector<8x128xf32>
    %433 = vector.extract_strided_slice %423 {offsets = [0, 128], sizes = [8, 128], strides = [1, 1]} : vector<8x384xf32> to vector<8x128xf32>
    %434 = arith.addf %432, %433 : vector<8x128xf32>
    %435 = arith.negf %434 : vector<8x128xf32>
    %436 = math.exp %435 : vector<8x128xf32>
    %cst_70 = arith.constant 1.000000e+00 : f32
    %437 = vector.broadcast %cst_70 : f32 to vector<8x128xf32>
    %438 = arith.addf %437, %436 : vector<8x128xf32>
    %439 = arith.divf %437, %438 : vector<8x128xf32>
    %440 = vector.extract_strided_slice %419 {offsets = [0, 256], sizes = [8, 128], strides = [1, 1]} : vector<8x384xf32> to vector<8x128xf32>
    %441 = vector.extract_strided_slice %423 {offsets = [0, 256], sizes = [8, 128], strides = [1, 1]} : vector<8x384xf32> to vector<8x128xf32>
    %442 = arith.mulf %431, %441 : vector<8x128xf32>
    %443 = arith.addf %440, %442 : vector<8x128xf32>
    %444 = math.tanh %443 : vector<8x128xf32>
    %cst_71 = arith.constant 1.000000e+00 : f32
    %445 = vector.broadcast %cst_71 : f32 to vector<8x128xf32>
    %446 = arith.subf %445, %439 : vector<8x128xf32>
    %447 = arith.mulf %446, %444 : vector<8x128xf32>
    %448 = arith.mulf %439, %418 : vector<8x128xf32>
    %449 = arith.addf %447, %448 : vector<8x128xf32>
    %450 = vector.extract_strided_slice %324 {offsets = [32, 0], sizes = [8, 384], strides = [1, 1]} : vector<40x384xf32> to vector<8x384xf32>
    %451 = arith.truncf %449 : vector<8x128xf32> to vector<8x128xbf16>
    %cst_72 = arith.constant dense<0.000000e+00> : vector<8x384xf32>
    %452 = tpu.matmul %451, %325, %cst_72 {dimension_numbers = #tpu.dot_dimension_numbers<[1], [0], [0], [1], [0, 0, 1, 1], [], []>} : vector<8x128xbf16>, vector<128x384xbf16>, vector<8x384xf32> -> vector<8x384xf32>
    %453 = vector.broadcast %4 : vector<1x384xf32> to vector<8x384xf32>
    %454 = arith.addf %452, %453 : vector<8x384xf32>
    %455 = vector.extract_strided_slice %450 {offsets = [0, 0], sizes = [8, 128], strides = [1, 1]} : vector<8x384xf32> to vector<8x128xf32>
    %456 = vector.extract_strided_slice %454 {offsets = [0, 0], sizes = [8, 128], strides = [1, 1]} : vector<8x384xf32> to vector<8x128xf32>
    %457 = arith.addf %455, %456 : vector<8x128xf32>
    %458 = arith.negf %457 : vector<8x128xf32>
    %459 = math.exp %458 : vector<8x128xf32>
    %cst_73 = arith.constant 1.000000e+00 : f32
    %460 = vector.broadcast %cst_73 : f32 to vector<8x128xf32>
    %461 = arith.addf %460, %459 : vector<8x128xf32>
    %462 = arith.divf %460, %461 : vector<8x128xf32>
    %463 = vector.extract_strided_slice %450 {offsets = [0, 128], sizes = [8, 128], strides = [1, 1]} : vector<8x384xf32> to vector<8x128xf32>
    %464 = vector.extract_strided_slice %454 {offsets = [0, 128], sizes = [8, 128], strides = [1, 1]} : vector<8x384xf32> to vector<8x128xf32>
    %465 = arith.addf %463, %464 : vector<8x128xf32>
    %466 = arith.negf %465 : vector<8x128xf32>
    %467 = math.exp %466 : vector<8x128xf32>
    %cst_74 = arith.constant 1.000000e+00 : f32
    %468 = vector.broadcast %cst_74 : f32 to vector<8x128xf32>
    %469 = arith.addf %468, %467 : vector<8x128xf32>
    %470 = arith.divf %468, %469 : vector<8x128xf32>
    %471 = vector.extract_strided_slice %450 {offsets = [0, 256], sizes = [8, 128], strides = [1, 1]} : vector<8x384xf32> to vector<8x128xf32>
    %472 = vector.extract_strided_slice %454 {offsets = [0, 256], sizes = [8, 128], strides = [1, 1]} : vector<8x384xf32> to vector<8x128xf32>
    %473 = arith.mulf %462, %472 : vector<8x128xf32>
    %474 = arith.addf %471, %473 : vector<8x128xf32>
    %475 = math.tanh %474 : vector<8x128xf32>
    %cst_75 = arith.constant 1.000000e+00 : f32
    %476 = vector.broadcast %cst_75 : f32 to vector<8x128xf32>
    %477 = arith.subf %476, %470 : vector<8x128xf32>
    %478 = arith.mulf %477, %475 : vector<8x128xf32>
    %479 = arith.mulf %470, %449 : vector<8x128xf32>
    %480 = arith.addf %478, %479 : vector<8x128xf32>
    %481 = tpu.concatenate %356, %387, %418, %449, %480 in 0 : vector<8x128xf32>, vector<8x128xf32>, vector<8x128xf32>, vector<8x128xf32>, vector<8x128xf32> -> vector<40x128xf32>
    %482 = arith.truncf %481 : vector<40x128xf32> to vector<40x128xbf16>
    %c0_76 = arith.constant 0 : index
    %c1664 = arith.constant 1664 : index
    %483 = vector.load %arg1[%c0_76, %c1664] : memref<128x1792xbf16, #tpu.memory_space<vmem>>, vector<128x128xbf16>
    %cst_77 = arith.constant dense<0.000000e+00> : vector<40x128xf32>
    %484 = tpu.matmul %482, %483, %cst_77 {dimension_numbers = #tpu.dot_dimension_numbers<[1], [0], [0], [1], [0, 0, 1, 1], [], []>} : vector<40x128xbf16>, vector<128x128xbf16>, vector<40x128xf32> -> vector<40x128xf32>
    %485 = vector.broadcast %6 : vector<1x128xf32> to vector<40x128xf32>
    %486 = arith.addf %484, %485 : vector<40x128xf32>
    %c8 = arith.constant 8 : index
    %c0_78 = arith.constant 0 : index
    %487 = vector.load %arg3[%c8, %c0_78] : memref<48x128xf32, #tpu.memory_space<vmem>>, vector<40x128xf32>
    tpu.vector_store %arg3[%c8, %c0_78], %486 {strides = array<i32>} : memref<48x128xf32, #tpu.memory_space<vmem>>, vector<40x128xf32>,
    return
  }
}

</mosaic_0001>

<llo_original>
// kernel: tpu_custom_call.1
$region0: #{tpu_custom_call.1}
  #allocation0 [shape = 'u32[]', space=smem, size = 0x4, offset = 0x4, fixed_abs, tag = 'smem constant byte address 0x4 - core index']
  #allocation1 [shape = 'u32[144,128]{1,0:T(1,128)}', space=vmem, size = 0x12000, scoped, tag = 'internal scratch']
  %s0 = inlined_call_operand.vmem [shape: s32[112,1], index: 0, kind: input, shape index: {}]
  %s1 = inlined_call_operand.hbm [shape: bf16[128,1792], index: 1, kind: input, shape index: {}]
  %s2 = inlined_call_operand.vmem [shape: f32[1,1024], index: 2, kind: input, shape index: {}]
  %s3 = inlined_call_operand.hbm [shape: f32[48,128], index: 3, kind: output, shape index: {}]
  %s4 = sld [smem:[#allocation0]]
  $region26: #{tpu_custom_call.1} parent=0
    _
  %s6 = ssub.s32 1, %s4
  %s7 = scalar_select 0, %s6, %s4
  $region1: #{tpu_custom_call.1} parent=0
    #allocation2 [shape = 'u8[458752]{0}', space=vmem, size = 0x70000, scoped, tag = 'input window, operand 1, single buffered']
    #allocation3 [shape = 's32[1]{0}', space=sflag, size = 0x4, scoped, tag = 'scoped memory for tpu_custom_call.1']
    #allocation4 [shape = 's32[1]{0}', space=sflag, size = 0x4, scoped, tag = 'scoped memory for tpu_custom_call.1']
    #allocation5 [shape = 'u8[24576]{0}', space=vmem, size = 0x6000, scoped, tag = 'output window, operand 0, single buffered']
    %8 = vsyncpa [#allocation3], 0
    %9 = vsyncpa [#allocation4], 0
    // Predicated region
    $region2: #{tpu_custom_call.1} parent=1 // pred_check
      _
    $region3: #{tpu_custom_call.1} parent=1 // pred_check_branch
      %11 = sbr.rel (0) target = $region5
    $region4: #{tpu_custom_call.1} parent=1 // pred_region
      _
    $region5: #{tpu_custom_call.1} parent=1 // pred_fallthru
      _
    // Predicated region
    $region6: #{tpu_custom_call.1} parent=1 // pred_check
      _
    $region7: #{tpu_custom_call.1} parent=1 // pred_check_branch
      %13 = sbr.rel (0) target = $region9
    $region8: #{tpu_custom_call.1} parent=1 // pred_region
      %s15 = ssub.s32 14336, 14336
      %16 = vsyncadd [#allocation3], %s15
      %s17 = sshll.u32 [#allocation2], 4
      %s18 = int_to_ptr.vmem [resolvable:$true] %s17
      %23 = dma.hbm_to_vmem [thread:$0]  %s1, 14336, %s18, [#allocation3], 896, 896, 56
    $region9: #{tpu_custom_call.1} parent=1 // pred_fallthru
      _
    // Predicated region
    $region10: #{tpu_custom_call.1} parent=1 // pred_check
      _
    $region11: #{tpu_custom_call.1} parent=1 // pred_check_branch
      %25 = sbr.rel (0) target = $region13
    $region12: #{tpu_custom_call.1} parent=1 // pred_region
      _
    $region13: #{tpu_custom_call.1} parent=1 // pred_fallthru
      _
    // Predicated region
    $region14: #{tpu_custom_call.1} parent=1 // pred_check
      _
    $region15: #{tpu_custom_call.1} parent=1 // pred_check_branch
      %27 = sbr.rel (0) target = $region17
    $region16: #{tpu_custom_call.1} parent=1 // pred_region
      %28 = dma.done [#allocation3], 14336
    $region17: #{tpu_custom_call.1} parent=1 // pred_fallthru
      _
    %v30 = vld [vmem:[%s0] sm:$0xff]
    %v31 = vld [vmem:[%s0 + $0x8] sm:$0xff]
    %v32 = vld [vmem:[%s0 + $0x10] sm:$0xff]
    %v33 = vld [vmem:[%s0 + $0x18] sm:$0xff]
    %v34 = vld [vmem:[%s0 + $0x20] sm:$0xff]
    %v35 = vld [vmem:[%s0 + $0x28] sm:$0xff]
    %v36 = vld [vmem:[%s0 + $0x30] sm:$0xff]
    %v37 = vld [vmem:[%s0 + $0x38] sm:$0xff]
    %v38 = vld [vmem:[%s0 + $0x40] sm:$0xff]
    %v39 = vld [vmem:[%s0 + $0x48] sm:$0xff]
    %v40 = vld [vmem:[%s0 + $0x50] sm:$0xff]
    %v41 = vld [vmem:[%s0 + $0x58] sm:$0xff]
    %v42 = vld [vmem:[%s0 + $0x60] sm:$0xff]
    %v43 = vld [vmem:[%s0 + $0x68] sm:$0xff]
    %v44 = vld [vmem:[%s2] sm:$0x7]
    %v45 = vld [vmem:[%s2 + $0x3] sm:$0x7]
    %v46 = vld [vmem:[%s2 + $0x6] sm:$0x1]
    %v47 = vld [vmem:[%s2 + $0x7] sm:$0x1]
    %v48 = vlaneseq
    %v49 = vand.u32 %v48, 127
    %50 = vset.pattern.permute.xlu0 0
    %51 = vperm.xlu0 %50, %v30
    %v52 = vpop.permute.xlu0 %51
    %53 = vset.pattern.permute.xlu0 0
    %54 = vperm.xlu0 %53, %v31
    %v55 = vpop.permute.xlu0 %54
    %56 = vset.pattern.permute.xlu0 0
    %57 = vperm.xlu0 %56, %v32
    %v58 = vpop.permute.xlu0 %57
    %59 = vset.pattern.permute.xlu0 0
    %60 = vperm.xlu0 %59, %v33
    %v61 = vpop.permute.xlu0 %60
    %62 = vset.pattern.permute.xlu0 0
    %63 = vperm.xlu0 %62, %v34
    %v64 = vpop.permute.xlu0 %63
    %65 = vset.pattern.permute.xlu0 0
    %66 = vperm.xlu0 %65, %v35
    %v67 = vpop.permute.xlu0 %66
    %68 = vset.pattern.permute.xlu0 0
    %69 = vperm.xlu0 %68, %v36
    %v70 = vpop.permute.xlu0 %69
    %71 = vset.pattern.permute.xlu0 0
    %72 = vperm.xlu0 %71, %v37
    %v73 = vpop.permute.xlu0 %72
    %vm74 = vcmp.eq.s32.totalorder %v49, %v52
    %vm75 = vcmp.eq.s32.totalorder %v49, %v55
    %vm76 = vcmp.eq.s32.totalorder %v49, %v58
    %vm77 = vcmp.eq.s32.totalorder %v49, %v61
    %vm78 = vcmp.eq.s32.totalorder %v49, %v64
    %vm79 = vcmp.eq.s32.totalorder %v49, %v67
    %vm80 = vcmp.eq.s32.totalorder %v49, %v70
    %vm81 = vcmp.eq.s32.totalorder %v49, %v73
    %v82 = vsel %vm74, 1, 0
    %v83 = vsel %vm75, 1, 0
    %v84 = vsel %vm76, 1, 0
    %v85 = vsel %vm77, 1, 0
    %v86 = vsel %vm78, 1, 0
    %v87 = vsel %vm79, 1, 0
    %v88 = vsel %vm80, 1, 0
    %v89 = vsel %vm81, 1, 0
    %v90 = vcvt.s32.f32 %v82
    %v91 = vcvt.s32.f32 %v83
    %v92 = vcvt.s32.f32 %v84
    %v93 = vcvt.s32.f32 %v85
    %v94 = vcvt.s32.f32 %v86
    %v95 = vcvt.s32.f32 %v87
    %v96 = vcvt.s32.f32 %v88
    %v97 = vcvt.s32.f32 %v89
    %v98 = vpack.c.bf16 %v91, %v90
    %v99 = vpack.c.bf16 %v93, %v92
    %v100 = vpack.c.bf16 %v95, %v94
    %v101 = vpack.c.bf16 %v97, %v96
    %v102 = vld [vmem:[#allocation2] sm:$0xff]
    %v103 = vld [vmem:[#allocation2 + $0x8] sm:$0xf]
    %v104 = vld [vmem:[#allocation2 + $0x38] sm:$0xff]
    %v105 = vld [vmem:[#allocation2 + $0x40] sm:$0xf]
    %v106 = vld [vmem:[#allocation2 + $0x70] sm:$0xff]
    %v107 = vld [vmem:[#allocation2 + $0x78] sm:$0xf]
    %v108 = vld [vmem:[#allocation2 + $0xa8] sm:$0xff]
    %v109 = vld [vmem:[#allocation2 + $0xb0] sm:$0xf]
    %v110 = vld [vmem:[#allocation2 + $0xe0] sm:$0xff]
    %v111 = vld [vmem:[#allocation2 + $0xe8] sm:$0xf]
    %v112 = vld [vmem:[#allocation2 + $0x118] sm:$0xff]
    %v113 = vld [vmem:[#allocation2 + $0x120] sm:$0xf]
    %v114 = vld [vmem:[#allocation2 + $0x150] sm:$0xff]
    %v115 = vld [vmem:[#allocation2 + $0x158] sm:$0xf]
    %v116 = vld [vmem:[#allocation2 + $0x188] sm:$0xff]
    %v117 = vld [vmem:[#allocation2 + $0x190] sm:$0xf]
    %v118 = vld [vmem:[#allocation2 + $0x1c0] sm:$0xff]
    %v119 = vld [vmem:[#allocation2 + $0x1c8] sm:$0xf]
    %v120 = vld [vmem:[#allocation2 + $0x1f8] sm:$0xff]
    %v121 = vld [vmem:[#allocation2 + $0x200] sm:$0xf]
    %v122 = vld [vmem:[#allocation2 + $0x230] sm:$0xff]
    %v123 = vld [vmem:[#allocation2 + $0x238] sm:$0xf]
    %v124 = vld [vmem:[#allocation2 + $0x268] sm:$0xff]
    %v125 = vld [vmem:[#allocation2 + $0x270] sm:$0xf]
    %v126 = vld [vmem:[#allocation2 + $0x2a0] sm:$0xff]
    %v127 = vld [vmem:[#allocation2 + $0x2a8] sm:$0xf]
    %v128 = vld [vmem:[#allocation2 + $0x2d8] sm:$0xff]
    %v129 = vld [vmem:[#allocation2 + $0x2e0] sm:$0xf]
    %v130 = vld [vmem:[#allocation2 + $0x310] sm:$0xff]
    %v131 = vld [vmem:[#allocation2 + $0x318] sm:$0xf]
    %v132 = vld [vmem:[#allocation2 + $0x348] sm:$0xff]
    %v133 = vld [vmem:[#allocation2 + $0x350] sm:$0xf]
    %v166 = vunpack.c.l.b16 %v102
    %v167 = vunpack.c.h.b16 %v102
    %v168 = vunpack.c.l.b16 %v103
    %v169 = vunpack.c.l.b16 %v104
    %v170 = vunpack.c.h.b16 %v104
    %v171 = vunpack.c.l.b16 %v105
    %v172 = vunpack.c.l.b16 %v106
    %v173 = vunpack.c.h.b16 %v106
    %v174 = vunpack.c.l.b16 %v107
    %v175 = vunpack.c.l.b16 %v108
    %v176 = vunpack.c.h.b16 %v108
    %v177 = vunpack.c.l.b16 %v109
    %v178 = vunpack.c.l.b16 %v110
    %v179 = vunpack.c.h.b16 %v110
    %v180 = vunpack.c.l.b16 %v111
    %v181 = vunpack.c.l.b16 %v112
    %v182 = vunpack.c.h.b16 %v112
    %v183 = vunpack.c.l.b16 %v113
    %v184 = vunpack.c.l.b16 %v114
    %v185 = vunpack.c.h.b16 %v114
    %v186 = vunpack.c.l.b16 %v115
    %v187 = vunpack.c.l.b16 %v116
    %v188 = vunpack.c.h.b16 %v116
    %v189 = vunpack.c.l.b16 %v117
    %v190 = vunpack.c.l.b16 %v118
    %v191 = vunpack.c.h.b16 %v118
    %v192 = vunpack.c.l.b16 %v119
    %v193 = vunpack.c.l.b16 %v120
    %v194 = vunpack.c.h.b16 %v120
    %v195 = vunpack.c.l.b16 %v121
    %v196 = vunpack.c.l.b16 %v122
    %v197 = vunpack.c.h.b16 %v122
    %v198 = vunpack.c.l.b16 %v123
    %v199 = vunpack.c.l.b16 %v124
    %v200 = vunpack.c.h.b16 %v124
    %v201 = vunpack.c.l.b16 %v125
    %v202 = vunpack.c.l.b16 %v126
    %v203 = vunpack.c.h.b16 %v126
    %v204 = vunpack.c.l.b16 %v127
    %v205 = vunpack.c.l.b16 %v128
    %v206 = vunpack.c.h.b16 %v128
    %v207 = vunpack.c.l.b16 %v129
    %v208 = vunpack.c.l.b16 %v130
    %v209 = vunpack.c.h.b16 %v130
    %v210 = vunpack.c.l.b16 %v131
    %v211 = vunpack.c.l.b16 %v132
    %v212 = vunpack.c.h.b16 %v132
    %v213 = vunpack.c.l.b16 %v133
    %v214 = vpack.c.b16 %v169, %v166
    %v215 = vpack.c.b16 %v170, %v167
    %v216 = vpack.c.b16 %v171, %v168
    %v217 = vpack.c.b16 %v175, %v172
    %v218 = vpack.c.b16 %v176, %v173
    %v219 = vpack.c.b16 %v177, %v174
    %v220 = vpack.c.b16 %v181, %v178
    %v221 = vpack.c.b16 %v182, %v179
    %v222 = vpack.c.b16 %v183, %v180
    %v223 = vpack.c.b16 %v187, %v184
    %v224 = vpack.c.b16 %v188, %v185
    %v225 = vpack.c.b16 %v189, %v186
    %v226 = vpack.c.b16 %v193, %v190
    %v227 = vpack.c.b16 %v194, %v191
    %v228 = vpack.c.b16 %v195, %v192
    %v229 = vpack.c.b16 %v199, %v196
    %v230 = vpack.c.b16 %v200, %v197
    %v231 = vpack.c.b16 %v201, %v198
    %v232 = vpack.c.b16 %v205, %v202
    %v233 = vpack.c.b16 %v206, %v203
    %v234 = vpack.c.b16 %v207, %v204
    %v235 = vpack.c.b16 %v211, %v208
    %v236 = vpack.c.b16 %v212, %v209
    %v237 = vpack.c.b16 %v213, %v210
    %262 = vmatprep.subr.bf16.mxu0 %v236
    %263 = vmatpush1.bf16.msra.mxu0 %v235
    %264 = vmatprep.subr.bf16.mxu0 %v233
    %265 = vmatpush1.bf16.msra.mxu0 %v232
    %266 = vmatprep.subr.bf16.mxu0 %v230
    %267 = vmatpush1.bf16.msra.mxu0 %v229
    %268 = vmatprep.subr.bf16.mxu0 %v227
    %269 = vmatpush1.bf16.msra.mxu0 %v226
    %270 = vmatprep.subr.bf16.mxu0 %v224
    %271 = vmatpush1.bf16.msra.mxu0 %v223
    %272 = vmatprep.subr.bf16.mxu0 %v221
    %273 = vmatpush1.bf16.msra.mxu0 %v220
    %274 = vmatprep.subr.bf16.mxu0 %v218
    %275 = vmatpush1.bf16.msra.mxu0 %v217
    %276 = vmatprep.subr.bf16.mxu0 %v215
    %277 = vmatpush1.bf16.msra.mxu0 %v214
    %278 = vmatprep.subr.bf16.mxu0 0
    %279 = vmatpush2.bf16.msra.mxu0 0
    %280 = vmatprep.subr.bf16.mxu0 0
    %281 = vmatpush2.bf16.msra.mxu0 0
    %282 = vmatprep.subr.bf16.mxu0 0
    %283 = vmatpush2.bf16.msra.mxu0 0
    %284 = vmatprep.subr.bf16.mxu0 0
    %285 = vmatpush2.bf16.msra.mxu0 0
    %286 = vmatprep.subr.bf16.mxu0 0
    %287 = vmatpush2.bf16.msra.mxu0 0
    %288 = vmatprep.subr.bf16.mxu0 0
    %289 = vmatpush2.bf16.msra.mxu0 0
    %290 = vmatprep.subr.bf16.mxu0 0
    %291 = vmatpush2.bf16.msra.mxu0 0
    %292 = vmatprep.subr.bf16.mxu0 0
    %293 = vmatpush2.bf16.msra.mxu0 0
    %294 = vmatprep.mubr.bf16.mxu0 0
    %295 = vmatmul.mubr.bf16.gmra.mxu0 %v98
    %v296 = vpop.f32.mrf.mxu0
    %v297 = vadd.f32 0.0, %v296
    %v298 = vpop.f32.mrf.mxu0
    %v299 = vadd.f32 0.0, %v298
    %v300 = vpop.f32.mrf.mxu0
    %v301 = vadd.f32 0.0, %v300
    %v302 = vpop.f32.mrf.mxu0
    %v303 = vadd.f32 0.0, %v302
    %304 = vmatprep.mubr.bf16.mxu0 0
    %305 = vmatmul.mubr.bf16.gmra.mxu0 %v99
    %v306 = vpop.f32.mrf.mxu0
    %v307 = vadd.f32 0.0, %v306
    %v308 = vpop.f32.mrf.mxu0
    %v309 = vadd.f32 0.0, %v308
    %v310 = vpop.f32.mrf.mxu0
    %v311 = vadd.f32 0.0, %v310
    %v312 = vpop.f32.mrf.mxu0
    %v313 = vadd.f32 0.0, %v312
    %314 = vmatprep.mubr.bf16.mxu0 0
    %315 = vmatmul.mubr.bf16.gmra.mxu0 %v100
    %v316 = vpop.f32.mrf.mxu0
    %v317 = vadd.f32 0.0, %v316
    %v318 = vpop.f32.mrf.mxu0
    %v319 = vadd.f32 0.0, %v318
    %v320 = vpop.f32.mrf.mxu0
    %v321 = vadd.f32 0.0, %v320
    %v322 = vpop.f32.mrf.mxu0
    %v323 = vadd.f32 0.0, %v322
    %324 = vmatprep.mubr.bf16.mxu0 0
    %325 = vmatmul.mubr.bf16.gmra.mxu0 %v101
    %v326 = vpop.f32.mrf.mxu0
    %v327 = vadd.f32 0.0, %v326
    %v328 = vpop.f32.mrf.mxu0
    %v329 = vadd.f32 0.0, %v328
    %v330 = vpop.f32.mrf.mxu0
    %v331 = vadd.f32 0.0, %v330
    %v332 = vpop.f32.mrf.mxu0
    %v333 = vadd.f32 0.0, %v332
    %334 = vdwg.mxu0
    %335 = vmatprep.subr.bf16.mxu0 0
    %336 = vmatpush1.bf16.msra.mxu0 %v237
    %337 = vmatprep.subr.bf16.mxu0 0
    %338 = vmatpush1.bf16.msra.mxu0 %v234
    %339 = vmatprep.subr.bf16.mxu0 0
    %340 = vmatpush1.bf16.msra.mxu0 %v231
    %341 = vmatprep.subr.bf16.mxu0 0
    %342 = vmatpush1.bf16.msra.mxu0 %v228
    %343 = vmatprep.subr.bf16.mxu0 0
    %344 = vmatpush1.bf16.msra.mxu0 %v225
    %345 = vmatprep.subr.bf16.mxu0 0
    %346 = vmatpush1.bf16.msra.mxu0 %v222
    %347 = vmatprep.subr.bf16.mxu0 0
    %348 = vmatpush1.bf16.msra.mxu0 %v219
    %349 = vmatprep.subr.bf16.mxu0 0
    %350 = vmatpush1.bf16.msra.mxu0 %v216
    %351 = vmatprep.subr.bf16.mxu0 0
    %352 = vmatpush2.bf16.msra.mxu0 0
    %353 = vmatprep.subr.bf16.mxu0 0
    %354 = vmatpush2.bf16.msra.mxu0 0
    %355 = vmatprep.subr.bf16.mxu0 0
    %356 = vmatpush2.bf16.msra.mxu0 0
    %357 = vmatprep.subr.bf16.mxu0 0
    %358 = vmatpush2.bf16.msra.mxu0 0
    %359 = vmatprep.subr.bf16.mxu0 0
    %360 = vmatpush2.bf16.msra.mxu0 0
    %361 = vmatprep.subr.bf16.mxu0 0
    %362 = vmatpush2.bf16.msra.mxu0 0
    %363 = vmatprep.subr.bf16.mxu0 0
    %364 = vmatpush2.bf16.msra.mxu0 0
    %365 = vmatprep.subr.bf16.mxu0 0
    %366 = vmatpush2.bf16.msra.mxu0 0
    %367 = vmatprep.mubr.bf16.mxu0 0
    %368 = vmatmul.mubr.bf16.gmra.mxu0 %v98
    %v369 = vpop.f32.mrf.mxu0
    %v370 = vadd.f32 0.0, %v369
    %v371 = vpop.f32.mrf.mxu0
    %v372 = vpop.f32.mrf.mxu0
    %v373 = vadd.f32 0.0, %v372
    %v374 = vpop.f32.mrf.mxu0
    %375 = vmatprep.mubr.bf16.mxu0 0
    %376 = vmatmul.mubr.bf16.gmra.mxu0 %v99
    %v377 = vpop.f32.mrf.mxu0
    %v378 = vadd.f32 0.0, %v377
    %v379 = vpop.f32.mrf.mxu0
    %v380 = vpop.f32.mrf.mxu0
    %v381 = vadd.f32 0.0, %v380
    %v382 = vpop.f32.mrf.mxu0
    %383 = vmatprep.mubr.bf16.mxu0 0
    %384 = vmatmul.mubr.bf16.gmra.mxu0 %v100
    %v385 = vpop.f32.mrf.mxu0
    %v386 = vadd.f32 0.0, %v385
    %v387 = vpop.f32.mrf.mxu0
    %v388 = vpop.f32.mrf.mxu0
    %v389 = vadd.f32 0.0, %v388
    %v390 = vpop.f32.mrf.mxu0
    %391 = vmatprep.mubr.bf16.mxu0 0
    %392 = vmatmul.mubr.bf16.gmra.mxu0 %v101
    %v393 = vpop.f32.mrf.mxu0
    %v394 = vadd.f32 0.0, %v393
    %v395 = vpop.f32.mrf.mxu0
    %v396 = vpop.f32.mrf.mxu0
    %v397 = vadd.f32 0.0, %v396
    %v398 = vpop.f32.mrf.mxu0
    %399 = vdwg.mxu0
    %v400 = vld [vmem:[#allocation2 + $0x18] sm:$0xff]
    %v401 = vld [vmem:[#allocation2 + $0x20] sm:$0xf]
    %v402 = vld [vmem:[#allocation2 + $0x50] sm:$0xff]
    %v403 = vld [vmem:[#allocation2 + $0x58] sm:$0xf]
    %v404 = vld [vmem:[#allocation2 + $0x88] sm:$0xff]
    %v405 = vld [vmem:[#allocation2 + $0x90] sm:$0xf]
    %v406 = vld [vmem:[#allocation2 + $0xc0] sm:$0xff]
    %v407 = vld [vmem:[#allocation2 + $0xc8] sm:$0xf]
    %v408 = vld [vmem:[#allocation2 + $0xf8] sm:$0xff]
    %v409 = vld [vmem:[#allocation2 + $0x100] sm:$0xf]
    %v410 = vld [vmem:[#allocation2 + $0x130] sm:$0xff]
    %v411 = vld [vmem:[#allocation2 + $0x138] sm:$0xf]
    %v412 = vld [vmem:[#allocation2 + $0x168] sm:$0xff]
    %v413 = vld [vmem:[#allocation2 + $0x170] sm:$0xf]
    %v414 = vld [vmem:[#allocation2 + $0x1a0] sm:$0xff]
    %v415 = vld [vmem:[#allocation2 + $0x1a8] sm:$0xf]
    %v416 = vld [vmem:[#allocation2 + $0x1d8] sm:$0xff]
    %v417 = vld [vmem:[#allocation2 + $0x1e0] sm:$0xf]
    %v418 = vld [vmem:[#allocation2 + $0x210] sm:$0xff]
    %v419 = vld [vmem:[#allocation2 + $0x218] sm:$0xf]
    %v420 = vld [vmem:[#allocation2 + $0x248] sm:$0xff]
    %v421 = vld [vmem:[#allocation2 + $0x250] sm:$0xf]
    %v422 = vld [vmem:[#allocation2 + $0x280] sm:$0xff]
    %v423 = vld [vmem:[#allocation2 + $0x288] sm:$0xf]
    %v424 = vld [vmem:[#allocation2 + $0x2b8] sm:$0xff]
    %v425 = vld [vmem:[#allocation2 + $0x2c0] sm:$0xf]
    %v426 = vld [vmem:[#allocation2 + $0x2f0] sm:$0xff]
    %v427 = vld [vmem:[#allocation2 + $0x2f8] sm:$0xf]
    %v428 = vld [vmem:[#allocation2 + $0x328] sm:$0xff]
    %v429 = vld [vmem:[#allocation2 + $0x330] sm:$0xf]
    %v430 = vld [vmem:[#allocation2 + $0x360] sm:$0xff]
    %v431 = vld [vmem:[#allocation2 + $0x368] sm:$0xf]
    %v433 = vlaneseq
    %v434 = vshrl.u32 %v433, 7
    %v435 = vsub.s32 0, %v434
    %v436 = vrot.slane %v44, %v435
    %v437 = vlaneseq
    %v438 = vshrl.u32 %v437, 7
    %v439 = vsub.s32 1, %v438
    %v440 = vrot.slane %v44, %v439
    %v441 = vlaneseq
    %v442 = vshrl.u32 %v441, 7
    %v443 = vsub.s32 2, %v442
    %v444 = vrot.slane %v44, %v443
    %v480 = vunpack.c.l.b16 %v400
    %v481 = vunpack.c.h.b16 %v400
    %v482 = vunpack.c.l.b16 %v401
    %v483 = vunpack.c.l.b16 %v402
    %v484 = vunpack.c.h.b16 %v402
    %v485 = vunpack.c.l.b16 %v403
    %v486 = vunpack.c.l.b16 %v404
    %v487 = vunpack.c.h.b16 %v404
    %v488 = vunpack.c.l.b16 %v405
    %v489 = vunpack.c.l.b16 %v406
    %v490 = vunpack.c.h.b16 %v406
    %v491 = vunpack.c.l.b16 %v407
    %v492 = vunpack.c.l.b16 %v408
    %v493 = vunpack.c.h.b16 %v408
    %v494 = vunpack.c.l.b16 %v409
    %v495 = vunpack.c.l.b16 %v410
    %v496 = vunpack.c.h.b16 %v410
    %v497 = vunpack.c.l.b16 %v411
    %v498 = vunpack.c.l.b16 %v412
    %v499 = vunpack.c.h.b16 %v412
    %v500 = vunpack.c.l.b16 %v413
    %v501 = vunpack.c.l.b16 %v414
    %v502 = vunpack.c.h.b16 %v414
    %v503 = vunpack.c.l.b16 %v415
    %v504 = vunpack.c.l.b16 %v416
    %v505 = vunpack.c.h.b16 %v416
    %v506 = vunpack.c.l.b16 %v417
    %v507 = vunpack.c.l.b16 %v418
    %v508 = vunpack.c.h.b16 %v418
    %v509 = vunpack.c.l.b16 %v419
    %v510 = vunpack.c.l.b16 %v420
    %v511 = vunpack.c.h.b16 %v420
    %v512 = vunpack.c.l.b16 %v421
    %v513 = vunpack.c.l.b16 %v422
    %v514 = vunpack.c.h.b16 %v422
    %v515 = vunpack.c.l.b16 %v423
    %v516 = vunpack.c.l.b16 %v424
    %v517 = vunpack.c.h.b16 %v424
    %v518 = vunpack.c.l.b16 %v425
    %v519 = vunpack.c.l.b16 %v426
    %v520 = vunpack.c.h.b16 %v426
    %v521 = vunpack.c.l.b16 %v427
    %v522 = vunpack.c.l.b16 %v428
    %v523 = vunpack.c.h.b16 %v428
    %v524 = vunpack.c.l.b16 %v429
    %v525 = vunpack.c.l.b16 %v430
    %v526 = vunpack.c.h.b16 %v430
    %v527 = vunpack.c.l.b16 %v431
    %v528 = vpack.c.b16 %v483, %v480
    %v529 = vpack.c.b16 %v484, %v481
    %v530 = vpack.c.b16 %v485, %v482
    %v531 = vpack.c.b16 %v489, %v486
    %v532 = vpack.c.b16 %v490, %v487
    %v533 = vpack.c.b16 %v491, %v488
    %v534 = vpack.c.b16 %v495, %v492
    %v535 = vpack.c.b16 %v496, %v493
    %v536 = vpack.c.b16 %v497, %v494
    %v537 = vpack.c.b16 %v501, %v498
    %v538 = vpack.c.b16 %v502, %v499
    %v539 = vpack.c.b16 %v503, %v500
    %v540 = vpack.c.b16 %v507, %v504
    %v541 = vpack.c.b16 %v508, %v505
    %v542 = vpack.c.b16 %v509, %v506
    %v543 = vpack.c.b16 %v513, %v510
    %v544 = vpack.c.b16 %v514, %v511
    %v545 = vpack.c.b16 %v515, %v512
    %v546 = vpack.c.b16 %v519, %v516
    %v547 = vpack.c.b16 %v520, %v517
    %v548 = vpack.c.b16 %v521, %v518
    %v549 = vpack.c.b16 %v525, %v522
    %v550 = vpack.c.b16 %v526, %v523
    %v551 = vpack.c.b16 %v527, %v524
    %576 = vmatprep.subr.bf16.mxu0 %v550
    %577 = vmatpush1.bf16.msra.mxu0 %v549
    %578 = vmatprep.subr.bf16.mxu0 %v547
    %579 = vmatpush1.bf16.msra.mxu0 %v546
    %580 = vmatprep.subr.bf16.mxu0 %v544
    %581 = vmatpush1.bf16.msra.mxu0 %v543
    %582 = vmatprep.subr.bf16.mxu0 %v541
    %583 = vmatpush1.bf16.msra.mxu0 %v540
    %584 = vmatprep.subr.bf16.mxu0 %v538
    %585 = vmatpush1.bf16.msra.mxu0 %v537
    %586 = vmatprep.subr.bf16.mxu0 %v535
    %587 = vmatpush1.bf16.msra.mxu0 %v534
    %588 = vmatprep.subr.bf16.mxu0 %v532
    %589 = vmatpush1.bf16.msra.mxu0 %v531
    %590 = vmatprep.subr.bf16.mxu0 %v529
    %591 = vmatpush1.bf16.msra.mxu0 %v528
    %592 = vmatprep.subr.bf16.mxu0 0
    %593 = vmatpush2.bf16.msra.mxu0 0
    %594 = vmatprep.subr.bf16.mxu0 0
    %595 = vmatpush2.bf16.msra.mxu0 0
    %596 = vmatprep.subr.bf16.mxu0 0
    %597 = vmatpush2.bf16.msra.mxu0 0
    %598 = vmatprep.subr.bf16.mxu0 0
    %599 = vmatpush2.bf16.msra.mxu0 0
    %600 = vmatprep.subr.bf16.mxu0 0
    %601 = vmatpush2.bf16.msra.mxu0 0
    %602 = vmatprep.subr.bf16.mxu0 0
    %603 = vmatpush2.bf16.msra.mxu0 0
    %604 = vmatprep.subr.bf16.mxu0 0
    %605 = vmatpush2.bf16.msra.mxu0 0
    %606 = vmatprep.subr.bf16.mxu0 0
    %607 = vmatpush2.bf16.msra.mxu0 0
    %608 = vmatprep.mubr.bf16.mxu0 0
    %609 = vmatmul.mubr.bf16.gmra.mxu0 0
    %v610 = vpop.f32.mrf.mxu0
    %v611 = vadd.f32 %v436, %v610
    %v612 = vpop.f32.mrf.mxu0
    %v613 = vadd.f32 %v440, %v612
    %v614 = vpop.f32.mrf.mxu0
    %v615 = vpop.f32.mrf.mxu0
    %616 = vdwg.mxu0
    %617 = vmatprep.subr.bf16.mxu0 0
    %618 = vmatpush1.bf16.msra.mxu0 %v551
    %619 = vmatprep.subr.bf16.mxu0 0
    %620 = vmatpush1.bf16.msra.mxu0 %v548
    %621 = vmatprep.subr.bf16.mxu0 0
    %622 = vmatpush1.bf16.msra.mxu0 %v545
    %623 = vmatprep.subr.bf16.mxu0 0
    %624 = vmatpush1.bf16.msra.mxu0 %v542
    %625 = vmatprep.subr.bf16.mxu0 0
    %626 = vmatpush1.bf16.msra.mxu0 %v539
    %627 = vmatprep.subr.bf16.mxu0 0
    %628 = vmatpush1.bf16.msra.mxu0 %v536
    %629 = vmatprep.subr.bf16.mxu0 0
    %630 = vmatpush1.bf16.msra.mxu0 %v533
    %631 = vmatprep.subr.bf16.mxu0 0
    %632 = vmatpush1.bf16.msra.mxu0 %v530
    %633 = vmatprep.subr.bf16.mxu0 0
    %634 = vmatpush2.bf16.msra.mxu0 0
    %635 = vmatprep.subr.bf16.mxu0 0
    %636 = vmatpush2.bf16.msra.mxu0 0
    %637 = vmatprep.subr.bf16.mxu0 0
    %638 = vmatpush2.bf16.msra.mxu0 0
    %639 = vmatprep.subr.bf16.mxu0 0
    %640 = vmatpush2.bf16.msra.mxu0 0
    %641 = vmatprep.subr.bf16.mxu0 0
    %642 = vmatpush2.bf16.msra.mxu0 0
    %643 = vmatprep.subr.bf16.mxu0 0
    %644 = vmatpush2.bf16.msra.mxu0 0
    %645 = vmatprep.subr.bf16.mxu0 0
    %646 = vmatpush2.bf16.msra.mxu0 0
    %647 = vmatprep.subr.bf16.mxu0 0
    %648 = vmatpush2.bf16.msra.mxu0 0
    %649 = vmatprep.mubr.bf16.mxu0 0
    %650 = vmatmul.mubr.bf16.gmra.mxu0 0
    %v651 = vpop.f32.mrf.mxu0
    %v652 = vadd.f32 %v444, %v651
    %v653 = vpop.f32.mrf.mxu0
    %v654 = vpop.f32.mrf.mxu0
    %v655 = vpop.f32.mrf.mxu0
    %656 = vdwg.mxu0
    %v657 = vadd.f32 %v297, %v611
    %v658 = vxor.u32 %v657, 2147483648
    %v659 = vmul.f32 %v658, 1.442695
    %v660 = vpow.pop %v659
    %v661 = vadd.f32 %v660, 1.0
    %v662 = vrcp.pop %v661
    %v663 = vmul.f32 1.0, %v662
    %v664 = vadd.f32 %v299, %v613
    %v665 = vxor.u32 %v664, 2147483648
    %v666 = vmul.f32 %v665, 1.442695
    %v667 = vpow.pop %v666
    %v668 = vadd.f32 %v667, 1.0
    %v669 = vrcp.pop %v668
    %v670 = vmul.f32 1.0, %v669
    %v671 = vmul.f32 %v663, %v652
    %v672 = vadd.f32 %v370, %v671
    %v673 = vtanh.pop %v672
    %v674 = vsub.f32 1.0, %v670
    %v675 = vmul.f32 %v674, %v673
    %v676 = vmul.f32 %v670, 0.0
    %v677 = vadd.f32 %v675, %v676
    %vm678 = vcmp.eq.s32.totalorder %v43, 0
    %v679 = vsel %vm678, 1, 0
    %680 = vset.pattern.permute.xlu0 0
    %681 = vperm.xlu0 %680, %v679
    %v682 = vpop.permute.xlu0 %681
    %vm683 = vcmp.eq.s32.totalorder %v682, 1
    %v684 = vsel %vm683, %v677, 0.0
    %v685 = vpack.c.bf16 %v677, %v677
    %686 = vmatprep.subr.bf16.mxu0 %v550
    %687 = vmatpush1.bf16.msra.mxu0 %v549
    %688 = vmatprep.subr.bf16.mxu0 %v547
    %689 = vmatpush1.bf16.msra.mxu0 %v546
    %690 = vmatprep.subr.bf16.mxu0 %v544
    %691 = vmatpush1.bf16.msra.mxu0 %v543
    %692 = vmatprep.subr.bf16.mxu0 %v541
    %693 = vmatpush1.bf16.msra.mxu0 %v540
    %694 = vmatprep.subr.bf16.mxu0 %v538
    %695 = vmatpush1.bf16.msra.mxu0 %v537
    %696 = vmatprep.subr.bf16.mxu0 %v535
    %697 = vmatpush1.bf16.msra.mxu0 %v534
    %698 = vmatprep.subr.bf16.mxu0 %v532
    %699 = vmatpush1.bf16.msra.mxu0 %v531
    %700 = vmatprep.subr.bf16.mxu0 %v529
    %701 = vmatpush1.bf16.msra.mxu0 %v528
    %702 = vmatprep.subr.bf16.mxu0 0
    %703 = vmatpush2.bf16.msra.mxu0 0
    %704 = vmatprep.subr.bf16.mxu0 0
    %705 = vmatpush2.bf16.msra.mxu0 0
    %706 = vmatprep.subr.bf16.mxu0 0
    %707 = vmatpush2.bf16.msra.mxu0 0
    %708 = vmatprep.subr.bf16.mxu0 0
    %709 = vmatpush2.bf16.msra.mxu0 0
    %710 = vmatprep.subr.bf16.mxu0 0
    %711 = vmatpush2.bf16.msra.mxu0 0
    %712 = vmatprep.subr.bf16.mxu0 0
    %713 = vmatpush2.bf16.msra.mxu0 0
    %714 = vmatprep.subr.bf16.mxu0 0
    %715 = vmatpush2.bf16.msra.mxu0 0
    %716 = vmatprep.subr.bf16.mxu0 0
    %717 = vmatpush2.bf16.msra.mxu0 0
    %718 = vmatprep.mubr.bf16.mxu0 0
    %719 = vmatmul.mubr.bf16.gmra.mxu0 %v685
    %v720 = vpop.f32.mrf.mxu0
    %v721 = vadd.f32 %v436, %v720
    %v722 = vpop.f32.mrf.mxu0
    %v723 = vadd.f32 %v440, %v722
    %v724 = vpop.f32.mrf.mxu0
    %v725 = vpop.f32.mrf.mxu0
    %726 = vdwg.mxu0
    %727 = vmatprep.subr.bf16.mxu0 0
    %728 = vmatpush1.bf16.msra.mxu0 %v551
    %729 = vmatprep.subr.bf16.mxu0 0
    %730 = vmatpush1.bf16.msra.mxu0 %v548
    %731 = vmatprep.subr.bf16.mxu0 0
    %732 = vmatpush1.bf16.msra.mxu0 %v545
    %733 = vmatprep.subr.bf16.mxu0 0
    %734 = vmatpush1.bf16.msra.mxu0 %v542
    %735 = vmatprep.subr.bf16.mxu0 0
    %736 = vmatpush1.bf16.msra.mxu0 %v539
    %737 = vmatprep.subr.bf16.mxu0 0
    %738 = vmatpush1.bf16.msra.mxu0 %v536
    %739 = vmatprep.subr.bf16.mxu0 0
    %740 = vmatpush1.bf16.msra.mxu0 %v533
    %741 = vmatprep.subr.bf16.mxu0 0
    %742 = vmatpush1.bf16.msra.mxu0 %v530
    %743 = vmatprep.subr.bf16.mxu0 0
    %744 = vmatpush2.bf16.msra.mxu0 0
    %745 = vmatprep.subr.bf16.mxu0 0
    %746 = vmatpush2.bf16.msra.mxu0 0
    %747 = vmatprep.subr.bf16.mxu0 0
    %748 = vmatpush2.bf16.msra.mxu0 0
    %749 = vmatprep.subr.bf16.mxu0 0
    %750 = vmatpush2.bf16.msra.mxu0 0
    %751 = vmatprep.subr.bf16.mxu0 0
    %752 = vmatpush2.bf16.msra.mxu0 0
    %753 = vmatprep.subr.bf16.mxu0 0
    %754 = vmatpush2.bf16.msra.mxu0 0
    %755 = vmatprep.subr.bf16.mxu0 0
    %756 = vmatpush2.bf16.msra.mxu0 0
    %757 = vmatprep.subr.bf16.mxu0 0
    %758 = vmatpush2.bf16.msra.mxu0 0
    %759 = vmatprep.mubr.bf16.mxu0 0
    %760 = vmatmul.mubr.bf16.gmra.mxu0 %v685
    %v761 = vpop.f32.mrf.mxu0
    %v762 = vadd.f32 %v444, %v761
    %v763 = vpop.f32.mrf.mxu0
    %v764 = vpop.f32.mrf.mxu0
    %v765 = vpop.f32.mrf.mxu0
    %766 = vdwg.mxu0
    %v767 = vadd.f32 %v301, %v721
    %v768 = vxor.u32 %v767, 2147483648
    %v769 = vmul.f32 %v768, 1.442695
    %v770 = vpow.pop %v769
    %v771 = vadd.f32 %v770, 1.0
    %v772 = vrcp.pop %v771
    %v773 = vmul.f32 1.0, %v772
    %v774 = vadd.f32 %v303, %v723
    %v775 = vxor.u32 %v774, 2147483648
    %v776 = vmul.f32 %v775, 1.442695
    %v777 = vpow.pop %v776
    %v778 = vadd.f32 %v777, 1.0
    %v779 = vrcp.pop %v778
    %v780 = vmul.f32 1.0, %v779
    %v781 = vmul.f32 %v773, %v762
    %v782 = vadd.f32 %v373, %v781
    %v783 = vtanh.pop %v782
    %v784 = vsub.f32 1.0, %v780
    %v785 = vmul.f32 %v784, %v783
    %v786 = vmul.f32 %v780, %v677
    %v787 = vadd.f32 %v785, %v786
    %vm788 = vcmp.eq.s32.totalorder %v43, 1
    %v789 = vsel %vm788, 1, 0
    %790 = vset.pattern.permute.xlu0 0
    %791 = vperm.xlu0 %790, %v789
    %v792 = vpop.permute.xlu0 %791
    %vm793 = vcmp.eq.s32.totalorder %v792, 1
    %v794 = vsel %vm793, %v787, %v684
    %v795 = vpack.c.bf16 %v787, %v787
    %796 = vmatprep.subr.bf16.mxu0 %v550
    %797 = vmatpush1.bf16.msra.mxu0 %v549
    %798 = vmatprep.subr.bf16.mxu0 %v547
    %799 = vmatpush1.bf16.msra.mxu0 %v546
    %800 = vmatprep.subr.bf16.mxu0 %v544
    %801 = vmatpush1.bf16.msra.mxu0 %v543
    %802 = vmatprep.subr.bf16.mxu0 %v541
    %803 = vmatpush1.bf16.msra.mxu0 %v540
    %804 = vmatprep.subr.bf16.mxu0 %v538
    %805 = vmatpush1.bf16.msra.mxu0 %v537
    %806 = vmatprep.subr.bf16.mxu0 %v535
    %807 = vmatpush1.bf16.msra.mxu0 %v534
    %808 = vmatprep.subr.bf16.mxu0 %v532
    %809 = vmatpush1.bf16.msra.mxu0 %v531
    %810 = vmatprep.subr.bf16.mxu0 %v529
    %811 = vmatpush1.bf16.msra.mxu0 %v528
    %812 = vmatprep.subr.bf16.mxu0 0
    %813 = vmatpush2.bf16.msra.mxu0 0
    %814 = vmatprep.subr.bf16.mxu0 0
    %815 = vmatpush2.bf16.msra.mxu0 0
    %816 = vmatprep.subr.bf16.mxu0 0
    %817 = vmatpush2.bf16.msra.mxu0 0
    %818 = vmatprep.subr.bf16.mxu0 0
    %819 = vmatpush2.bf16.msra.mxu0 0
    %820 = vmatprep.subr.bf16.mxu0 0
    %821 = vmatpush2.bf16.msra.mxu0 0
    %822 = vmatprep.subr.bf16.mxu0 0
    %823 = vmatpush2.bf16.msra.mxu0 0
    %824 = vmatprep.subr.bf16.mxu0 0
    %825 = vmatpush2.bf16.msra.mxu0 0
    %826 = vmatprep.subr.bf16.mxu0 0
    %827 = vmatpush2.bf16.msra.mxu0 0
    %828 = vmatprep.mubr.bf16.mxu0 0
    %829 = vmatmul.mubr.bf16.gmra.mxu0 %v795
    %v830 = vpop.f32.mrf.mxu0
    %v831 = vadd.f32 %v436, %v830
    %v832 = vpop.f32.mrf.mxu0
    %v833 = vadd.f32 %v440, %v832
    %v834 = vpop.f32.mrf.mxu0
    %v835 = vpop.f32.mrf.mxu0
    %836 = vdwg.mxu0
    %837 = vmatprep.subr.bf16.mxu0 0
    %838 = vmatpush1.bf16.msra.mxu0 %v551
    %839 = vmatprep.subr.bf16.mxu0 0
    %840 = vmatpush1.bf16.msra.mxu0 %v548
    %841 = vmatprep.subr.bf16.mxu0 0
    %842 = vmatpush1.bf16.msra.mxu0 %v545
    %843 = vmatprep.subr.bf16.mxu0 0
    %844 = vmatpush1.bf16.msra.mxu0 %v542
    %845 = vmatprep.subr.bf16.mxu0 0
    %846 = vmatpush1.bf16.msra.mxu0 %v539
    %847 = vmatprep.subr.bf16.mxu0 0
    %848 = vmatpush1.bf16.msra.mxu0 %v536
    %849 = vmatprep.subr.bf16.mxu0 0
    %850 = vmatpush1.bf16.msra.mxu0 %v533
    %851 = vmatprep.subr.bf16.mxu0 0
    %852 = vmatpush1.bf16.msra.mxu0 %v530
    %853 = vmatprep.subr.bf16.mxu0 0
    %854 = vmatpush2.bf16.msra.mxu0 0
    %855 = vmatprep.subr.bf16.mxu0 0
    %856 = vmatpush2.bf16.msra.mxu0 0
    %857 = vmatprep.subr.bf16.mxu0 0
    %858 = vmatpush2.bf16.msra.mxu0 0
    %859 = vmatprep.subr.bf16.mxu0 0
    %860 = vmatpush2.bf16.msra.mxu0 0
    %861 = vmatprep.subr.bf16.mxu0 0
    %862 = vmatpush2.bf16.msra.mxu0 0
    %863 = vmatprep.subr.bf16.mxu0 0
    %864 = vmatpush2.bf16.msra.mxu0 0
    %865 = vmatprep.subr.bf16.mxu0 0
    %866 = vmatpush2.bf16.msra.mxu0 0
    %867 = vmatprep.subr.bf16.mxu0 0
    %868 = vmatpush2.bf16.msra.mxu0 0
    %869 = vmatprep.mubr.bf16.mxu0 0
    %870 = vmatmul.mubr.bf16.gmra.mxu0 %v795
    %v871 = vpop.f32.mrf.mxu0
    %v872 = vadd.f32 %v444, %v871
    %v873 = vpop.f32.mrf.mxu0
    %v874 = vpop.f32.mrf.mxu0
    %v875 = vpop.f32.mrf.mxu0
    %876 = vdwg.mxu0
    %v877 = vadd.f32 %v307, %v831
    %v878 = vxor.u32 %v877, 2147483648
    %v879 = vmul.f32 %v878, 1.442695
    %v880 = vpow.pop %v879
    %v881 = vadd.f32 %v880, 1.0
    %v882 = vrcp.pop %v881
    %v883 = vmul.f32 1.0, %v882
    %v884 = vadd.f32 %v309, %v833
    %v885 = vxor.u32 %v884, 2147483648
    %v886 = vmul.f32 %v885, 1.442695
    %v887 = vpow.pop %v886
    %v888 = vadd.f32 %v887, 1.0
    %v889 = vrcp.pop %v888
    %v890 = vmul.f32 1.0, %v889
    %v891 = vmul.f32 %v883, %v872
    %v892 = vadd.f32 %v378, %v891
    %v893 = vtanh.pop %v892
    %v894 = vsub.f32 1.0, %v890
    %v895 = vmul.f32 %v894, %v893
    %v896 = vmul.f32 %v890, %v787
    %v897 = vadd.f32 %v895, %v896
    %vm898 = vcmp.eq.s32.totalorder %v43, 2
    %v899 = vsel %vm898, 1, 0
    %900 = vset.pattern.permute.xlu0 0
    %901 = vperm.xlu0 %900, %v899
    %v902 = vpop.permute.xlu0 %901
    %vm903 = vcmp.eq.s32.totalorder %v902, 1
    %v904 = vsel %vm903, %v897, %v794
    %v905 = vpack.c.bf16 %v897, %v897
    %906 = vmatprep.subr.bf16.mxu0 %v550
    %907 = vmatpush1.bf16.msra.mxu0 %v549
    %908 = vmatprep.subr.bf16.mxu0 %v547
    %909 = vmatpush1.bf16.msra.mxu0 %v546
    %910 = vmatprep.subr.bf16.mxu0 %v544
    %911 = vmatpush1.bf16.msra.mxu0 %v543
    %912 = vmatprep.subr.bf16.mxu0 %v541
    %913 = vmatpush1.bf16.msra.mxu0 %v540
    %914 = vmatprep.subr.bf16.mxu0 %v538
    %915 = vmatpush1.bf16.msra.mxu0 %v537
    %916 = vmatprep.subr.bf16.mxu0 %v535
    %917 = vmatpush1.bf16.msra.mxu0 %v534
    %918 = vmatprep.subr.bf16.mxu0 %v532
    %919 = vmatpush1.bf16.msra.mxu0 %v531
    %920 = vmatprep.subr.bf16.mxu0 %v529
    %921 = vmatpush1.bf16.msra.mxu0 %v528
    %922 = vmatprep.subr.bf16.mxu0 0
    %923 = vmatpush2.bf16.msra.mxu0 0
    %924 = vmatprep.subr.bf16.mxu0 0
    %925 = vmatpush2.bf16.msra.mxu0 0
    %926 = vmatprep.subr.bf16.mxu0 0
    %927 = vmatpush2.bf16.msra.mxu0 0
    %928 = vmatprep.subr.bf16.mxu0 0
    %929 = vmatpush2.bf16.msra.mxu0 0
    %930 = vmatprep.subr.bf16.mxu0 0
    %931 = vmatpush2.bf16.msra.mxu0 0
    %932 = vmatprep.subr.bf16.mxu0 0
    %933 = vmatpush2.bf16.msra.mxu0 0
    %934 = vmatprep.subr.bf16.mxu0 0
    %935 = vmatpush2.bf16.msra.mxu0 0
    %936 = vmatprep.subr.bf16.mxu0 0
    %937 = vmatpush2.bf16.msra.mxu0 0
    %938 = vmatprep.mubr.bf16.mxu0 0
    %939 = vmatmul.mubr.bf16.gmra.mxu0 %v905
    %v940 = vpop.f32.mrf.mxu0
    %v941 = vadd.f32 %v436, %v940
    %v942 = vpop.f32.mrf.mxu0
    %v943 = vadd.f32 %v440, %v942
    %v944 = vpop.f32.mrf.mxu0
    %v945 = vpop.f32.mrf.mxu0
    %946 = vdwg.mxu0
    %947 = vmatprep.subr.bf16.mxu0 0
    %948 = vmatpush1.bf16.msra.mxu0 %v551
    %949 = vmatprep.subr.bf16.mxu0 0
    %950 = vmatpush1.bf16.msra.mxu0 %v548
    %951 = vmatprep.subr.bf16.mxu0 0
    %952 = vmatpush1.bf16.msra.mxu0 %v545
    %953 = vmatprep.subr.bf16.mxu0 0
    %954 = vmatpush1.bf16.msra.mxu0 %v542
    %955 = vmatprep.subr.bf16.mxu0 0
    %956 = vmatpush1.bf16.msra.mxu0 %v539
    %957 = vmatprep.subr.bf16.mxu0 0
    %958 = vmatpush1.bf16.msra.mxu0 %v536
    %959 = vmatprep.subr.bf16.mxu0 0
    %960 = vmatpush1.bf16.msra.mxu0 %v533
    %961 = vmatprep.subr.bf16.mxu0 0
    %962 = vmatpush1.bf16.msra.mxu0 %v530
    %963 = vmatprep.subr.bf16.mxu0 0
    %964 = vmatpush2.bf16.msra.mxu0 0
    %965 = vmatprep.subr.bf16.mxu0 0
    %966 = vmatpush2.bf16.msra.mxu0 0
    %967 = vmatprep.subr.bf16.mxu0 0
    %968 = vmatpush2.bf16.msra.mxu0 0
    %969 = vmatprep.subr.bf16.mxu0 0
    %970 = vmatpush2.bf16.msra.mxu0 0
    %971 = vmatprep.subr.bf16.mxu0 0
    %972 = vmatpush2.bf16.msra.mxu0 0
    %973 = vmatprep.subr.bf16.mxu0 0
    %974 = vmatpush2.bf16.msra.mxu0 0
    %975 = vmatprep.subr.bf16.mxu0 0
    %976 = vmatpush2.bf16.msra.mxu0 0
    %977 = vmatprep.subr.bf16.mxu0 0
    %978 = vmatpush2.bf16.msra.mxu0 0
    %979 = vmatprep.mubr.bf16.mxu0 0
    %980 = vmatmul.mubr.bf16.gmra.mxu0 %v905
    %v981 = vpop.f32.mrf.mxu0
    %v982 = vadd.f32 %v444, %v981
    %v983 = vpop.f32.mrf.mxu0
    %v984 = vpop.f32.mrf.mxu0
    %v985 = vpop.f32.mrf.mxu0
    %986 = vdwg.mxu0
    %v987 = vadd.f32 %v311, %v941
    %v988 = vxor.u32 %v987, 2147483648
    %v989 = vmul.f32 %v988, 1.442695
    %v990 = vpow.pop %v989
    %v991 = vadd.f32 %v990, 1.0
    %v992 = vrcp.pop %v991
    %v993 = vmul.f32 1.0, %v992
    %v994 = vadd.f32 %v313, %v943
    %v995 = vxor.u32 %v994, 2147483648
    %v996 = vmul.f32 %v995, 1.442695
    %v997 = vpow.pop %v996
    %v998 = vadd.f32 %v997, 1.0
    %v999 = vrcp.pop %v998
    %v1000 = vmul.f32 1.0, %v999
    %v1001 = vmul.f32 %v993, %v982
    %v1002 = vadd.f32 %v381, %v1001
    %v1003 = vtanh.pop %v1002
    %v1004 = vsub.f32 1.0, %v1000
    %v1005 = vmul.f32 %v1004, %v1003
    %v1006 = vmul.f32 %v1000, %v897
    %v1007 = vadd.f32 %v1005, %v1006
    %vm1008 = vcmp.eq.s32.totalorder %v43, 3
    %v1009 = vsel %vm1008, 1, 0
    %1010 = vset.pattern.permute.xlu0 0
    %1011 = vperm.xlu0 %1010, %v1009
    %v1012 = vpop.permute.xlu0 %1011
    %vm1013 = vcmp.eq.s32.totalorder %v1012, 1
    %v1014 = vsel %vm1013, %v1007, %v904
    %v1015 = vpack.c.bf16 %v1007, %v1007
    %1016 = vmatprep.subr.bf16.mxu0 %v550
    %1017 = vmatpush1.bf16.msra.mxu0 %v549
    %1018 = vmatprep.subr.bf16.mxu0 %v547
    %1019 = vmatpush1.bf16.msra.mxu0 %v546
    %1020 = vmatprep.subr.bf16.mxu0 %v544
    %1021 = vmatpush1.bf16.msra.mxu0 %v543
    %1022 = vmatprep.subr.bf16.mxu0 %v541
    %1023 = vmatpush1.bf16.msra.mxu0 %v540
    %1024 = vmatprep.subr.bf16.mxu0 %v538
    %1025 = vmatpush1.bf16.msra.mxu0 %v537
    %1026 = vmatprep.subr.bf16.mxu0 %v535
    %1027 = vmatpush1.bf16.msra.mxu0 %v534
    %1028 = vmatprep.subr.bf16.mxu0 %v532
    %1029 = vmatpush1.bf16.msra.mxu0 %v531
    %1030 = vmatprep.subr.bf16.mxu0 %v529
    %1031 = vmatpush1.bf16.msra.mxu0 %v528
    %1032 = vmatprep.subr.bf16.mxu0 0
    %1033 = vmatpush2.bf16.msra.mxu0 0
    %1034 = vmatprep.subr.bf16.mxu0 0
    %1035 = vmatpush2.bf16.msra.mxu0 0
    %1036 = vmatprep.subr.bf16.mxu0 0
    %1037 = vmatpush2.bf16.msra.mxu0 0
    %1038 = vmatprep.subr.bf16.mxu0 0
    %1039 = vmatpush2.bf16.msra.mxu0 0
    %1040 = vmatprep.subr.bf16.mxu0 0
    %1041 = vmatpush2.bf16.msra.mxu0 0
    %1042 = vmatprep.subr.bf16.mxu0 0
    %1043 = vmatpush2.bf16.msra.mxu0 0
    %1044 = vmatprep.subr.bf16.mxu0 0
    %1045 = vmatpush2.bf16.msra.mxu0 0
    %1046 = vmatprep.subr.bf16.mxu0 0
    %1047 = vmatpush2.bf16.msra.mxu0 0
    %1048 = vmatprep.mubr.bf16.mxu0 0
    %1049 = vmatmul.mubr.bf16.gmra.mxu0 %v1015
    %v1050 = vpop.f32.mrf.mxu0
    %v1051 = vadd.f32 %v436, %v1050
    %v1052 = vpop.f32.mrf.mxu0
    %v1053 = vadd.f32 %v440, %v1052
    %v1054 = vpop.f32.mrf.mxu0
    %v1055 = vpop.f32.mrf.mxu0
    %1056 = vdwg.mxu0
    %1057 = vmatprep.subr.bf16.mxu0 0
    %1058 = vmatpush1.bf16.msra.mxu0 %v551
    %1059 = vmatprep.subr.bf16.mxu0 0
    %1060 = vmatpush1.bf16.msra.mxu0 %v548
    %1061 = vmatprep.subr.bf16.mxu0 0
    %1062 = vmatpush1.bf16.msra.mxu0 %v545
    %1063 = vmatprep.subr.bf16.mxu0 0
    %1064 = vmatpush1.bf16.msra.mxu0 %v542
    %1065 = vmatprep.subr.bf16.mxu0 0
    %1066 = vmatpush1.bf16.msra.mxu0 %v539
    %1067 = vmatprep.subr.bf16.mxu0 0
    %1068 = vmatpush1.bf16.msra.mxu0 %v536
    %1069 = vmatprep.subr.bf16.mxu0 0
    %1070 = vmatpush1.bf16.msra.mxu0 %v533
    %1071 = vmatprep.subr.bf16.mxu0 0
    %1072 = vmatpush1.bf16.msra.mxu0 %v530
    %1073 = vmatprep.subr.bf16.mxu0 0
    %1074 = vmatpush2.bf16.msra.mxu0 0
    %1075 = vmatprep.subr.bf16.mxu0 0
    %1076 = vmatpush2.bf16.msra.mxu0 0
    %1077 = vmatprep.subr.bf16.mxu0 0
    %1078 = vmatpush2.bf16.msra.mxu0 0
    %1079 = vmatprep.subr.bf16.mxu0 0
    %1080 = vmatpush2.bf16.msra.mxu0 0
    %1081 = vmatprep.subr.bf16.mxu0 0
    %1082 = vmatpush2.bf16.msra.mxu0 0
    %1083 = vmatprep.subr.bf16.mxu0 0
    %1084 = vmatpush2.bf16.msra.mxu0 0
    %1085 = vmatprep.subr.bf16.mxu0 0
    %1086 = vmatpush2.bf16.msra.mxu0 0
    %1087 = vmatprep.subr.bf16.mxu0 0
    %1088 = vmatpush2.bf16.msra.mxu0 0
    %1089 = vmatprep.mubr.bf16.mxu0 0
    %1090 = vmatmul.mubr.bf16.gmra.mxu0 %v1015
    %v1091 = vpop.f32.mrf.mxu0
    %v1092 = vadd.f32 %v444, %v1091
    %v1093 = vpop.f32.mrf.mxu0
    %v1094 = vpop.f32.mrf.mxu0
    %v1095 = vpop.f32.mrf.mxu0
    %1096 = vdwg.mxu0
    %v1097 = vadd.f32 %v317, %v1051
    %v1098 = vxor.u32 %v1097, 2147483648
    %v1099 = vmul.f32 %v1098, 1.442695
    %v1100 = vpow.pop %v1099
    %v1101 = vadd.f32 %v1100, 1.0
    %v1102 = vrcp.pop %v1101
    %v1103 = vmul.f32 1.0, %v1102
    %v1104 = vadd.f32 %v319, %v1053
    %v1105 = vxor.u32 %v1104, 2147483648
    %v1106 = vmul.f32 %v1105, 1.442695
    %v1107 = vpow.pop %v1106
    %v1108 = vadd.f32 %v1107, 1.0
    %v1109 = vrcp.pop %v1108
    %v1110 = vmul.f32 1.0, %v1109
    %v1111 = vmul.f32 %v1103, %v1092
    %v1112 = vadd.f32 %v386, %v1111
    %v1113 = vtanh.pop %v1112
    %v1114 = vsub.f32 1.0, %v1110
    %v1115 = vmul.f32 %v1114, %v1113
    %v1116 = vmul.f32 %v1110, %v1007
    %v1117 = vadd.f32 %v1115, %v1116
    %vm1118 = vcmp.eq.s32.totalorder %v43, 4
    %v1119 = vsel %vm1118, 1, 0
    %1120 = vset.pattern.permute.xlu0 0
    %1121 = vperm.xlu0 %1120, %v1119
    %v1122 = vpop.permute.xlu0 %1121
    %vm1123 = vcmp.eq.s32.totalorder %v1122, 1
    %v1124 = vsel %vm1123, %v1117, %v1014
    %v1125 = vpack.c.bf16 %v1117, %v1117
    %1126 = vmatprep.subr.bf16.mxu0 %v550
    %1127 = vmatpush1.bf16.msra.mxu0 %v549
    %1128 = vmatprep.subr.bf16.mxu0 %v547
    %1129 = vmatpush1.bf16.msra.mxu0 %v546
    %1130 = vmatprep.subr.bf16.mxu0 %v544
    %1131 = vmatpush1.bf16.msra.mxu0 %v543
    %1132 = vmatprep.subr.bf16.mxu0 %v541
    %1133 = vmatpush1.bf16.msra.mxu0 %v540
    %1134 = vmatprep.subr.bf16.mxu0 %v538
    %1135 = vmatpush1.bf16.msra.mxu0 %v537
    %1136 = vmatprep.subr.bf16.mxu0 %v535
    %1137 = vmatpush1.bf16.msra.mxu0 %v534
    %1138 = vmatprep.subr.bf16.mxu0 %v532
    %1139 = vmatpush1.bf16.msra.mxu0 %v531
    %1140 = vmatprep.subr.bf16.mxu0 %v529
    %1141 = vmatpush1.bf16.msra.mxu0 %v528
    %1142 = vmatprep.subr.bf16.mxu0 0
    %1143 = vmatpush2.bf16.msra.mxu0 0
    %1144 = vmatprep.subr.bf16.mxu0 0
    %1145 = vmatpush2.bf16.msra.mxu0 0
    %1146 = vmatprep.subr.bf16.mxu0 0
    %1147 = vmatpush2.bf16.msra.mxu0 0
    %1148 = vmatprep.subr.bf16.mxu0 0
    %1149 = vmatpush2.bf16.msra.mxu0 0
    %1150 = vmatprep.subr.bf16.mxu0 0
    %1151 = vmatpush2.bf16.msra.mxu0 0
    %1152 = vmatprep.subr.bf16.mxu0 0
    %1153 = vmatpush2.bf16.msra.mxu0 0
    %1154 = vmatprep.subr.bf16.mxu0 0
    %1155 = vmatpush2.bf16.msra.mxu0 0
    %1156 = vmatprep.subr.bf16.mxu0 0
    %1157 = vmatpush2.bf16.msra.mxu0 0
    %1158 = vmatprep.mubr.bf16.mxu0 0
    %1159 = vmatmul.mubr.bf16.gmra.mxu0 %v1125
    %v1160 = vpop.f32.mrf.mxu0
    %v1161 = vadd.f32 %v436, %v1160
    %v1162 = vpop.f32.mrf.mxu0
    %v1163 = vadd.f32 %v440, %v1162
    %v1164 = vpop.f32.mrf.mxu0
    %v1165 = vpop.f32.mrf.mxu0
    %1166 = vdwg.mxu0
    %1167 = vmatprep.subr.bf16.mxu0 0
    %1168 = vmatpush1.bf16.msra.mxu0 %v551
    %1169 = vmatprep.subr.bf16.mxu0 0
    %1170 = vmatpush1.bf16.msra.mxu0 %v548
    %1171 = vmatprep.subr.bf16.mxu0 0
    %1172 = vmatpush1.bf16.msra.mxu0 %v545
    %1173 = vmatprep.subr.bf16.mxu0 0
    %1174 = vmatpush1.bf16.msra.mxu0 %v542
    %1175 = vmatprep.subr.bf16.mxu0 0
    %1176 = vmatpush1.bf16.msra.mxu0 %v539
    %1177 = vmatprep.subr.bf16.mxu0 0
    %1178 = vmatpush1.bf16.msra.mxu0 %v536
    %1179 = vmatprep.subr.bf16.mxu0 0
    %1180 = vmatpush1.bf16.msra.mxu0 %v533
    %1181 = vmatprep.subr.bf16.mxu0 0
    %1182 = vmatpush1.bf16.msra.mxu0 %v530
    %1183 = vmatprep.subr.bf16.mxu0 0
    %1184 = vmatpush2.bf16.msra.mxu0 0
    %1185 = vmatprep.subr.bf16.mxu0 0
    %1186 = vmatpush2.bf16.msra.mxu0 0
    %1187 = vmatprep.subr.bf16.mxu0 0
    %1188 = vmatpush2.bf16.msra.mxu0 0
    %1189 = vmatprep.subr.bf16.mxu0 0
    %1190 = vmatpush2.bf16.msra.mxu0 0
    %1191 = vmatprep.subr.bf16.mxu0 0
    %1192 = vmatpush2.bf16.msra.mxu0 0
    %1193 = vmatprep.subr.bf16.mxu0 0
    %1194 = vmatpush2.bf16.msra.mxu0 0
    %1195 = vmatprep.subr.bf16.mxu0 0
    %1196 = vmatpush2.bf16.msra.mxu0 0
    %1197 = vmatprep.subr.bf16.mxu0 0
    %1198 = vmatpush2.bf16.msra.mxu0 0
    %1199 = vmatprep.mubr.bf16.mxu0 0
    %1200 = vmatmul.mubr.bf16.gmra.mxu0 %v1125
    %v1201 = vpop.f32.mrf.mxu0
    %v1202 = vadd.f32 %v444, %v1201
    %v1203 = vpop.f32.mrf.mxu0
    %v1204 = vpop.f32.mrf.mxu0
    %v1205 = vpop.f32.mrf.mxu0
    %1206 = vdwg.mxu0
    %v1207 = vadd.f32 %v321, %v1161
    %v1208 = vxor.u32 %v1207, 2147483648
    %v1209 = vmul.f32 %v1208, 1.442695
    %v1210 = vpow.pop %v1209
    %v1211 = vadd.f32 %v1210, 1.0
    %v1212 = vrcp.pop %v1211
    %v1213 = vmul.f32 1.0, %v1212
    %v1214 = vadd.f32 %v323, %v1163
    %v1215 = vxor.u32 %v1214, 2147483648
    %v1216 = vmul.f32 %v1215, 1.442695
    %v1217 = vpow.pop %v1216
    %v1218 = vadd.f32 %v1217, 1.0
    %v1219 = vrcp.pop %v1218
    %v1220 = vmul.f32 1.0, %v1219
    %v1221 = vmul.f32 %v1213, %v1202
    %v1222 = vadd.f32 %v389, %v1221
    %v1223 = vtanh.pop %v1222
    %v1224 = vsub.f32 1.0, %v1220
    %v1225 = vmul.f32 %v1224, %v1223
    %v1226 = vmul.f32 %v1220, %v1117
    %v1227 = vadd.f32 %v1225, %v1226
    %vm1228 = vcmp.eq.s32.totalorder %v43, 5
    %v1229 = vsel %vm1228, 1, 0
    %1230 = vset.pattern.permute.xlu0 0
    %1231 = vperm.xlu0 %1230, %v1229
    %v1232 = vpop.permute.xlu0 %1231
    %vm1233 = vcmp.eq.s32.totalorder %v1232, 1
    %v1234 = vsel %vm1233, %v1227, %v1124
    %v1235 = vpack.c.bf16 %v1227, %v1227
    %1236 = vmatprep.subr.bf16.mxu0 %v550
    %1237 = vmatpush1.bf16.msra.mxu0 %v549
    %1238 = vmatprep.subr.bf16.mxu0 %v547
    %1239 = vmatpush1.bf16.msra.mxu0 %v546
    %1240 = vmatprep.subr.bf16.mxu0 %v544
    %1241 = vmatpush1.bf16.msra.mxu0 %v543
    %1242 = vmatprep.subr.bf16.mxu0 %v541
    %1243 = vmatpush1.bf16.msra.mxu0 %v540
    %1244 = vmatprep.subr.bf16.mxu0 %v538
    %1245 = vmatpush1.bf16.msra.mxu0 %v537
    %1246 = vmatprep.subr.bf16.mxu0 %v535
    %1247 = vmatpush1.bf16.msra.mxu0 %v534
    %1248 = vmatprep.subr.bf16.mxu0 %v532
    %1249 = vmatpush1.bf16.msra.mxu0 %v531
    %1250 = vmatprep.subr.bf16.mxu0 %v529
    %1251 = vmatpush1.bf16.msra.mxu0 %v528
    %1252 = vmatprep.subr.bf16.mxu0 0
    %1253 = vmatpush2.bf16.msra.mxu0 0
    %1254 = vmatprep.subr.bf16.mxu0 0
    %1255 = vmatpush2.bf16.msra.mxu0 0
    %1256 = vmatprep.subr.bf16.mxu0 0
    %1257 = vmatpush2.bf16.msra.mxu0 0
    %1258 = vmatprep.subr.bf16.mxu0 0
    %1259 = vmatpush2.bf16.msra.mxu0 0
    %1260 = vmatprep.subr.bf16.mxu0 0
    %1261 = vmatpush2.bf16.msra.mxu0 0
    %1262 = vmatprep.subr.bf16.mxu0 0
    %1263 = vmatpush2.bf16.msra.mxu0 0
    %1264 = vmatprep.subr.bf16.mxu0 0
    %1265 = vmatpush2.bf16.msra.mxu0 0
    %1266 = vmatprep.subr.bf16.mxu0 0
    %1267 = vmatpush2.bf16.msra.mxu0 0
    %1268 = vmatprep.mubr.bf16.mxu0 0
    %1269 = vmatmul.mubr.bf16.gmra.mxu0 %v1235
    %v1270 = vpop.f32.mrf.mxu0
    %v1271 = vadd.f32 %v436, %v1270
    %v1272 = vpop.f32.mrf.mxu0
    %v1273 = vadd.f32 %v440, %v1272
    %v1274 = vpop.f32.mrf.mxu0
    %v1275 = vpop.f32.mrf.mxu0
    %1276 = vdwg.mxu0
    %1277 = vmatprep.subr.bf16.mxu0 0
    %1278 = vmatpush1.bf16.msra.mxu0 %v551
    %1279 = vmatprep.subr.bf16.mxu0 0
    %1280 = vmatpush1.bf16.msra.mxu0 %v548
    %1281 = vmatprep.subr.bf16.mxu0 0
    %1282 = vmatpush1.bf16.msra.mxu0 %v545
    %1283 = vmatprep.subr.bf16.mxu0 0
    %1284 = vmatpush1.bf16.msra.mxu0 %v542
    %1285 = vmatprep.subr.bf16.mxu0 0
    %1286 = vmatpush1.bf16.msra.mxu0 %v539
    %1287 = vmatprep.subr.bf16.mxu0 0
    %1288 = vmatpush1.bf16.msra.mxu0 %v536
    %1289 = vmatprep.subr.bf16.mxu0 0
    %1290 = vmatpush1.bf16.msra.mxu0 %v533
    %1291 = vmatprep.subr.bf16.mxu0 0
    %1292 = vmatpush1.bf16.msra.mxu0 %v530
    %1293 = vmatprep.subr.bf16.mxu0 0
    %1294 = vmatpush2.bf16.msra.mxu0 0
    %1295 = vmatprep.subr.bf16.mxu0 0
    %1296 = vmatpush2.bf16.msra.mxu0 0
    %1297 = vmatprep.subr.bf16.mxu0 0
    %1298 = vmatpush2.bf16.msra.mxu0 0
    %1299 = vmatprep.subr.bf16.mxu0 0
    %1300 = vmatpush2.bf16.msra.mxu0 0
    %1301 = vmatprep.subr.bf16.mxu0 0
    %1302 = vmatpush2.bf16.msra.mxu0 0
    %1303 = vmatprep.subr.bf16.mxu0 0
    %1304 = vmatpush2.bf16.msra.mxu0 0
    %1305 = vmatprep.subr.bf16.mxu0 0
    %1306 = vmatpush2.bf16.msra.mxu0 0
    %1307 = vmatprep.subr.bf16.mxu0 0
    %1308 = vmatpush2.bf16.msra.mxu0 0
    %1309 = vmatprep.mubr.bf16.mxu0 0
    %1310 = vmatmul.mubr.bf16.gmra.mxu0 %v1235
    %v1311 = vpop.f32.mrf.mxu0
    %v1312 = vadd.f32 %v444, %v1311
    %v1313 = vpop.f32.mrf.mxu0
    %v1314 = vpop.f32.mrf.mxu0
    %v1315 = vpop.f32.mrf.mxu0
    %1316 = vdwg.mxu0
    %v1317 = vadd.f32 %v327, %v1271
    %v1318 = vxor.u32 %v1317, 2147483648
    %v1319 = vmul.f32 %v1318, 1.442695
    %v1320 = vpow.pop %v1319
    %v1321 = vadd.f32 %v1320, 1.0
    %v1322 = vrcp.pop %v1321
    %v1323 = vmul.f32 1.0, %v1322
    %v1324 = vadd.f32 %v329, %v1273
    %v1325 = vxor.u32 %v1324, 2147483648
    %v1326 = vmul.f32 %v1325, 1.442695
    %v1327 = vpow.pop %v1326
    %v1328 = vadd.f32 %v1327, 1.0
    %v1329 = vrcp.pop %v1328
    %v1330 = vmul.f32 1.0, %v1329
    %v1331 = vmul.f32 %v1323, %v1312
    %v1332 = vadd.f32 %v394, %v1331
    %v1333 = vtanh.pop %v1332
    %v1334 = vsub.f32 1.0, %v1330
    %v1335 = vmul.f32 %v1334, %v1333
    %v1336 = vmul.f32 %v1330, %v1227
    %v1337 = vadd.f32 %v1335, %v1336
    %vm1338 = vcmp.eq.s32.totalorder %v43, 6
    %v1339 = vsel %vm1338, 1, 0
    %1340 = vset.pattern.permute.xlu0 0
    %1341 = vperm.xlu0 %1340, %v1339
    %v1342 = vpop.permute.xlu0 %1341
    %vm1343 = vcmp.eq.s32.totalorder %v1342, 1
    %v1344 = vsel %vm1343, %v1337, %v1234
    %v1345 = vpack.c.bf16 %v1337, %v1337
    %1346 = vmatprep.subr.bf16.mxu0 %v550
    %1347 = vmatpush1.bf16.msra.mxu0 %v549
    %1348 = vmatprep.subr.bf16.mxu0 %v547
    %1349 = vmatpush1.bf16.msra.mxu0 %v546
    %1350 = vmatprep.subr.bf16.mxu0 %v544
    %1351 = vmatpush1.bf16.msra.mxu0 %v543
    %1352 = vmatprep.subr.bf16.mxu0 %v541
    %1353 = vmatpush1.bf16.msra.mxu0 %v540
    %1354 = vmatprep.subr.bf16.mxu0 %v538
    %1355 = vmatpush1.bf16.msra.mxu0 %v537
    %1356 = vmatprep.subr.bf16.mxu0 %v535
    %1357 = vmatpush1.bf16.msra.mxu0 %v534
    %1358 = vmatprep.subr.bf16.mxu0 %v532
    %1359 = vmatpush1.bf16.msra.mxu0 %v531
    %1360 = vmatprep.subr.bf16.mxu0 %v529
    %1361 = vmatpush1.bf16.msra.mxu0 %v528
    %1362 = vmatprep.subr.bf16.mxu0 0
    %1363 = vmatpush2.bf16.msra.mxu0 0
    %1364 = vmatprep.subr.bf16.mxu0 0
    %1365 = vmatpush2.bf16.msra.mxu0 0
    %1366 = vmatprep.subr.bf16.mxu0 0
    %1367 = vmatpush2.bf16.msra.mxu0 0
    %1368 = vmatprep.subr.bf16.mxu0 0
    %1369 = vmatpush2.bf16.msra.mxu0 0
    %1370 = vmatprep.subr.bf16.mxu0 0
    %1371 = vmatpush2.bf16.msra.mxu0 0
    %1372 = vmatprep.subr.bf16.mxu0 0
    %1373 = vmatpush2.bf16.msra.mxu0 0
    %1374 = vmatprep.subr.bf16.mxu0 0
    %1375 = vmatpush2.bf16.msra.mxu0 0
    %1376 = vmatprep.subr.bf16.mxu0 0
    %1377 = vmatpush2.bf16.msra.mxu0 0
    %1378 = vmatprep.mubr.bf16.mxu0 0
    %1379 = vmatmul.mubr.bf16.gmra.mxu0 %v1345
    %v1380 = vpop.f32.mrf.mxu0
    %v1381 = vadd.f32 %v436, %v1380
    %v1382 = vpop.f32.mrf.mxu0
    %v1383 = vadd.f32 %v440, %v1382
    %v1384 = vpop.f32.mrf.mxu0
    %v1385 = vpop.f32.mrf.mxu0
    %1386 = vdwg.mxu0
    %1387 = vmatprep.subr.bf16.mxu0 0
    %1388 = vmatpush1.bf16.msra.mxu0 %v551
    %1389 = vmatprep.subr.bf16.mxu0 0
    %1390 = vmatpush1.bf16.msra.mxu0 %v548
    %1391 = vmatprep.subr.bf16.mxu0 0
    %1392 = vmatpush1.bf16.msra.mxu0 %v545
    %1393 = vmatprep.subr.bf16.mxu0 0
    %1394 = vmatpush1.bf16.msra.mxu0 %v542
    %1395 = vmatprep.subr.bf16.mxu0 0
    %1396 = vmatpush1.bf16.msra.mxu0 %v539
    %1397 = vmatprep.subr.bf16.mxu0 0
    %1398 = vmatpush1.bf16.msra.mxu0 %v536
    %1399 = vmatprep.subr.bf16.mxu0 0
    %1400 = vmatpush1.bf16.msra.mxu0 %v533
    %1401 = vmatprep.subr.bf16.mxu0 0
    %1402 = vmatpush1.bf16.msra.mxu0 %v530
    %1403 = vmatprep.subr.bf16.mxu0 0
    %1404 = vmatpush2.bf16.msra.mxu0 0
    %1405 = vmatprep.subr.bf16.mxu0 0
    %1406 = vmatpush2.bf16.msra.mxu0 0
    %1407 = vmatprep.subr.bf16.mxu0 0
    %1408 = vmatpush2.bf16.msra.mxu0 0
    %1409 = vmatprep.subr.bf16.mxu0 0
    %1410 = vmatpush2.bf16.msra.mxu0 0
    %1411 = vmatprep.subr.bf16.mxu0 0
    %1412 = vmatpush2.bf16.msra.mxu0 0
    %1413 = vmatprep.subr.bf16.mxu0 0
    %1414 = vmatpush2.bf16.msra.mxu0 0
    %1415 = vmatprep.subr.bf16.mxu0 0
    %1416 = vmatpush2.bf16.msra.mxu0 0
    %1417 = vmatprep.subr.bf16.mxu0 0
    %1418 = vmatpush2.bf16.msra.mxu0 0
    %1419 = vmatprep.mubr.bf16.mxu0 0
    %1420 = vmatmul.mubr.bf16.gmra.mxu0 %v1345
    %v1421 = vpop.f32.mrf.mxu0
    %v1422 = vadd.f32 %v444, %v1421
    %v1423 = vpop.f32.mrf.mxu0
    %v1424 = vpop.f32.mrf.mxu0
    %v1425 = vpop.f32.mrf.mxu0
    %1426 = vdwg.mxu0
    %v1427 = vadd.f32 %v331, %v1381
    %v1428 = vxor.u32 %v1427, 2147483648
    %v1429 = vmul.f32 %v1428, 1.442695
    %v1430 = vpow.pop %v1429
    %v1431 = vadd.f32 %v1430, 1.0
    %v1432 = vrcp.pop %v1431
    %v1433 = vmul.f32 1.0, %v1432
    %v1434 = vadd.f32 %v333, %v1383
    %v1435 = vxor.u32 %v1434, 2147483648
    %v1436 = vmul.f32 %v1435, 1.442695
    %v1437 = vpow.pop %v1436
    %v1438 = vadd.f32 %v1437, 1.0
    %v1439 = vrcp.pop %v1438
    %v1440 = vmul.f32 1.0, %v1439
    %v1441 = vmul.f32 %v1433, %v1422
    %v1442 = vadd.f32 %v397, %v1441
    %v1443 = vtanh.pop %v1442
    %v1444 = vsub.f32 1.0, %v1440
    %v1445 = vmul.f32 %v1444, %v1443
    %v1446 = vmul.f32 %v1440, %v1337
    %v1447 = vadd.f32 %v1445, %v1446
    %vm1448 = vcmp.eq.s32.totalorder %v43, 7
    %v1449 = vsel %vm1448, 1, 0
    %1450 = vset.pattern.permute.xlu0 0
    %1451 = vperm.xlu0 %1450, %v1449
    %v1452 = vpop.permute.xlu0 %1451
    %vm1453 = vcmp.eq.s32.totalorder %v1452, 1
    %v1454 = vsel %vm1453, %v1447, %v1344
    %v1455 = vpack.c.bf16 %v1454, %v1454
    %v1456 = vld [vmem:[#allocation2 + $0x30] sm:$0xf]
    %v1457 = vld [vmem:[#allocation2 + $0x68] sm:$0xf]
    %v1458 = vld [vmem:[#allocation2 + $0xa0] sm:$0xf]
    %v1459 = vld [vmem:[#allocation2 + $0xd8] sm:$0xf]
    %v1460 = vld [vmem:[#allocation2 + $0x110] sm:$0xf]
    %v1461 = vld [vmem:[#allocation2 + $0x148] sm:$0xf]
    %v1462 = vld [vmem:[#allocation2 + $0x180] sm:$0xf]
    %v1463 = vld [vmem:[#allocation2 + $0x1b8] sm:$0xf]
    %v1464 = vld [vmem:[#allocation2 + $0x1f0] sm:$0xf]
    %v1465 = vld [vmem:[#allocation2 + $0x228] sm:$0xf]
    %v1466 = vld [vmem:[#allocation2 + $0x260] sm:$0xf]
    %v1467 = vld [vmem:[#allocation2 + $0x298] sm:$0xf]
    %v1468 = vld [vmem:[#allocation2 + $0x2d0] sm:$0xf]
    %v1469 = vld [vmem:[#allocation2 + $0x308] sm:$0xf]
    %v1470 = vld [vmem:[#allocation2 + $0x340] sm:$0xf]
    %v1471 = vld [vmem:[#allocation2 + $0x378] sm:$0xf]
    %v1473 = vlaneseq
    %v1474 = vshrl.u32 %v1473, 7
    %v1475 = vsub.s32 0, %v1474
    %v1476 = vrot.slane %v46, %v1475
    %v1494 = vunpack.c.l.b16 %v1456
    %v1495 = vunpack.c.l.b16 %v1457
    %v1496 = vunpack.c.l.b16 %v1458
    %v1497 = vunpack.c.l.b16 %v1459
    %v1498 = vunpack.c.l.b16 %v1460
    %v1499 = vunpack.c.l.b16 %v1461
    %v1500 = vunpack.c.l.b16 %v1462
    %v1501 = vunpack.c.l.b16 %v1463
    %v1502 = vunpack.c.l.b16 %v1464
    %v1503 = vunpack.c.l.b16 %v1465
    %v1504 = vunpack.c.l.b16 %v1466
    %v1505 = vunpack.c.l.b16 %v1467
    %v1506 = vunpack.c.l.b16 %v1468
    %v1507 = vunpack.c.l.b16 %v1469
    %v1508 = vunpack.c.l.b16 %v1470
    %v1509 = vunpack.c.l.b16 %v1471
    %v1510 = vpack.c.b16 %v1495, %v1494
    %v1511 = vpack.c.b16 %v1497, %v1496
    %v1512 = vpack.c.b16 %v1499, %v1498
    %v1513 = vpack.c.b16 %v1501, %v1500
    %v1514 = vpack.c.b16 %v1503, %v1502
    %v1515 = vpack.c.b16 %v1505, %v1504
    %v1516 = vpack.c.b16 %v1507, %v1506
    %v1517 = vpack.c.b16 %v1509, %v1508
    %1526 = vmatprep.subr.bf16.mxu0 0
    %1527 = vmatpush1.bf16.msra.mxu0 %v1517
    %1528 = vmatprep.subr.bf16.mxu0 0
    %1529 = vmatpush1.bf16.msra.mxu0 %v1516
    %1530 = vmatprep.subr.bf16.mxu0 0
    %1531 = vmatpush1.bf16.msra.mxu0 %v1515
    %1532 = vmatprep.subr.bf16.mxu0 0
    %1533 = vmatpush1.bf16.msra.mxu0 %v1514
    %1534 = vmatprep.subr.bf16.mxu0 0
    %1535 = vmatpush1.bf16.msra.mxu0 %v1513
    %1536 = vmatprep.subr.bf16.mxu0 0
    %1537 = vmatpush1.bf16.msra.mxu0 %v1512
    %1538 = vmatprep.subr.bf16.mxu0 0
    %1539 = vmatpush1.bf16.msra.mxu0 %v1511
    %1540 = vmatprep.subr.bf16.mxu0 0
    %1541 = vmatpush1.bf16.msra.mxu0 %v1510
    %1542 = vmatprep.subr.bf16.mxu0 0
    %1543 = vmatpush2.bf16.msra.mxu0 0
    %1544 = vmatprep.subr.bf16.mxu0 0
    %1545 = vmatpush2.bf16.msra.mxu0 0
    %1546 = vmatprep.subr.bf16.mxu0 0
    %1547 = vmatpush2.bf16.msra.mxu0 0
    %1548 = vmatprep.subr.bf16.mxu0 0
    %1549 = vmatpush2.bf16.msra.mxu0 0
    %1550 = vmatprep.subr.bf16.mxu0 0
    %1551 = vmatpush2.bf16.msra.mxu0 0
    %1552 = vmatprep.subr.bf16.mxu0 0
    %1553 = vmatpush2.bf16.msra.mxu0 0
    %1554 = vmatprep.subr.bf16.mxu0 0
    %1555 = vmatpush2.bf16.msra.mxu0 0
    %1556 = vmatprep.subr.bf16.mxu0 0
    %1557 = vmatpush2.bf16.msra.mxu0 0
    %1558 = vmatprep.mubr.bf16.mxu0 0
    %1559 = vmatmul.mubr.bf16.gmra.mxu0 %v1455
    %v1560 = vpop.f32.mrf.mxu0
    %v1561 = vadd.f32 %v1476, %v1560
    %v1562 = vpop.f32.mrf.mxu0
    %v1563 = vpop.f32.mrf.mxu0
    %v1564 = vpop.f32.mrf.mxu0
    %1565 = vdwg.mxu0
    %vm1566 = vcmp.eq.s32.totalorder %v49, 1
    %v1567 = vsel %vm1566, 0.0, -20.723267
    %1568 = vst [vmem:[#allocation5] sm:$0xff] %v1567
    %1569 = vset.pattern.permute.xlu0 0
    %1570 = vperm.xlu0 %1569, %v38
    %v1571 = vpop.permute.xlu0 %1570
    %1572 = vset.pattern.permute.xlu0 0
    %1573 = vperm.xlu0 %1572, %v39
    %v1574 = vpop.permute.xlu0 %1573
    %1575 = vset.pattern.permute.xlu0 0
    %1576 = vperm.xlu0 %1575, %v40
    %v1577 = vpop.permute.xlu0 %1576
    %1578 = vset.pattern.permute.xlu0 0
    %1579 = vperm.xlu0 %1578, %v41
    %v1580 = vpop.permute.xlu0 %1579
    %1581 = vset.pattern.permute.xlu0 0
    %1582 = vperm.xlu0 %1581, %v42
    %v1583 = vpop.permute.xlu0 %1582
    %vm1584 = vcmp.eq.s32.totalorder %v49, %v1571
    %vm1585 = vcmp.eq.s32.totalorder %v49, %v1574
    %vm1586 = vcmp.eq.s32.totalorder %v49, %v1577
    %vm1587 = vcmp.eq.s32.totalorder %v49, %v1580
    %vm1588 = vcmp.eq.s32.totalorder %v49, %v1583
    %v1589 = vsel %vm1584, 1, 0
    %v1590 = vsel %vm1585, 1, 0
    %v1591 = vsel %vm1586, 1, 0
    %v1592 = vsel %vm1587, 1, 0
    %v1593 = vsel %vm1588, 1, 0
    %v1594 = vcvt.s32.f32 %v1589
    %v1595 = vcvt.s32.f32 %v1590
    %v1596 = vcvt.s32.f32 %v1591
    %v1597 = vcvt.s32.f32 %v1592
    %v1598 = vcvt.s32.f32 %v1593
    %v1599 = vpack.c.bf16 %v1595, %v1594
    %v1600 = vpack.c.bf16 %v1597, %v1596
    %v1601 = vpack.c.bf16 %v1598, %v1598
    %v1602 = vld [vmem:[#allocation2 + $0xc] sm:$0xff]
    %v1603 = vld [vmem:[#allocation2 + $0x14] sm:$0xf]
    %v1604 = vld [vmem:[#allocation2 + $0x44] sm:$0xff]
    %v1605 = vld [vmem:[#allocation2 + $0x4c] sm:$0xf]
    %v1606 = vld [vmem:[#allocation2 + $0x7c] sm:$0xff]
    %v1607 = vld [vmem:[#allocation2 + $0x84] sm:$0xf]
    %v1608 = vld [vmem:[#allocation2 + $0xb4] sm:$0xff]
    %v1609 = vld [vmem:[#allocation2 + $0xbc] sm:$0xf]
    %v1610 = vld [vmem:[#allocation2 + $0xec] sm:$0xff]
    %v1611 = vld [vmem:[#allocation2 + $0xf4] sm:$0xf]
    %v1612 = vld [vmem:[#allocation2 + $0x124] sm:$0xff]
    %v1613 = vld [vmem:[#allocation2 + $0x12c] sm:$0xf]
    %v1614 = vld [vmem:[#allocation2 + $0x15c] sm:$0xff]
    %v1615 = vld [vmem:[#allocation2 + $0x164] sm:$0xf]
    %v1616 = vld [vmem:[#allocation2 + $0x194] sm:$0xff]
    %v1617 = vld [vmem:[#allocation2 + $0x19c] sm:$0xf]
    %v1618 = vld [vmem:[#allocation2 + $0x1cc] sm:$0xff]
    %v1619 = vld [vmem:[#allocation2 + $0x1d4] sm:$0xf]
    %v1620 = vld [vmem:[#allocation2 + $0x204] sm:$0xff]
    %v1621 = vld [vmem:[#allocation2 + $0x20c] sm:$0xf]
    %v1622 = vld [vmem:[#allocation2 + $0x23c] sm:$0xff]
    %v1623 = vld [vmem:[#allocation2 + $0x244] sm:$0xf]
    %v1624 = vld [vmem:[#allocation2 + $0x274] sm:$0xff]
    %v1625 = vld [vmem:[#allocation2 + $0x27c] sm:$0xf]
    %v1626 = vld [vmem:[#allocation2 + $0x2ac] sm:$0xff]
    %v1627 = vld [vmem:[#allocation2 + $0x2b4] sm:$0xf]
    %v1628 = vld [vmem:[#allocation2 + $0x2e4] sm:$0xff]
    %v1629 = vld [vmem:[#allocation2 + $0x2ec] sm:$0xf]
    %v1630 = vld [vmem:[#allocation2 + $0x31c] sm:$0xff]
    %v1631 = vld [vmem:[#allocation2 + $0x324] sm:$0xf]
    %v1632 = vld [vmem:[#allocation2 + $0x354] sm:$0xff]
    %v1633 = vld [vmem:[#allocation2 + $0x35c] sm:$0xf]
    %v1666 = vunpack.c.l.b16 %v1602
    %v1667 = vunpack.c.h.b16 %v1602
    %v1668 = vunpack.c.l.b16 %v1603
    %v1669 = vunpack.c.l.b16 %v1604
    %v1670 = vunpack.c.h.b16 %v1604
    %v1671 = vunpack.c.l.b16 %v1605
    %v1672 = vunpack.c.l.b16 %v1606
    %v1673 = vunpack.c.h.b16 %v1606
    %v1674 = vunpack.c.l.b16 %v1607
    %v1675 = vunpack.c.l.b16 %v1608
    %v1676 = vunpack.c.h.b16 %v1608
    %v1677 = vunpack.c.l.b16 %v1609
    %v1678 = vunpack.c.l.b16 %v1610
    %v1679 = vunpack.c.h.b16 %v1610
    %v1680 = vunpack.c.l.b16 %v1611
    %v1681 = vunpack.c.l.b16 %v1612
    %v1682 = vunpack.c.h.b16 %v1612
    %v1683 = vunpack.c.l.b16 %v1613
    %v1684 = vunpack.c.l.b16 %v1614
    %v1685 = vunpack.c.h.b16 %v1614
    %v1686 = vunpack.c.l.b16 %v1615
    %v1687 = vunpack.c.l.b16 %v1616
    %v1688 = vunpack.c.h.b16 %v1616
    %v1689 = vunpack.c.l.b16 %v1617
    %v1690 = vunpack.c.l.b16 %v1618
    %v1691 = vunpack.c.h.b16 %v1618
    %v1692 = vunpack.c.l.b16 %v1619
    %v1693 = vunpack.c.l.b16 %v1620
    %v1694 = vunpack.c.h.b16 %v1620
    %v1695 = vunpack.c.l.b16 %v1621
    %v1696 = vunpack.c.l.b16 %v1622
    %v1697 = vunpack.c.h.b16 %v1622
    %v1698 = vunpack.c.l.b16 %v1623
    %v1699 = vunpack.c.l.b16 %v1624
    %v1700 = vunpack.c.h.b16 %v1624
    %v1701 = vunpack.c.l.b16 %v1625
    %v1702 = vunpack.c.l.b16 %v1626
    %v1703 = vunpack.c.h.b16 %v1626
    %v1704 = vunpack.c.l.b16 %v1627
    %v1705 = vunpack.c.l.b16 %v1628
    %v1706 = vunpack.c.h.b16 %v1628
    %v1707 = vunpack.c.l.b16 %v1629
    %v1708 = vunpack.c.l.b16 %v1630
    %v1709 = vunpack.c.h.b16 %v1630
    %v1710 = vunpack.c.l.b16 %v1631
    %v1711 = vunpack.c.l.b16 %v1632
    %v1712 = vunpack.c.h.b16 %v1632
    %v1713 = vunpack.c.l.b16 %v1633
    %v1714 = vpack.c.b16 %v1669, %v1666
    %v1715 = vpack.c.b16 %v1670, %v1667
    %v1716 = vpack.c.b16 %v1671, %v1668
    %v1717 = vpack.c.b16 %v1675, %v1672
    %v1718 = vpack.c.b16 %v1676, %v1673
    %v1719 = vpack.c.b16 %v1677, %v1674
    %v1720 = vpack.c.b16 %v1681, %v1678
    %v1721 = vpack.c.b16 %v1682, %v1679
    %v1722 = vpack.c.b16 %v1683, %v1680
    %v1723 = vpack.c.b16 %v1687, %v1684
    %v1724 = vpack.c.b16 %v1688, %v1685
    %v1725 = vpack.c.b16 %v1689, %v1686
    %v1726 = vpack.c.b16 %v1693, %v1690
    %v1727 = vpack.c.b16 %v1694, %v1691
    %v1728 = vpack.c.b16 %v1695, %v1692
    %v1729 = vpack.c.b16 %v1699, %v1696
    %v1730 = vpack.c.b16 %v1700, %v1697
    %v1731 = vpack.c.b16 %v1701, %v1698
    %v1732 = vpack.c.b16 %v1705, %v1702
    %v1733 = vpack.c.b16 %v1706, %v1703
    %v1734 = vpack.c.b16 %v1707, %v1704
    %v1735 = vpack.c.b16 %v1711, %v1708
    %v1736 = vpack.c.b16 %v1712, %v1709
    %v1737 = vpack.c.b16 %v1713, %v1710
    %1762 = vmatprep.subr.bf16.mxu0 %v1736
    %1763 = vmatpush1.bf16.msra.mxu0 %v1735
    %1764 = vmatprep.subr.bf16.mxu0 %v1733
    %1765 = vmatpush1.bf16.msra.mxu0 %v1732
    %1766 = vmatprep.subr.bf16.mxu0 %v1730
    %1767 = vmatpush1.bf16.msra.mxu0 %v1729
    %1768 = vmatprep.subr.bf16.mxu0 %v1727
    %1769 = vmatpush1.bf16.msra.mxu0 %v1726
    %1770 = vmatprep.subr.bf16.mxu0 %v1724
    %1771 = vmatpush1.bf16.msra.mxu0 %v1723
    %1772 = vmatprep.subr.bf16.mxu0 %v1721
    %1773 = vmatpush1.bf16.msra.mxu0 %v1720
    %1774 = vmatprep.subr.bf16.mxu0 %v1718
    %1775 = vmatpush1.bf16.msra.mxu0 %v1717
    %1776 = vmatprep.subr.bf16.mxu0 %v1715
    %1777 = vmatpush1.bf16.msra.mxu0 %v1714
    %1778 = vmatprep.subr.bf16.mxu0 0
    %1779 = vmatpush2.bf16.msra.mxu0 0
    %1780 = vmatprep.subr.bf16.mxu0 0
    %1781 = vmatpush2.bf16.msra.mxu0 0
    %1782 = vmatprep.subr.bf16.mxu0 0
    %1783 = vmatpush2.bf16.msra.mxu0 0
    %1784 = vmatprep.subr.bf16.mxu0 0
    %1785 = vmatpush2.bf16.msra.mxu0 0
    %1786 = vmatprep.subr.bf16.mxu0 0
    %1787 = vmatpush2.bf16.msra.mxu0 0
    %1788 = vmatprep.subr.bf16.mxu0 0
    %1789 = vmatpush2.bf16.msra.mxu0 0
    %1790 = vmatprep.subr.bf16.mxu0 0
    %1791 = vmatpush2.bf16.msra.mxu0 0
    %1792 = vmatprep.subr.bf16.mxu0 0
    %1793 = vmatpush2.bf16.msra.mxu0 0
    %1794 = vmatprep.mubr.bf16.mxu0 0
    %1795 = vmatmul.mubr.bf16.gmra.mxu0 %v1599
    %v1796 = vpop.f32.mrf.mxu0
    %v1797 = vadd.f32 0.0, %v1796
    %v1798 = vpop.f32.mrf.mxu0
    %v1799 = vadd.f32 0.0, %v1798
    %v1800 = vpop.f32.mrf.mxu0
    %v1801 = vadd.f32 0.0, %v1800
    %v1802 = vpop.f32.mrf.mxu0
    %v1803 = vadd.f32 0.0, %v1802
    %1804 = vmatprep.mubr.bf16.mxu0 0
    %1805 = vmatmul.mubr.bf16.gmra.mxu0 %v1600
    %v1806 = vpop.f32.mrf.mxu0
    %v1807 = vadd.f32 0.0, %v1806
    %v1808 = vpop.f32.mrf.mxu0
    %v1809 = vadd.f32 0.0, %v1808
    %v1810 = vpop.f32.mrf.mxu0
    %v1811 = vadd.f32 0.0, %v1810
    %v1812 = vpop.f32.mrf.mxu0
    %v1813 = vadd.f32 0.0, %v1812
    %1814 = vmatprep.mubr.bf16.mxu0 0
    %1815 = vmatmul.mubr.bf16.gmra.mxu0 %v1601
    %v1816 = vpop.f32.mrf.mxu0
    %v1817 = vadd.f32 0.0, %v1816
    %v1818 = vpop.f32.mrf.mxu0
    %v1819 = vadd.f32 0.0, %v1818
    %v1820 = vpop.f32.mrf.mxu0
    %v1821 = vpop.f32.mrf.mxu0
    %1822 = vdwg.mxu0
    %1823 = vmatprep.subr.bf16.mxu0 0
    %1824 = vmatpush1.bf16.msra.mxu0 %v1737
    %1825 = vmatprep.subr.bf16.mxu0 0
    %1826 = vmatpush1.bf16.msra.mxu0 %v1734
    %1827 = vmatprep.subr.bf16.mxu0 0
    %1828 = vmatpush1.bf16.msra.mxu0 %v1731
    %1829 = vmatprep.subr.bf16.mxu0 0
    %1830 = vmatpush1.bf16.msra.mxu0 %v1728
    %1831 = vmatprep.subr.bf16.mxu0 0
    %1832 = vmatpush1.bf16.msra.mxu0 %v1725
    %1833 = vmatprep.subr.bf16.mxu0 0
    %1834 = vmatpush1.bf16.msra.mxu0 %v1722
    %1835 = vmatprep.subr.bf16.mxu0 0
    %1836 = vmatpush1.bf16.msra.mxu0 %v1719
    %1837 = vmatprep.subr.bf16.mxu0 0
    %1838 = vmatpush1.bf16.msra.mxu0 %v1716
    %1839 = vmatprep.subr.bf16.mxu0 0
    %1840 = vmatpush2.bf16.msra.mxu0 0
    %1841 = vmatprep.subr.bf16.mxu0 0
    %1842 = vmatpush2.bf16.msra.mxu0 0
    %1843 = vmatprep.subr.bf16.mxu0 0
    %1844 = vmatpush2.bf16.msra.mxu0 0
    %1845 = vmatprep.subr.bf16.mxu0 0
    %1846 = vmatpush2.bf16.msra.mxu0 0
    %1847 = vmatprep.subr.bf16.mxu0 0
    %1848 = vmatpush2.bf16.msra.mxu0 0
    %1849 = vmatprep.subr.bf16.mxu0 0
    %1850 = vmatpush2.bf16.msra.mxu0 0
    %1851 = vmatprep.subr.bf16.mxu0 0
    %1852 = vmatpush2.bf16.msra.mxu0 0
    %1853 = vmatprep.subr.bf16.mxu0 0
    %1854 = vmatpush2.bf16.msra.mxu0 0
    %1855 = vmatprep.mubr.bf16.mxu0 0
    %1856 = vmatmul.mubr.bf16.gmra.mxu0 %v1599
    %v1857 = vpop.f32.mrf.mxu0
    %v1858 = vadd.f32 0.0, %v1857
    %v1859 = vpop.f32.mrf.mxu0
    %v1860 = vpop.f32.mrf.mxu0
    %v1861 = vadd.f32 0.0, %v1860
    %v1862 = vpop.f32.mrf.mxu0
    %1863 = vmatprep.mubr.bf16.mxu0 0
    %1864 = vmatmul.mubr.bf16.gmra.mxu0 %v1600
    %v1865 = vpop.f32.mrf.mxu0
    %v1866 = vadd.f32 0.0, %v1865
    %v1867 = vpop.f32.mrf.mxu0
    %v1868 = vpop.f32.mrf.mxu0
    %v1869 = vadd.f32 0.0, %v1868
    %v1870 = vpop.f32.mrf.mxu0
    %1871 = vmatprep.mubr.bf16.mxu0 0
    %1872 = vmatmul.mubr.bf16.gmra.mxu0 %v1601
    %v1873 = vpop.f32.mrf.mxu0
    %v1874 = vadd.f32 0.0, %v1873
    %v1875 = vpop.f32.mrf.mxu0
    %v1876 = vpop.f32.mrf.mxu0
    %v1877 = vpop.f32.mrf.mxu0
    %1878 = vdwg.mxu0
    %v1879 = vld [vmem:[#allocation2 + $0x24] sm:$0xff]
    %v1880 = vld [vmem:[#allocation2 + $0x2c] sm:$0xf]
    %v1881 = vld [vmem:[#allocation2 + $0x5c] sm:$0xff]
    %v1882 = vld [vmem:[#allocation2 + $0x64] sm:$0xf]
    %v1883 = vld [vmem:[#allocation2 + $0x94] sm:$0xff]
    %v1884 = vld [vmem:[#allocation2 + $0x9c] sm:$0xf]
    %v1885 = vld [vmem:[#allocation2 + $0xcc] sm:$0xff]
    %v1886 = vld [vmem:[#allocation2 + $0xd4] sm:$0xf]
    %v1887 = vld [vmem:[#allocation2 + $0x104] sm:$0xff]
    %v1888 = vld [vmem:[#allocation2 + $0x10c] sm:$0xf]
    %v1889 = vld [vmem:[#allocation2 + $0x13c] sm:$0xff]
    %v1890 = vld [vmem:[#allocation2 + $0x144] sm:$0xf]
    %v1891 = vld [vmem:[#allocation2 + $0x174] sm:$0xff]
    %v1892 = vld [vmem:[#allocation2 + $0x17c] sm:$0xf]
    %v1893 = vld [vmem:[#allocation2 + $0x1ac] sm:$0xff]
    %v1894 = vld [vmem:[#allocation2 + $0x1b4] sm:$0xf]
    %v1895 = vld [vmem:[#allocation2 + $0x1e4] sm:$0xff]
    %v1896 = vld [vmem:[#allocation2 + $0x1ec] sm:$0xf]
    %v1897 = vld [vmem:[#allocation2 + $0x21c] sm:$0xff]
    %v1898 = vld [vmem:[#allocation2 + $0x224] sm:$0xf]
    %v1899 = vld [vmem:[#allocation2 + $0x254] sm:$0xff]
    %v1900 = vld [vmem:[#allocation2 + $0x25c] sm:$0xf]
    %v1901 = vld [vmem:[#allocation2 + $0x28c] sm:$0xff]
    %v1902 = vld [vmem:[#allocation2 + $0x294] sm:$0xf]
    %v1903 = vld [vmem:[#allocation2 + $0x2c4] sm:$0xff]
    %v1904 = vld [vmem:[#allocation2 + $0x2cc] sm:$0xf]
    %v1905 = vld [vmem:[#allocation2 + $0x2fc] sm:$0xff]
    %v1906 = vld [vmem:[#allocation2 + $0x304] sm:$0xf]
    %v1907 = vld [vmem:[#allocation2 + $0x334] sm:$0xff]
    %v1908 = vld [vmem:[#allocation2 + $0x33c] sm:$0xf]
    %v1909 = vld [vmem:[#allocation2 + $0x36c] sm:$0xff]
    %v1910 = vld [vmem:[#allocation2 + $0x374] sm:$0xf]
    %v1911 = vpack.c.bf16 %v1561, %v1561
    %v1913 = vlaneseq
    %v1914 = vshrl.u32 %v1913, 7
    %v1915 = vsub.s32 0, %v1914
    %v1916 = vrot.slane %v45, %v1915
    %v1917 = vlaneseq
    %v1918 = vshrl.u32 %v1917, 7
    %v1919 = vsub.s32 1, %v1918
    %v1920 = vrot.slane %v45, %v1919
    %v1921 = vlaneseq
    %v1922 = vshrl.u32 %v1921, 7
    %v1923 = vsub.s32 2, %v1922
    %v1924 = vrot.slane %v45, %v1923
    %v1960 = vunpack.c.l.b16 %v1879
    %v1961 = vunpack.c.h.b16 %v1879
    %v1962 = vunpack.c.l.b16 %v1880
    %v1963 = vunpack.c.l.b16 %v1881
    %v1964 = vunpack.c.h.b16 %v1881
    %v1965 = vunpack.c.l.b16 %v1882
    %v1966 = vunpack.c.l.b16 %v1883
    %v1967 = vunpack.c.h.b16 %v1883
    %v1968 = vunpack.c.l.b16 %v1884
    %v1969 = vunpack.c.l.b16 %v1885
    %v1970 = vunpack.c.h.b16 %v1885
    %v1971 = vunpack.c.l.b16 %v1886
    %v1972 = vunpack.c.l.b16 %v1887
    %v1973 = vunpack.c.h.b16 %v1887
    %v1974 = vunpack.c.l.b16 %v1888
    %v1975 = vunpack.c.l.b16 %v1889
    %v1976 = vunpack.c.h.b16 %v1889
    %v1977 = vunpack.c.l.b16 %v1890
    %v1978 = vunpack.c.l.b16 %v1891
    %v1979 = vunpack.c.h.b16 %v1891
    %v1980 = vunpack.c.l.b16 %v1892
    %v1981 = vunpack.c.l.b16 %v1893
    %v1982 = vunpack.c.h.b16 %v1893
    %v1983 = vunpack.c.l.b16 %v1894
    %v1984 = vunpack.c.l.b16 %v1895
    %v1985 = vunpack.c.h.b16 %v1895
    %v1986 = vunpack.c.l.b16 %v1896
    %v1987 = vunpack.c.l.b16 %v1897
    %v1988 = vunpack.c.h.b16 %v1897
    %v1989 = vunpack.c.l.b16 %v1898
    %v1990 = vunpack.c.l.b16 %v1899
    %v1991 = vunpack.c.h.b16 %v1899
    %v1992 = vunpack.c.l.b16 %v1900
    %v1993 = vunpack.c.l.b16 %v1901
    %v1994 = vunpack.c.h.b16 %v1901
    %v1995 = vunpack.c.l.b16 %v1902
    %v1996 = vunpack.c.l.b16 %v1903
    %v1997 = vunpack.c.h.b16 %v1903
    %v1998 = vunpack.c.l.b16 %v1904
    %v1999 = vunpack.c.l.b16 %v1905
    %v2000 = vunpack.c.h.b16 %v1905
    %v2001 = vunpack.c.l.b16 %v1906
    %v2002 = vunpack.c.l.b16 %v1907
    %v2003 = vunpack.c.h.b16 %v1907
    %v2004 = vunpack.c.l.b16 %v1908
    %v2005 = vunpack.c.l.b16 %v1909
    %v2006 = vunpack.c.h.b16 %v1909
    %v2007 = vunpack.c.l.b16 %v1910
    %v2008 = vpack.c.b16 %v1963, %v1960
    %v2009 = vpack.c.b16 %v1964, %v1961
    %v2010 = vpack.c.b16 %v1965, %v1962
    %v2011 = vpack.c.b16 %v1969, %v1966
    %v2012 = vpack.c.b16 %v1970, %v1967
    %v2013 = vpack.c.b16 %v1971, %v1968
    %v2014 = vpack.c.b16 %v1975, %v1972
    %v2015 = vpack.c.b16 %v1976, %v1973
    %v2016 = vpack.c.b16 %v1977, %v1974
    %v2017 = vpack.c.b16 %v1981, %v1978
    %v2018 = vpack.c.b16 %v1982, %v1979
    %v2019 = vpack.c.b16 %v1983, %v1980
    %v2020 = vpack.c.b16 %v1987, %v1984
    %v2021 = vpack.c.b16 %v1988, %v1985
    %v2022 = vpack.c.b16 %v1989, %v1986
    %v2023 = vpack.c.b16 %v1993, %v1990
    %v2024 = vpack.c.b16 %v1994, %v1991
    %v2025 = vpack.c.b16 %v1995, %v1992
    %v2026 = vpack.c.b16 %v1999, %v1996
    %v2027 = vpack.c.b16 %v2000, %v1997
    %v2028 = vpack.c.b16 %v2001, %v1998
    %v2029 = vpack.c.b16 %v2005, %v2002
    %v2030 = vpack.c.b16 %v2006, %v2003
    %v2031 = vpack.c.b16 %v2007, %v2004
    %2056 = vmatprep.subr.bf16.mxu0 %v2030
    %2057 = vmatpush1.bf16.msra.mxu0 %v2029
    %2058 = vmatprep.subr.bf16.mxu0 %v2027
    %2059 = vmatpush1.bf16.msra.mxu0 %v2026
    %2060 = vmatprep.subr.bf16.mxu0 %v2024
    %2061 = vmatpush1.bf16.msra.mxu0 %v2023
    %2062 = vmatprep.subr.bf16.mxu0 %v2021
    %2063 = vmatpush1.bf16.msra.mxu0 %v2020
    %2064 = vmatprep.subr.bf16.mxu0 %v2018
    %2065 = vmatpush1.bf16.msra.mxu0 %v2017
    %2066 = vmatprep.subr.bf16.mxu0 %v2015
    %2067 = vmatpush1.bf16.msra.mxu0 %v2014
    %2068 = vmatprep.subr.bf16.mxu0 %v2012
    %2069 = vmatpush1.bf16.msra.mxu0 %v2011
    %2070 = vmatprep.subr.bf16.mxu0 %v2009
    %2071 = vmatpush1.bf16.msra.mxu0 %v2008
    %2072 = vmatprep.subr.bf16.mxu0 0
    %2073 = vmatpush2.bf16.msra.mxu0 0
    %2074 = vmatprep.subr.bf16.mxu0 0
    %2075 = vmatpush2.bf16.msra.mxu0 0
    %2076 = vmatprep.subr.bf16.mxu0 0
    %2077 = vmatpush2.bf16.msra.mxu0 0
    %2078 = vmatprep.subr.bf16.mxu0 0
    %2079 = vmatpush2.bf16.msra.mxu0 0
    %2080 = vmatprep.subr.bf16.mxu0 0
    %2081 = vmatpush2.bf16.msra.mxu0 0
    %2082 = vmatprep.subr.bf16.mxu0 0
    %2083 = vmatpush2.bf16.msra.mxu0 0
    %2084 = vmatprep.subr.bf16.mxu0 0
    %2085 = vmatpush2.bf16.msra.mxu0 0
    %2086 = vmatprep.subr.bf16.mxu0 0
    %2087 = vmatpush2.bf16.msra.mxu0 0
    %2088 = vmatprep.mubr.bf16.mxu0 0
    %2089 = vmatmul.mubr.bf16.gmra.mxu0 %v1911
    %v2090 = vpop.f32.mrf.mxu0
    %v2091 = vadd.f32 %v1916, %v2090
    %v2092 = vpop.f32.mrf.mxu0
    %v2093 = vadd.f32 %v1920, %v2092
    %v2094 = vpop.f32.mrf.mxu0
    %v2095 = vpop.f32.mrf.mxu0
    %2096 = vdwg.mxu0
    %2097 = vmatprep.subr.bf16.mxu0 0
    %2098 = vmatpush1.bf16.msra.mxu0 %v2031
    %2099 = vmatprep.subr.bf16.mxu0 0
    %2100 = vmatpush1.bf16.msra.mxu0 %v2028
    %2101 = vmatprep.subr.bf16.mxu0 0
    %2102 = vmatpush1.bf16.msra.mxu0 %v2025
    %2103 = vmatprep.subr.bf16.mxu0 0
    %2104 = vmatpush1.bf16.msra.mxu0 %v2022
    %2105 = vmatprep.subr.bf16.mxu0 0
    %2106 = vmatpush1.bf16.msra.mxu0 %v2019
    %2107 = vmatprep.subr.bf16.mxu0 0
    %2108 = vmatpush1.bf16.msra.mxu0 %v2016
    %2109 = vmatprep.subr.bf16.mxu0 0
    %2110 = vmatpush1.bf16.msra.mxu0 %v2013
    %2111 = vmatprep.subr.bf16.mxu0 0
    %2112 = vmatpush1.bf16.msra.mxu0 %v2010
    %2113 = vmatprep.subr.bf16.mxu0 0
    %2114 = vmatpush2.bf16.msra.mxu0 0
    %2115 = vmatprep.subr.bf16.mxu0 0
    %2116 = vmatpush2.bf16.msra.mxu0 0
    %2117 = vmatprep.subr.bf16.mxu0 0
    %2118 = vmatpush2.bf16.msra.mxu0 0
    %2119 = vmatprep.subr.bf16.mxu0 0
    %2120 = vmatpush2.bf16.msra.mxu0 0
    %2121 = vmatprep.subr.bf16.mxu0 0
    %2122 = vmatpush2.bf16.msra.mxu0 0
    %2123 = vmatprep.subr.bf16.mxu0 0
    %2124 = vmatpush2.bf16.msra.mxu0 0
    %2125 = vmatprep.subr.bf16.mxu0 0
    %2126 = vmatpush2.bf16.msra.mxu0 0
    %2127 = vmatprep.subr.bf16.mxu0 0
    %2128 = vmatpush2.bf16.msra.mxu0 0
    %2129 = vmatprep.mubr.bf16.mxu0 0
    %2130 = vmatmul.mubr.bf16.gmra.mxu0 %v1911
    %v2131 = vpop.f32.mrf.mxu0
    %v2132 = vadd.f32 %v1924, %v2131
    %v2133 = vpop.f32.mrf.mxu0
    %v2134 = vpop.f32.mrf.mxu0
    %v2135 = vpop.f32.mrf.mxu0
    %2136 = vdwg.mxu0
    %v2137 = vadd.f32 %v1797, %v2091
    %v2138 = vxor.u32 %v2137, 2147483648
    %v2139 = vmul.f32 %v2138, 1.442695
    %v2140 = vpow.pop %v2139
    %v2141 = vadd.f32 %v2140, 1.0
    %v2142 = vrcp.pop %v2141
    %v2143 = vmul.f32 1.0, %v2142
    %v2144 = vadd.f32 %v1799, %v2093
    %v2145 = vxor.u32 %v2144, 2147483648
    %v2146 = vmul.f32 %v2145, 1.442695
    %v2147 = vpow.pop %v2146
    %v2148 = vadd.f32 %v2147, 1.0
    %v2149 = vrcp.pop %v2148
    %v2150 = vmul.f32 1.0, %v2149
    %v2151 = vmul.f32 %v2143, %v2132
    %v2152 = vadd.f32 %v1858, %v2151
    %v2153 = vtanh.pop %v2152
    %v2154 = vsub.f32 1.0, %v2150
    %v2155 = vmul.f32 %v2154, %v2153
    %v2156 = vmul.f32 %v2150, %v1561
    %v2157 = vadd.f32 %v2155, %v2156
    %v2158 = vpack.c.bf16 %v2157, %v2157
    %2159 = vmatprep.subr.bf16.mxu0 %v2030
    %2160 = vmatpush1.bf16.msra.mxu0 %v2029
    %2161 = vmatprep.subr.bf16.mxu0 %v2027
    %2162 = vmatpush1.bf16.msra.mxu0 %v2026
    %2163 = vmatprep.subr.bf16.mxu0 %v2024
    %2164 = vmatpush1.bf16.msra.mxu0 %v2023
    %2165 = vmatprep.subr.bf16.mxu0 %v2021
    %2166 = vmatpush1.bf16.msra.mxu0 %v2020
    %2167 = vmatprep.subr.bf16.mxu0 %v2018
    %2168 = vmatpush1.bf16.msra.mxu0 %v2017
    %2169 = vmatprep.subr.bf16.mxu0 %v2015
    %2170 = vmatpush1.bf16.msra.mxu0 %v2014
    %2171 = vmatprep.subr.bf16.mxu0 %v2012
    %2172 = vmatpush1.bf16.msra.mxu0 %v2011
    %2173 = vmatprep.subr.bf16.mxu0 %v2009
    %2174 = vmatpush1.bf16.msra.mxu0 %v2008
    %2175 = vmatprep.subr.bf16.mxu0 0
    %2176 = vmatpush2.bf16.msra.mxu0 0
    %2177 = vmatprep.subr.bf16.mxu0 0
    %2178 = vmatpush2.bf16.msra.mxu0 0
    %2179 = vmatprep.subr.bf16.mxu0 0
    %2180 = vmatpush2.bf16.msra.mxu0 0
    %2181 = vmatprep.subr.bf16.mxu0 0
    %2182 = vmatpush2.bf16.msra.mxu0 0
    %2183 = vmatprep.subr.bf16.mxu0 0
    %2184 = vmatpush2.bf16.msra.mxu0 0
    %2185 = vmatprep.subr.bf16.mxu0 0
    %2186 = vmatpush2.bf16.msra.mxu0 0
    %2187 = vmatprep.subr.bf16.mxu0 0
    %2188 = vmatpush2.bf16.msra.mxu0 0
    %2189 = vmatprep.subr.bf16.mxu0 0
    %2190 = vmatpush2.bf16.msra.mxu0 0
    %2191 = vmatprep.mubr.bf16.mxu0 0
    %2192 = vmatmul.mubr.bf16.gmra.mxu0 %v2158
    %v2193 = vpop.f32.mrf.mxu0
    %v2194 = vadd.f32 %v1916, %v2193
    %v2195 = vpop.f32.mrf.mxu0
    %v2196 = vadd.f32 %v1920, %v2195
    %v2197 = vpop.f32.mrf.mxu0
    %v2198 = vpop.f32.mrf.mxu0
    %2199 = vdwg.mxu0
    %2200 = vmatprep.subr.bf16.mxu0 0
    %2201 = vmatpush1.bf16.msra.mxu0 %v2031
    %2202 = vmatprep.subr.bf16.mxu0 0
    %2203 = vmatpush1.bf16.msra.mxu0 %v2028
    %2204 = vmatprep.subr.bf16.mxu0 0
    %2205 = vmatpush1.bf16.msra.mxu0 %v2025
    %2206 = vmatprep.subr.bf16.mxu0 0
    %2207 = vmatpush1.bf16.msra.mxu0 %v2022
    %2208 = vmatprep.subr.bf16.mxu0 0
    %2209 = vmatpush1.bf16.msra.mxu0 %v2019
    %2210 = vmatprep.subr.bf16.mxu0 0
    %2211 = vmatpush1.bf16.msra.mxu0 %v2016
    %2212 = vmatprep.subr.bf16.mxu0 0
    %2213 = vmatpush1.bf16.msra.mxu0 %v2013
    %2214 = vmatprep.subr.bf16.mxu0 0
    %2215 = vmatpush1.bf16.msra.mxu0 %v2010
    %2216 = vmatprep.subr.bf16.mxu0 0
    %2217 = vmatpush2.bf16.msra.mxu0 0
    %2218 = vmatprep.subr.bf16.mxu0 0
    %2219 = vmatpush2.bf16.msra.mxu0 0
    %2220 = vmatprep.subr.bf16.mxu0 0
    %2221 = vmatpush2.bf16.msra.mxu0 0
    %2222 = vmatprep.subr.bf16.mxu0 0
    %2223 = vmatpush2.bf16.msra.mxu0 0
    %2224 = vmatprep.subr.bf16.mxu0 0
    %2225 = vmatpush2.bf16.msra.mxu0 0
    %2226 = vmatprep.subr.bf16.mxu0 0
    %2227 = vmatpush2.bf16.msra.mxu0 0
    %2228 = vmatprep.subr.bf16.mxu0 0
    %2229 = vmatpush2.bf16.msra.mxu0 0
    %2230 = vmatprep.subr.bf16.mxu0 0
    %2231 = vmatpush2.bf16.msra.mxu0 0
    %2232 = vmatprep.mubr.bf16.mxu0 0
    %2233 = vmatmul.mubr.bf16.gmra.mxu0 %v2158
    %v2234 = vpop.f32.mrf.mxu0
    %v2235 = vadd.f32 %v1924, %v2234
    %v2236 = vpop.f32.mrf.mxu0
    %v2237 = vpop.f32.mrf.mxu0
    %v2238 = vpop.f32.mrf.mxu0
    %2239 = vdwg.mxu0
    %v2240 = vadd.f32 %v1801, %v2194
    %v2241 = vxor.u32 %v2240, 2147483648
    %v2242 = vmul.f32 %v2241, 1.442695
    %v2243 = vpow.pop %v2242
    %v2244 = vadd.f32 %v2243, 1.0
    %v2245 = vrcp.pop %v2244
    %v2246 = vmul.f32 1.0, %v2245
    %v2247 = vadd.f32 %v1803, %v2196
    %v2248 = vxor.u32 %v2247, 2147483648
    %v2249 = vmul.f32 %v2248, 1.442695
    %v2250 = vpow.pop %v2249
    %v2251 = vadd.f32 %v2250, 1.0
    %v2252 = vrcp.pop %v2251
    %v2253 = vmul.f32 1.0, %v2252
    %v2254 = vmul.f32 %v2246, %v2235
    %v2255 = vadd.f32 %v1861, %v2254
    %v2256 = vtanh.pop %v2255
    %v2257 = vsub.f32 1.0, %v2253
    %v2258 = vmul.f32 %v2257, %v2256
    %v2259 = vmul.f32 %v2253, %v2157
    %v2260 = vadd.f32 %v2258, %v2259
    %v2261 = vpack.c.bf16 %v2260, %v2260
    %2262 = vmatprep.subr.bf16.mxu0 %v2030
    %2263 = vmatpush1.bf16.msra.mxu0 %v2029
    %2264 = vmatprep.subr.bf16.mxu0 %v2027
    %2265 = vmatpush1.bf16.msra.mxu0 %v2026
    %2266 = vmatprep.subr.bf16.mxu0 %v2024
    %2267 = vmatpush1.bf16.msra.mxu0 %v2023
    %2268 = vmatprep.subr.bf16.mxu0 %v2021
    %2269 = vmatpush1.bf16.msra.mxu0 %v2020
    %2270 = vmatprep.subr.bf16.mxu0 %v2018
    %2271 = vmatpush1.bf16.msra.mxu0 %v2017
    %2272 = vmatprep.subr.bf16.mxu0 %v2015
    %2273 = vmatpush1.bf16.msra.mxu0 %v2014
    %2274 = vmatprep.subr.bf16.mxu0 %v2012
    %2275 = vmatpush1.bf16.msra.mxu0 %v2011
    %2276 = vmatprep.subr.bf16.mxu0 %v2009
    %2277 = vmatpush1.bf16.msra.mxu0 %v2008
    %2278 = vmatprep.subr.bf16.mxu0 0
    %2279 = vmatpush2.bf16.msra.mxu0 0
    %2280 = vmatprep.subr.bf16.mxu0 0
    %2281 = vmatpush2.bf16.msra.mxu0 0
    %2282 = vmatprep.subr.bf16.mxu0 0
    %2283 = vmatpush2.bf16.msra.mxu0 0
    %2284 = vmatprep.subr.bf16.mxu0 0
    %2285 = vmatpush2.bf16.msra.mxu0 0
    %2286 = vmatprep.subr.bf16.mxu0 0
    %2287 = vmatpush2.bf16.msra.mxu0 0
    %2288 = vmatprep.subr.bf16.mxu0 0
    %2289 = vmatpush2.bf16.msra.mxu0 0
    %2290 = vmatprep.subr.bf16.mxu0 0
    %2291 = vmatpush2.bf16.msra.mxu0 0
    %2292 = vmatprep.subr.bf16.mxu0 0
    %2293 = vmatpush2.bf16.msra.mxu0 0
    %2294 = vmatprep.mubr.bf16.mxu0 0
    %2295 = vmatmul.mubr.bf16.gmra.mxu0 %v2261
    %v2296 = vpop.f32.mrf.mxu0
    %v2297 = vadd.f32 %v1916, %v2296
    %v2298 = vpop.f32.mrf.mxu0
    %v2299 = vadd.f32 %v1920, %v2298
    %v2300 = vpop.f32.mrf.mxu0
    %v2301 = vpop.f32.mrf.mxu0
    %2302 = vdwg.mxu0
    %2303 = vmatprep.subr.bf16.mxu0 0
    %2304 = vmatpush1.bf16.msra.mxu0 %v2031
    %2305 = vmatprep.subr.bf16.mxu0 0
    %2306 = vmatpush1.bf16.msra.mxu0 %v2028
    %2307 = vmatprep.subr.bf16.mxu0 0
    %2308 = vmatpush1.bf16.msra.mxu0 %v2025
    %2309 = vmatprep.subr.bf16.mxu0 0
    %2310 = vmatpush1.bf16.msra.mxu0 %v2022
    %2311 = vmatprep.subr.bf16.mxu0 0
    %2312 = vmatpush1.bf16.msra.mxu0 %v2019
    %2313 = vmatprep.subr.bf16.mxu0 0
    %2314 = vmatpush1.bf16.msra.mxu0 %v2016
    %2315 = vmatprep.subr.bf16.mxu0 0
    %2316 = vmatpush1.bf16.msra.mxu0 %v2013
    %2317 = vmatprep.subr.bf16.mxu0 0
    %2318 = vmatpush1.bf16.msra.mxu0 %v2010
    %2319 = vmatprep.subr.bf16.mxu0 0
    %2320 = vmatpush2.bf16.msra.mxu0 0
    %2321 = vmatprep.subr.bf16.mxu0 0
    %2322 = vmatpush2.bf16.msra.mxu0 0
    %2323 = vmatprep.subr.bf16.mxu0 0
    %2324 = vmatpush2.bf16.msra.mxu0 0
    %2325 = vmatprep.subr.bf16.mxu0 0
    %2326 = vmatpush2.bf16.msra.mxu0 0
    %2327 = vmatprep.subr.bf16.mxu0 0
    %2328 = vmatpush2.bf16.msra.mxu0 0
    %2329 = vmatprep.subr.bf16.mxu0 0
    %2330 = vmatpush2.bf16.msra.mxu0 0
    %2331 = vmatprep.subr.bf16.mxu0 0
    %2332 = vmatpush2.bf16.msra.mxu0 0
    %2333 = vmatprep.subr.bf16.mxu0 0
    %2334 = vmatpush2.bf16.msra.mxu0 0
    %2335 = vmatprep.mubr.bf16.mxu0 0
    %2336 = vmatmul.mubr.bf16.gmra.mxu0 %v2261
    %v2337 = vpop.f32.mrf.mxu0
    %v2338 = vadd.f32 %v1924, %v2337
    %v2339 = vpop.f32.mrf.mxu0
    %v2340 = vpop.f32.mrf.mxu0
    %v2341 = vpop.f32.mrf.mxu0
    %2342 = vdwg.mxu0
    %v2343 = vadd.f32 %v1807, %v2297
    %v2344 = vxor.u32 %v2343, 2147483648
    %v2345 = vmul.f32 %v2344, 1.442695
    %v2346 = vpow.pop %v2345
    %v2347 = vadd.f32 %v2346, 1.0
    %v2348 = vrcp.pop %v2347
    %v2349 = vmul.f32 1.0, %v2348
    %v2350 = vadd.f32 %v1809, %v2299
    %v2351 = vxor.u32 %v2350, 2147483648
    %v2352 = vmul.f32 %v2351, 1.442695
    %v2353 = vpow.pop %v2352
    %v2354 = vadd.f32 %v2353, 1.0
    %v2355 = vrcp.pop %v2354
    %v2356 = vmul.f32 1.0, %v2355
    %v2357 = vmul.f32 %v2349, %v2338
    %v2358 = vadd.f32 %v1866, %v2357
    %v2359 = vtanh.pop %v2358
    %v2360 = vsub.f32 1.0, %v2356
    %v2361 = vmul.f32 %v2360, %v2359
    %v2362 = vmul.f32 %v2356, %v2260
    %v2363 = vadd.f32 %v2361, %v2362
    %v2364 = vpack.c.bf16 %v2363, %v2363
    %2365 = vmatprep.subr.bf16.mxu0 %v2030
    %2366 = vmatpush1.bf16.msra.mxu0 %v2029
    %2367 = vmatprep.subr.bf16.mxu0 %v2027
    %2368 = vmatpush1.bf16.msra.mxu0 %v2026
    %2369 = vmatprep.subr.bf16.mxu0 %v2024
    %2370 = vmatpush1.bf16.msra.mxu0 %v2023
    %2371 = vmatprep.subr.bf16.mxu0 %v2021
    %2372 = vmatpush1.bf16.msra.mxu0 %v2020
    %2373 = vmatprep.subr.bf16.mxu0 %v2018
    %2374 = vmatpush1.bf16.msra.mxu0 %v2017
    %2375 = vmatprep.subr.bf16.mxu0 %v2015
    %2376 = vmatpush1.bf16.msra.mxu0 %v2014
    %2377 = vmatprep.subr.bf16.mxu0 %v2012
    %2378 = vmatpush1.bf16.msra.mxu0 %v2011
    %2379 = vmatprep.subr.bf16.mxu0 %v2009
    %2380 = vmatpush1.bf16.msra.mxu0 %v2008
    %2381 = vmatprep.subr.bf16.mxu0 0
    %2382 = vmatpush2.bf16.msra.mxu0 0
    %2383 = vmatprep.subr.bf16.mxu0 0
    %2384 = vmatpush2.bf16.msra.mxu0 0
    %2385 = vmatprep.subr.bf16.mxu0 0
    %2386 = vmatpush2.bf16.msra.mxu0 0
    %2387 = vmatprep.subr.bf16.mxu0 0
    %2388 = vmatpush2.bf16.msra.mxu0 0
    %2389 = vmatprep.subr.bf16.mxu0 0
    %2390 = vmatpush2.bf16.msra.mxu0 0
    %2391 = vmatprep.subr.bf16.mxu0 0
    %2392 = vmatpush2.bf16.msra.mxu0 0
    %2393 = vmatprep.subr.bf16.mxu0 0
    %2394 = vmatpush2.bf16.msra.mxu0 0
    %2395 = vmatprep.subr.bf16.mxu0 0
    %2396 = vmatpush2.bf16.msra.mxu0 0
    %2397 = vmatprep.mubr.bf16.mxu0 0
    %2398 = vmatmul.mubr.bf16.gmra.mxu0 %v2364
    %v2399 = vpop.f32.mrf.mxu0
    %v2400 = vadd.f32 %v1916, %v2399
    %v2401 = vpop.f32.mrf.mxu0
    %v2402 = vadd.f32 %v1920, %v2401
    %v2403 = vpop.f32.mrf.mxu0
    %v2404 = vpop.f32.mrf.mxu0
    %2405 = vdwg.mxu0
    %2406 = vmatprep.subr.bf16.mxu0 0
    %2407 = vmatpush1.bf16.msra.mxu0 %v2031
    %2408 = vmatprep.subr.bf16.mxu0 0
    %2409 = vmatpush1.bf16.msra.mxu0 %v2028
    %2410 = vmatprep.subr.bf16.mxu0 0
    %2411 = vmatpush1.bf16.msra.mxu0 %v2025
    %2412 = vmatprep.subr.bf16.mxu0 0
    %2413 = vmatpush1.bf16.msra.mxu0 %v2022
    %2414 = vmatprep.subr.bf16.mxu0 0
    %2415 = vmatpush1.bf16.msra.mxu0 %v2019
    %2416 = vmatprep.subr.bf16.mxu0 0
    %2417 = vmatpush1.bf16.msra.mxu0 %v2016
    %2418 = vmatprep.subr.bf16.mxu0 0
    %2419 = vmatpush1.bf16.msra.mxu0 %v2013
    %2420 = vmatprep.subr.bf16.mxu0 0
    %2421 = vmatpush1.bf16.msra.mxu0 %v2010
    %2422 = vmatprep.subr.bf16.mxu0 0
    %2423 = vmatpush2.bf16.msra.mxu0 0
    %2424 = vmatprep.subr.bf16.mxu0 0
    %2425 = vmatpush2.bf16.msra.mxu0 0
    %2426 = vmatprep.subr.bf16.mxu0 0
    %2427 = vmatpush2.bf16.msra.mxu0 0
    %2428 = vmatprep.subr.bf16.mxu0 0
    %2429 = vmatpush2.bf16.msra.mxu0 0
    %2430 = vmatprep.subr.bf16.mxu0 0
    %2431 = vmatpush2.bf16.msra.mxu0 0
    %2432 = vmatprep.subr.bf16.mxu0 0
    %2433 = vmatpush2.bf16.msra.mxu0 0
    %2434 = vmatprep.subr.bf16.mxu0 0
    %2435 = vmatpush2.bf16.msra.mxu0 0
    %2436 = vmatprep.subr.bf16.mxu0 0
    %2437 = vmatpush2.bf16.msra.mxu0 0
    %2438 = vmatprep.mubr.bf16.mxu0 0
    %2439 = vmatmul.mubr.bf16.gmra.mxu0 %v2364
    %v2440 = vpop.f32.mrf.mxu0
    %v2441 = vadd.f32 %v1924, %v2440
    %v2442 = vpop.f32.mrf.mxu0
    %v2443 = vpop.f32.mrf.mxu0
    %v2444 = vpop.f32.mrf.mxu0
    %2445 = vdwg.mxu0
    %v2446 = vadd.f32 %v1811, %v2400
    %v2447 = vxor.u32 %v2446, 2147483648
    %v2448 = vmul.f32 %v2447, 1.442695
    %v2449 = vpow.pop %v2448
    %v2450 = vadd.f32 %v2449, 1.0
    %v2451 = vrcp.pop %v2450
    %v2452 = vmul.f32 1.0, %v2451
    %v2453 = vadd.f32 %v1813, %v2402
    %v2454 = vxor.u32 %v2453, 2147483648
    %v2455 = vmul.f32 %v2454, 1.442695
    %v2456 = vpow.pop %v2455
    %v2457 = vadd.f32 %v2456, 1.0
    %v2458 = vrcp.pop %v2457
    %v2459 = vmul.f32 1.0, %v2458
    %v2460 = vmul.f32 %v2452, %v2441
    %v2461 = vadd.f32 %v1869, %v2460
    %v2462 = vtanh.pop %v2461
    %v2463 = vsub.f32 1.0, %v2459
    %v2464 = vmul.f32 %v2463, %v2462
    %v2465 = vmul.f32 %v2459, %v2363
    %v2466 = vadd.f32 %v2464, %v2465
    %v2467 = vpack.c.bf16 %v2466, %v2466
    %2468 = vmatprep.subr.bf16.mxu0 %v2030
    %2469 = vmatpush1.bf16.msra.mxu0 %v2029
    %2470 = vmatprep.subr.bf16.mxu0 %v2027
    %2471 = vmatpush1.bf16.msra.mxu0 %v2026
    %2472 = vmatprep.subr.bf16.mxu0 %v2024
    %2473 = vmatpush1.bf16.msra.mxu0 %v2023
    %2474 = vmatprep.subr.bf16.mxu0 %v2021
    %2475 = vmatpush1.bf16.msra.mxu0 %v2020
    %2476 = vmatprep.subr.bf16.mxu0 %v2018
    %2477 = vmatpush1.bf16.msra.mxu0 %v2017
    %2478 = vmatprep.subr.bf16.mxu0 %v2015
    %2479 = vmatpush1.bf16.msra.mxu0 %v2014
    %2480 = vmatprep.subr.bf16.mxu0 %v2012
    %2481 = vmatpush1.bf16.msra.mxu0 %v2011
    %2482 = vmatprep.subr.bf16.mxu0 %v2009
    %2483 = vmatpush1.bf16.msra.mxu0 %v2008
    %2484 = vmatprep.subr.bf16.mxu0 0
    %2485 = vmatpush2.bf16.msra.mxu0 0
    %2486 = vmatprep.subr.bf16.mxu0 0
    %2487 = vmatpush2.bf16.msra.mxu0 0
    %2488 = vmatprep.subr.bf16.mxu0 0
    %2489 = vmatpush2.bf16.msra.mxu0 0
    %2490 = vmatprep.subr.bf16.mxu0 0
    %2491 = vmatpush2.bf16.msra.mxu0 0
    %2492 = vmatprep.subr.bf16.mxu0 0
    %2493 = vmatpush2.bf16.msra.mxu0 0
    %2494 = vmatprep.subr.bf16.mxu0 0
    %2495 = vmatpush2.bf16.msra.mxu0 0
    %2496 = vmatprep.subr.bf16.mxu0 0
    %2497 = vmatpush2.bf16.msra.mxu0 0
    %2498 = vmatprep.subr.bf16.mxu0 0
    %2499 = vmatpush2.bf16.msra.mxu0 0
    %2500 = vmatprep.mubr.bf16.mxu0 0
    %2501 = vmatmul.mubr.bf16.gmra.mxu0 %v2467
    %v2502 = vpop.f32.mrf.mxu0
    %v2503 = vadd.f32 %v1916, %v2502
    %v2504 = vpop.f32.mrf.mxu0
    %v2505 = vadd.f32 %v1920, %v2504
    %v2506 = vpop.f32.mrf.mxu0
    %v2507 = vpop.f32.mrf.mxu0
    %2508 = vdwg.mxu0
    %2509 = vmatprep.subr.bf16.mxu0 0
    %2510 = vmatpush1.bf16.msra.mxu0 %v2031
    %2511 = vmatprep.subr.bf16.mxu0 0
    %2512 = vmatpush1.bf16.msra.mxu0 %v2028
    %2513 = vmatprep.subr.bf16.mxu0 0
    %2514 = vmatpush1.bf16.msra.mxu0 %v2025
    %2515 = vmatprep.subr.bf16.mxu0 0
    %2516 = vmatpush1.bf16.msra.mxu0 %v2022
    %2517 = vmatprep.subr.bf16.mxu0 0
    %2518 = vmatpush1.bf16.msra.mxu0 %v2019
    %2519 = vmatprep.subr.bf16.mxu0 0
    %2520 = vmatpush1.bf16.msra.mxu0 %v2016
    %2521 = vmatprep.subr.bf16.mxu0 0
    %2522 = vmatpush1.bf16.msra.mxu0 %v2013
    %2523 = vmatprep.subr.bf16.mxu0 0
    %2524 = vmatpush1.bf16.msra.mxu0 %v2010
    %2525 = vmatprep.subr.bf16.mxu0 0
    %2526 = vmatpush2.bf16.msra.mxu0 0
    %2527 = vmatprep.subr.bf16.mxu0 0
    %2528 = vmatpush2.bf16.msra.mxu0 0
    %2529 = vmatprep.subr.bf16.mxu0 0
    %2530 = vmatpush2.bf16.msra.mxu0 0
    %2531 = vmatprep.subr.bf16.mxu0 0
    %2532 = vmatpush2.bf16.msra.mxu0 0
    %2533 = vmatprep.subr.bf16.mxu0 0
    %2534 = vmatpush2.bf16.msra.mxu0 0
    %2535 = vmatprep.subr.bf16.mxu0 0
    %2536 = vmatpush2.bf16.msra.mxu0 0
    %2537 = vmatprep.subr.bf16.mxu0 0
    %2538 = vmatpush2.bf16.msra.mxu0 0
    %2539 = vmatprep.subr.bf16.mxu0 0
    %2540 = vmatpush2.bf16.msra.mxu0 0
    %2541 = vmatprep.mubr.bf16.mxu0 0
    %2542 = vmatmul.mubr.bf16.gmra.mxu0 %v2467
    %v2543 = vpop.f32.mrf.mxu0
    %v2544 = vadd.f32 %v1924, %v2543
    %v2545 = vpop.f32.mrf.mxu0
    %v2546 = vpop.f32.mrf.mxu0
    %v2547 = vpop.f32.mrf.mxu0
    %2548 = vdwg.mxu0
    %v2549 = vadd.f32 %v1817, %v2503
    %v2550 = vxor.u32 %v2549, 2147483648
    %v2551 = vmul.f32 %v2550, 1.442695
    %v2552 = vpow.pop %v2551
    %v2553 = vadd.f32 %v2552, 1.0
    %v2554 = vrcp.pop %v2553
    %v2555 = vmul.f32 1.0, %v2554
    %v2556 = vadd.f32 %v1819, %v2505
    %v2557 = vxor.u32 %v2556, 2147483648
    %v2558 = vmul.f32 %v2557, 1.442695
    %v2559 = vpow.pop %v2558
    %v2560 = vadd.f32 %v2559, 1.0
    %v2561 = vrcp.pop %v2560
    %v2562 = vmul.f32 1.0, %v2561
    %v2563 = vmul.f32 %v2555, %v2544
    %v2564 = vadd.f32 %v1874, %v2563
    %v2565 = vtanh.pop %v2564
    %v2566 = vsub.f32 1.0, %v2562
    %v2567 = vmul.f32 %v2566, %v2565
    %v2568 = vmul.f32 %v2562, %v2466
    %v2569 = vadd.f32 %v2567, %v2568
    %v2570 = vpack.c.bf16 %v2260, %v2157
    %v2571 = vpack.c.bf16 %v2466, %v2363
    %v2572 = vpack.c.bf16 %v2569, %v2569
    %v2573 = vld [vmem:[#allocation2 + $0x34] sm:$0xf]
    %v2574 = vld [vmem:[#allocation2 + $0x6c] sm:$0xf]
    %v2575 = vld [vmem:[#allocation2 + $0xa4] sm:$0xf]
    %v2576 = vld [vmem:[#allocation2 + $0xdc] sm:$0xf]
    %v2577 = vld [vmem:[#allocation2 + $0x114] sm:$0xf]
    %v2578 = vld [vmem:[#allocation2 + $0x14c] sm:$0xf]
    %v2579 = vld [vmem:[#allocation2 + $0x184] sm:$0xf]
    %v2580 = vld [vmem:[#allocation2 + $0x1bc] sm:$0xf]
    %v2581 = vld [vmem:[#allocation2 + $0x1f4] sm:$0xf]
    %v2582 = vld [vmem:[#allocation2 + $0x22c] sm:$0xf]
    %v2583 = vld [vmem:[#allocation2 + $0x264] sm:$0xf]
    %v2584 = vld [vmem:[#allocation2 + $0x29c] sm:$0xf]
    %v2585 = vld [vmem:[#allocation2 + $0x2d4] sm:$0xf]
    %v2586 = vld [vmem:[#allocation2 + $0x30c] sm:$0xf]
    %v2587 = vld [vmem:[#allocation2 + $0x344] sm:$0xf]
    %v2588 = vld [vmem:[#allocation2 + $0x37c] sm:$0xf]
    %v2590 = vlaneseq
    %v2591 = vshrl.u32 %v2590, 7
    %v2592 = vsub.s32 0, %v2591
    %v2593 = vrot.slane %v47, %v2592
    %v2611 = vunpack.c.l.b16 %v2573
    %v2612 = vunpack.c.l.b16 %v2574
    %v2613 = vunpack.c.l.b16 %v2575
    %v2614 = vunpack.c.l.b16 %v2576
    %v2615 = vunpack.c.l.b16 %v2577
    %v2616 = vunpack.c.l.b16 %v2578
    %v2617 = vunpack.c.l.b16 %v2579
    %v2618 = vunpack.c.l.b16 %v2580
    %v2619 = vunpack.c.l.b16 %v2581
    %v2620 = vunpack.c.l.b16 %v2582
    %v2621 = vunpack.c.l.b16 %v2583
    %v2622 = vunpack.c.l.b16 %v2584
    %v2623 = vunpack.c.l.b16 %v2585
    %v2624 = vunpack.c.l.b16 %v2586
    %v2625 = vunpack.c.l.b16 %v2587
    %v2626 = vunpack.c.l.b16 %v2588
    %v2627 = vpack.c.b16 %v2612, %v2611
    %v2628 = vpack.c.b16 %v2614, %v2613
    %v2629 = vpack.c.b16 %v2616, %v2615
    %v2630 = vpack.c.b16 %v2618, %v2617
    %v2631 = vpack.c.b16 %v2620, %v2619
    %v2632 = vpack.c.b16 %v2622, %v2621
    %v2633 = vpack.c.b16 %v2624, %v2623
    %v2634 = vpack.c.b16 %v2626, %v2625
    %2643 = vmatprep.subr.bf16.mxu0 0
    %2644 = vmatpush1.bf16.msra.mxu0 %v2634
    %2645 = vmatprep.subr.bf16.mxu0 0
    %2646 = vmatpush1.bf16.msra.mxu0 %v2633
    %2647 = vmatprep.subr.bf16.mxu0 0
    %2648 = vmatpush1.bf16.msra.mxu0 %v2632
    %2649 = vmatprep.subr.bf16.mxu0 0
    %2650 = vmatpush1.bf16.msra.mxu0 %v2631
    %2651 = vmatprep.subr.bf16.mxu0 0
    %2652 = vmatpush1.bf16.msra.mxu0 %v2630
    %2653 = vmatprep.subr.bf16.mxu0 0
    %2654 = vmatpush1.bf16.msra.mxu0 %v2629
    %2655 = vmatprep.subr.bf16.mxu0 0
    %2656 = vmatpush1.bf16.msra.mxu0 %v2628
    %2657 = vmatprep.subr.bf16.mxu0 0
    %2658 = vmatpush1.bf16.msra.mxu0 %v2627
    %2659 = vmatprep.subr.bf16.mxu0 0
    %2660 = vmatpush2.bf16.msra.mxu0 0
    %2661 = vmatprep.subr.bf16.mxu0 0
    %2662 = vmatpush2.bf16.msra.mxu0 0
    %2663 = vmatprep.subr.bf16.mxu0 0
    %2664 = vmatpush2.bf16.msra.mxu0 0
    %2665 = vmatprep.subr.bf16.mxu0 0
    %2666 = vmatpush2.bf16.msra.mxu0 0
    %2667 = vmatprep.subr.bf16.mxu0 0
    %2668 = vmatpush2.bf16.msra.mxu0 0
    %2669 = vmatprep.subr.bf16.mxu0 0
    %2670 = vmatpush2.bf16.msra.mxu0 0
    %2671 = vmatprep.subr.bf16.mxu0 0
    %2672 = vmatpush2.bf16.msra.mxu0 0
    %2673 = vmatprep.subr.bf16.mxu0 0
    %2674 = vmatpush2.bf16.msra.mxu0 0
    %2675 = vmatprep.mubr.bf16.mxu0 0
    %2676 = vmatmul.mubr.bf16.gmra.mxu0 %v2570
    %v2677 = vpop.f32.mrf.mxu0
    %v2678 = vadd.f32 %v2593, %v2677
    %v2679 = vpop.f32.mrf.mxu0
    %v2680 = vpop.f32.mrf.mxu0
    %v2681 = vadd.f32 %v2593, %v2680
    %v2682 = vpop.f32.mrf.mxu0
    %2683 = vmatprep.mubr.bf16.mxu0 0
    %2684 = vmatmul.mubr.bf16.gmra.mxu0 %v2571
    %v2685 = vpop.f32.mrf.mxu0
    %v2686 = vadd.f32 %v2593, %v2685
    %v2687 = vpop.f32.mrf.mxu0
    %v2688 = vpop.f32.mrf.mxu0
    %v2689 = vadd.f32 %v2593, %v2688
    %v2690 = vpop.f32.mrf.mxu0
    %2691 = vmatprep.mubr.bf16.mxu0 0
    %2692 = vmatmul.mubr.bf16.gmra.mxu0 %v2572
    %v2693 = vpop.f32.mrf.mxu0
    %v2694 = vadd.f32 %v2593, %v2693
    %v2695 = vpop.f32.mrf.mxu0
    %v2696 = vpop.f32.mrf.mxu0
    %v2697 = vpop.f32.mrf.mxu0
    %2698 = vdwg.mxu0
    %2699 = vst [vmem:[#allocation5 + $0x8] sm:$0xff] %v2678
    %2700 = vst [vmem:[#allocation5 + $0x10] sm:$0xff] %v2681
    %2701 = vst [vmem:[#allocation5 + $0x18] sm:$0xff] %v2686
    %2702 = vst [vmem:[#allocation5 + $0x20] sm:$0xff] %v2689
    %2703 = vst [vmem:[#allocation5 + $0x28] sm:$0xff] %v2694
    // Predicated region
    $region18: #{tpu_custom_call.1} parent=1 // pred_check
      _
    $region19: #{tpu_custom_call.1} parent=1 // pred_check_branch
      %2705 = sbr.rel (0) target = $region21
    $region20: #{tpu_custom_call.1} parent=1 // pred_region
      %s2707 = ssub.s32 768, 768
      %2708 = vsyncadd [#allocation4], %s2707
      %s2709 = sshll.u32 [#allocation5], 4
      %s2710 = int_to_ptr.vmem [resolvable:$true] %s2709
      %2715 = dma.vmem_to_hbm [thread:$0]  %s2710, 768, %s3, [#allocation4], 128, 128, 8
    $region21: #{tpu_custom_call.1} parent=1 // pred_fallthru
      _
    // Predicated region
    $region22: #{tpu_custom_call.1} parent=1 // pred_check
      _
    $region23: #{tpu_custom_call.1} parent=1 // pred_check_branch
      %2717 = sbr.rel (0) target = $region25
    $region24: #{tpu_custom_call.1} parent=1 // pred_region
      %2718 = dma.done [#allocation4], 768
    $region25: #{tpu_custom_call.1} parent=1 // pred_fallthru
      _
    %2719 = vsyncpa [#allocation3], 1
    %2720 = vsyncpa [#allocation4], 1

</llo_original>
